<compile_context>
chip_gen: v7x
topology: tpu7x:2x2x1
jax: 0.10.0
libtpu: 0.0.40
codegen_flags: <defaults>
</compile_context>

<pallas_src>
import jax
import jax.numpy as jnp
from jax.experimental import pallas as pl
from jax.experimental.pallas import tpu as pltpu


def _silu(v):
    return v * (1.0 / (1.0 + jnp.exp(-v)))


def _softplus(v):
    # numerically stable: max(x,0) + log1p(exp(-|x|))
    return jnp.maximum(v, 0.0) + jnp.log1p(jnp.exp(-jnp.abs(v)))


def _spiral_mamba_kernel(
    x_ref, w_ref, shift_ref, scale_ref, gate_ref,
    ln1_w_ref, ln1_b_ref,
    w_in_x_ref, w_in_z_ref, conv_w_ref, conv_b_ref,
    w_dtf_ref, b_dt_ref, w_b_ref, w_c_ref, a_t_ref, d_skip_ref, w_out_ref,
    ln2_wa_ref, ln2_wb_ref, ln2_ba_ref, ln2_bb_ref,
    att_w1a_ref, att_w1b_ref, att_b1_ref, att_w2_ref, att_b2_ref,
    o_ref,
    xcv_s, dt_s, b_s, c_s, y_s, h_s, xpad_s,
):
    eps = 1e-5
    bb, L, D = x_ref.shape
    d_inner = w_in_x_ref.shape[2]
    d_state = w_b_ref.shape[2]
    d_conv = conv_w_ref.shape[1]

    x = x_ref[...]                                    # (bb, L, D)
    wmask = w_ref[...]                                # (bb, L, D)

    # ---- LayerNorm(D) + adaLN modulate (shift/scale precomputed in wrapper) ----
    mean = jnp.mean(x, axis=-1, keepdims=True)
    xc = x - mean
    var = jnp.mean(xc * xc, axis=-1, keepdims=True)
    xn = xc * jax.lax.rsqrt(var + eps) * ln1_w_ref[...] + ln1_b_ref[...]
    xm = xn * (1.0 + scale_ref[...]) + shift_ref[...]  # (bb, L, D)
    wm = xm * wmask                                    # (bb, L, D)

    def mamba_branch(xin, br):
        # ---- in_proj (split into x / z halves so outputs stay lane-dense) -------
        rows = xin.reshape(bb * L, D)
        x_in = jnp.dot(rows, w_in_x_ref[br],
                       preferred_element_type=jnp.float32).reshape(bb, L, d_inner)
        z = jnp.dot(rows, w_in_z_ref[br],
                    preferred_element_type=jnp.float32).reshape(bb, L, d_inner)

        # ---- causal depthwise conv1d along L via padded scratch + static slices -
        cw = conv_w_ref[br]                            # (d_conv, d_inner)
        xpad_s[:, :d_conv - 1, :] = jnp.zeros((bb, d_conv - 1, d_inner), jnp.float32)
        xpad_s[:, d_conv - 1:, :] = x_in
        acc = x_in * cw[d_conv - 1:d_conv, :]
        for k in range(d_conv - 1):                    # static, tiny (d_conv=4)
            acc = acc + xpad_s[:, k:k + L, :] * cw[k:k + 1, :]
        xcv = _silu(acc + conv_b_ref[br])              # (bb, L, d_inner)
        xcv_s[...] = xcv

        # ---- fused dt / B / C projections (no narrow column slicing in kernel) --
        rows_i = xcv.reshape(bb * L, d_inner)
        dt_s[...] = _softplus(
            jnp.dot(rows_i, w_dtf_ref[br],
                    preferred_element_type=jnp.float32).reshape(bb, L, d_inner)
            + b_dt_ref[br])
        b_s[...] = jnp.dot(rows_i, w_b_ref[br],
                           preferred_element_type=jnp.float32).reshape(bb, L, d_state)
        c_s[...] = jnp.dot(rows_i, w_c_ref[br],
                           preferred_element_type=jnp.float32).reshape(bb, L, d_state)

        a_t = a_t_ref[br]                              # (d_state, d_inner) = (-exp(A_log))^T
        h_s[...] = jnp.zeros_like(h_s)                 # (bb, d_state, d_inner)

        # ---- selective scan: fori_loop, state in VMEM scratch --------------------
        def scan_step(t, carry):
            dt_t = dt_s[:, pl.ds(t, 1), :]                       # (bb, 1, d_inner)
            x_t = xcv_s[:, pl.ds(t, 1), :]                       # (bb, 1, d_inner)
            b_t = b_s[:, pl.ds(t, 1), :].reshape(bb, d_state, 1)  # (bb, d_state, 1)
            c_t = c_s[:, pl.ds(t, 1), :].reshape(bb, d_state, 1)  # (bb, d_state, 1)
            da = jnp.exp(dt_t * a_t)                             # (bb, d_state, d_inner)
            h_new = da * h_s[...] + (dt_t * x_t) * b_t
            h_s[...] = h_new
            y_t = jnp.sum(h_new * c_t, axis=1)                   # (bb, d_inner)
            y_s[:, pl.ds(t, 1), :] = y_t[:, None, :]
            return carry

        jax.lax.fori_loop(0, L, scan_step, 0)

        # ---- D skip, SiLU(z) gate, out_proj --------------------------------------
        y = y_s[...] + xcv_s[...] * d_skip_ref[br]
        y = y * _silu(z)
        out = jnp.dot(y.reshape(bb * L, d_inner), w_out_ref[br],
                      preferred_element_type=jnp.float32)
        return out.reshape(bb, L, D)

    x_ssm = mamba_branch(xm, 0)
    w_ssm = mamba_branch(wm, 1)

    # ---- attention network on concat([x_ssm, w_ssm]) without materializing concat
    s_x = jnp.sum(x_ssm, axis=-1, keepdims=True)
    s_w = jnp.sum(w_ssm, axis=-1, keepdims=True)
    mu = (s_x + s_w) / (2.0 * D)
    dx = x_ssm - mu
    dw = w_ssm - mu
    var2 = (jnp.sum(dx * dx, axis=-1, keepdims=True)
            + jnp.sum(dw * dw, axis=-1, keepdims=True)) / (2.0 * D)
    rstd = jax.lax.rsqrt(var2 + eps)
    xh = dx * rstd * ln2_wa_ref[...] + ln2_ba_ref[...]
    wh = dw * rstd * ln2_wb_ref[...] + ln2_bb_ref[...]
    lin1 = (jnp.dot(xh.reshape(bb * L, D), att_w1a_ref[...],
                    preferred_element_type=jnp.float32)
            + jnp.dot(wh.reshape(bb * L, D), att_w1b_ref[...],
                      preferred_element_type=jnp.float32)).reshape(bb, L, D)
    hid = _silu(lin1 + att_b1_ref[...])
    logit = jnp.sum(hid * att_w2_ref[...], axis=-1, keepdims=True) + att_b2_ref[...]
    att = 1.0 / (1.0 + jnp.exp(-logit))                # (bb, L, 1)
    comb = att * x_ssm + (1.0 - att) * w_ssm

    # ---- gated residual ----------------------------------------------------------
    o_ref[...] = x + gate_ref[...] * comb


def spiral_mamba_forward(x, c, w, params, *, block_b=None):
    B, L, D = x.shape
    m1, m2 = params["m1"], params["m2"]
    d_inner = m1["w_in_x"].shape[1]
    d_state = m1["a_log"].shape[1]
    d_conv = m1["conv_w"].shape[0]
    dt_rank = m1["w_dt"].shape[0]
    if block_b is None:
        block_b = B
    assert B % block_b == 0, "batch must be divisible by block_b"

    silu = lambda v: v * jax.nn.sigmoid(v)  # noqa: E731

    # ---- pre-fused small projections (done once, outside the kernel) ------------
    ada = silu(c) @ params["w_ada"] + params["b_ada"]           # (B, 3D)
    shift = ada[:, :D].reshape(B, 1, D)
    scale = ada[:, D:2 * D].reshape(B, 1, D)
    gate = ada[:, 2 * D:].reshape(B, 1, D)

    def fuse(p):
        return dict(
            w_in_x=p["w_in_x"], w_in_z=p["w_in_z"],
            conv_w=p["conv_w"], conv_b=p["conv_b"].reshape(1, d_inner),
            w_dtf=p["w_xproj"][:, :dt_rank] @ p["w_dt"],         # (d_inner, d_inner)
            b_dt=p["b_dt"].reshape(1, d_inner),
            w_B=p["w_xproj"][:, dt_rank:dt_rank + d_state],
            w_C=p["w_xproj"][:, dt_rank + d_state:],
            a_t=(-jnp.exp(p["a_log"])).T,                        # (d_state, d_inner)
            d_skip=p["d_skip"].reshape(1, d_inner),
            w_out=p["w_out"])

    f1, f2 = fuse(m1), fuse(m2)
    st = lambda k: jnp.stack([f1[k], f2[k]], axis=0)  # noqa: E731

    ln1_w = params["ln1_w"].reshape(1, D)
    ln1_b = params["ln1_b"].reshape(1, D)
    ln2_wa = params["ln2_w"][:D].reshape(1, D)
    ln2_wb = params["ln2_w"][D:].reshape(1, D)
    ln2_ba = params["ln2_b"][:D].reshape(1, D)
    ln2_bb = params["ln2_b"][D:].reshape(1, D)
    att_w1a = params["att_w1"][:D]
    att_w1b = params["att_w1"][D:]
    att_b1 = params["att_b1"].reshape(1, D)
    att_w2 = params["att_w2"].reshape(1, D)
    att_b2 = params["att_b2"].reshape(1, 1)

    fixed2 = lambda b: (0, 0)      # noqa: E731
    fixed3 = lambda b: (0, 0, 0)   # noqa: E731
    batch3 = lambda b: (b, 0, 0)   # noqa: E731

    in_specs = [
        pl.BlockSpec((block_b, L, D), batch3),            # x
        pl.BlockSpec((block_b, L, D), batch3),            # w
        pl.BlockSpec((block_b, 1, D), batch3),            # shift
        pl.BlockSpec((block_b, 1, D), batch3),            # scale
        pl.BlockSpec((block_b, 1, D), batch3),            # gate
        pl.BlockSpec((1, D), fixed2),                     # ln1_w
        pl.BlockSpec((1, D), fixed2),                     # ln1_b
        pl.BlockSpec((2, D, d_inner), fixed3),            # w_in_x (both branches)
        pl.BlockSpec((2, D, d_inner), fixed3),            # w_in_z
        pl.BlockSpec((2, d_conv, d_inner), fixed3),       # conv_w
        pl.BlockSpec((2, 1, d_inner), fixed3),            # conv_b
        pl.BlockSpec((2, d_inner, d_inner), fixed3),      # w_dt_fused
        pl.BlockSpec((2, 1, d_inner), fixed3),            # b_dt
        pl.BlockSpec((2, d_inner, d_state), fixed3),      # w_B
        pl.BlockSpec((2, d_inner, d_state), fixed3),      # w_C
        pl.BlockSpec((2, d_state, d_inner), fixed3),      # A^T (= -exp(A_log)^T)
        pl.BlockSpec((2, 1, d_inner), fixed3),            # d_skip
        pl.BlockSpec((2, d_inner, D), fixed3),            # w_out
        pl.BlockSpec((1, D), fixed2),                     # ln2_w (x half)
        pl.BlockSpec((1, D), fixed2),                     # ln2_w (w half)
        pl.BlockSpec((1, D), fixed2),                     # ln2_b (x half)
        pl.BlockSpec((1, D), fixed2),                     # ln2_b (w half)
        pl.BlockSpec((D, D), fixed2),                     # att_w1 (x half)
        pl.BlockSpec((D, D), fixed2),                     # att_w1 (w half)
        pl.BlockSpec((1, D), fixed2),                     # att_b1
        pl.BlockSpec((1, D), fixed2),                     # att_w2^T
        pl.BlockSpec((1, 1), fixed2),                     # att_b2
    ]
    scratch = [
        pltpu.VMEM((block_b, L, d_inner), jnp.float32),                 # xcv
        pltpu.VMEM((block_b, L, d_inner), jnp.float32),                 # dt
        pltpu.VMEM((block_b, L, d_state), jnp.float32),                 # B
        pltpu.VMEM((block_b, L, d_state), jnp.float32),                 # C
        pltpu.VMEM((block_b, L, d_inner), jnp.float32),                 # y
        pltpu.VMEM((block_b, d_state, d_inner), jnp.float32),           # h (scan state)
        pltpu.VMEM((block_b, L + d_conv - 1, d_inner), jnp.float32),    # padded conv input
    ]

    return pl.pallas_call(
        _spiral_mamba_kernel,
        out_shape=jax.ShapeDtypeStruct((B, L, D), jnp.float32),
        grid=(B // block_b,),
        in_specs=in_specs,
        out_specs=pl.BlockSpec((block_b, L, D), batch3),
        scratch_shapes=scratch,
        compiler_params=pltpu.CompilerParams(
            dimension_semantics=("parallel",),
            vmem_limit_bytes=32 * 1024 * 1024),
    )(
        x, w, shift, scale, gate, ln1_w, ln1_b,
        st("w_in_x"), st("w_in_z"), st("conv_w"), st("conv_b"),
        st("w_dtf"), st("b_dt"), st("w_B"), st("w_C"), st("a_t"),
        st("d_skip"), st("w_out"),
        ln2_wa, ln2_wb, ln2_ba, ln2_bb,
        att_w1a, att_w1b, att_b1, att_w2, att_b2,
    )


def init_params(key, D, d_inner, d_state, dt_rank, d_conv):
    ks = jax.random.split(key, 8)

    def xavier(k, shape):
        fan_in, fan_out = shape
        lim = (6.0 / (fan_in + fan_out)) ** 0.5
        return jax.random.uniform(k, shape, jnp.float32, -lim, lim)

    def mamba_params(k):
        km = jax.random.split(k, 8)
        return dict(
            w_in_x=xavier(km[0], (D, d_inner)),
            w_in_z=xavier(km[1], (D, d_inner)),
            conv_w=0.1 * jax.random.normal(km[2], (d_conv, d_inner), jnp.float32),
            conv_b=jnp.zeros((d_inner,), jnp.float32),
            w_xproj=xavier(km[3], (d_inner, dt_rank + 2 * d_state)),
            w_dt=xavier(km[4], (dt_rank, d_inner)),
            b_dt=0.1 * jax.random.normal(km[5], (d_inner,), jnp.float32),
            a_log=jnp.log(jnp.tile(
                jnp.arange(1, d_state + 1, dtype=jnp.float32)[None, :], (d_inner, 1))),
            d_skip=jnp.ones((d_inner,), jnp.float32),
            w_out=xavier(km[6], (d_inner, D)),
        )

    # NOTE: PyTorch's initialize_weights zeros the attention-network linears (so the
    # combine weight is exactly 0.5); small random values are used here so that path
    # is actually exercised by the numerical check.
    return dict(
        ln1_w=jnp.ones((D,), jnp.float32),
        ln1_b=jnp.zeros((D,), jnp.float32),
        w_ada=xavier(ks[0], (2 * D, 3 * D)),
        b_ada=jnp.zeros((3 * D,), jnp.float32),
        m1=mamba_params(ks[1]),
        m2=mamba_params(ks[2]),
        ln2_w=jnp.ones((2 * D,), jnp.float32),
        ln2_b=jnp.zeros((2 * D,), jnp.float32),
        att_w1=xavier(ks[3], (2 * D, D)),
        att_b1=0.05 * jax.random.normal(ks[4], (D,), jnp.float32),
        att_w2=xavier(ks[5], (D, 1)),
        att_b2=jnp.zeros((1,), jnp.float32),
    )


def reference_forward(x, c, w, params):
    """Pure-JAX reference with the same math (uses the raw, un-fused params)."""
    silu = lambda v: v * jax.nn.sigmoid(v)  # noqa: E731
    B, L, D = x.shape
    m1 = params["m1"]
    dt_rank = m1["w_dt"].shape[0]
    d_state = m1["a_log"].shape[1]
    d_conv = m1["conv_w"].shape[0]

    ada = silu(c) @ params["w_ada"] + params["b_ada"]
    shift, scale, gate = ada[:, :D], ada[:, D:2 * D], ada[:, 2 * D:]

    mean = x.mean(-1, keepdims=True)
    var = ((x - mean) ** 2).mean(-1, keepdims=True)
    xn = (x - mean) / jnp.sqrt(var + 1e-5) * params["ln1_w"] + params["ln1_b"]
    xm = xn * (1.0 + scale[:, None, :]) + shift[:, None, :]
    wm = xm * w

    def mamba(xin, p):
        d_inner = p["w_in_x"].shape[1]
        x_in = xin @ p["w_in_x"]
        z = xin @ p["w_in_z"]
        xpad = jnp.pad(x_in, ((0, 0), (d_conv - 1, 0), (0, 0)))
        y_conv = sum(p["conv_w"][k] * xpad[:, k:k + L, :] for k in range(d_conv))
        xcv = silu(y_conv + p["conv_b"])
        dbc = xcv @ p["w_xproj"]
        dt = jax.nn.softplus(dbc[..., :dt_rank] @ p["w_dt"] + p["b_dt"])
        Bm = dbc[..., dt_rank:dt_rank + d_state]
        Cm = dbc[..., dt_rank + d_state:]
        A = -jnp.exp(p["a_log"])

        def step(h, inp):
            dt_t, B_t, C_t, x_t = inp
            dA = jnp.exp(dt_t[..., None] * A)
            dB = dt_t[..., None] * B_t[:, None, :]
            h = dA * h + dB * x_t[..., None]
            y_t = (h * C_t[:, None, :]).sum(-1)
            return h, y_t

        h0 = jnp.zeros((B, d_inner, d_state), jnp.float32)
        xs = (dt.transpose(1, 0, 2), Bm.transpose(1, 0, 2),
              Cm.transpose(1, 0, 2), xcv.transpose(1, 0, 2))
        _, ys = jax.lax.scan(step, h0, xs)
        y = ys.transpose(1, 0, 2) + xcv * p["d_skip"]
        y = y * silu(z)
        return y @ p["w_out"]

    x_ssm = mamba(xm, params["m1"])
    w_ssm = mamba(wm, params["m2"])
    comb = jnp.concatenate([x_ssm, w_ssm], axis=-1)
    mu = comb.mean(-1, keepdims=True)
    vv = ((comb - mu) ** 2).mean(-1, keepdims=True)
    ch = (comb - mu) / jnp.sqrt(vv + 1e-5) * params["ln2_w"] + params["ln2_b"]
    h1 = silu(ch @ params["att_w1"] + params["att_b1"])
    att = jax.nn.sigmoid(h1 @ params["att_w2"] + params["att_b2"])
    x_comb = att * x_ssm + (1.0 - att) * w_ssm
    return x + gate[:, None, :] * x_comb


if __name__ == "__main__":
    B, L = 4, 8
    D_dim, d_state, dt_rank, d_conv = 16, 8, 4, 4
    d_inner = 2 * D_dim  # expand=2

    key = jax.random.PRNGKey(0)
    kx, kc, kw, kp = jax.random.split(key, 4)
    x = jax.random.normal(kx, (B, L, D_dim), jnp.float32)
    c = jax.random.normal(kc, (B, 2 * D_dim), jnp.float32)
    w = jax.random.normal(kw, (B, L, D_dim), jnp.float32)
    params = init_params(kp, D_dim, d_inner, d_state, dt_rank, d_conv)

    out = spiral_mamba_forward(x, c, w, params, block_b=2)
    out = jax.block_until_ready(out)

    ref = reference_forward(x, c, w, params)
    assert out.shape == (B, L, D_dim)
    err = float(jnp.max(jnp.abs(out - ref)))
    assert jnp.allclose(out, ref, atol=1e-4, rtol=1e-4), err
    print("KERNEL_OK")
</pallas_src>

<mosaic_0001>
module attributes {stable_mosaic.version = 11 : i64} {
  func.func @_spiral_mamba_kernel(%arg0: i32, %arg1: memref<2x8x16xf32, #tpu.memory_space<vmem>>, %arg2: memref<2x8x16xf32, #tpu.memory_space<vmem>>, %arg3: memref<2x1x16xf32, #tpu.memory_space<vmem>>, %arg4: memref<2x1x16xf32, #tpu.memory_space<vmem>>, %arg5: memref<2x1x16xf32, #tpu.memory_space<vmem>>, %arg6: memref<1x16xf32, #tpu.memory_space<vmem>>, %arg7: memref<1x16xf32, #tpu.memory_space<vmem>>, %arg8: memref<2x16x32xf32, #tpu.memory_space<vmem>>, %arg9: memref<2x16x32xf32, #tpu.memory_space<vmem>>, %arg10: memref<2x4x32xf32, #tpu.memory_space<vmem>>, %arg11: memref<2x1x32xf32, #tpu.memory_space<vmem>>, %arg12: memref<2x32x32xf32, #tpu.memory_space<vmem>>, %arg13: memref<2x1x32xf32, #tpu.memory_space<vmem>>, %arg14: memref<2x32x8xf32, #tpu.memory_space<vmem>>, %arg15: memref<2x32x8xf32, #tpu.memory_space<vmem>>, %arg16: memref<2x8x32xf32, #tpu.memory_space<vmem>>, %arg17: memref<2x1x32xf32, #tpu.memory_space<vmem>>, %arg18: memref<2x32x16xf32, #tpu.memory_space<vmem>>, %arg19: memref<1x16xf32, #tpu.memory_space<vmem>>, %arg20: memref<1x16xf32, #tpu.memory_space<vmem>>, %arg21: memref<1x16xf32, #tpu.memory_space<vmem>>, %arg22: memref<1x16xf32, #tpu.memory_space<vmem>>, %arg23: memref<16x16xf32, #tpu.memory_space<vmem>>, %arg24: memref<16x16xf32, #tpu.memory_space<vmem>>, %arg25: memref<1x16xf32, #tpu.memory_space<vmem>>, %arg26: memref<1x16xf32, #tpu.memory_space<vmem>>, %arg27: memref<1x1xf32, #tpu.memory_space<vmem>>, %arg28: memref<2x8x16xf32, #tpu.memory_space<vmem>>, %arg29: memref<2x8x32xf32, #tpu.memory_space<vmem>>, %arg30: memref<2x8x32xf32, #tpu.memory_space<vmem>>, %arg31: memref<2x8x8xf32, #tpu.memory_space<vmem>>, %arg32: memref<2x8x8xf32, #tpu.memory_space<vmem>>, %arg33: memref<2x8x32xf32, #tpu.memory_space<vmem>>, %arg34: memref<2x8x32xf32, #tpu.memory_space<vmem>>, %arg35: memref<2x11x32xf32, #tpu.memory_space<vmem>>) attributes {dimension_semantics = [#tpu.dimension_semantics<parallel>], iteration_bounds = array<i64: 2>, scalar_prefetch = 0 : i64, scratch_operands = 7 : i64, tpu.core_type = #tpu.core_type<tc>, window_params = [{transform_indices = @transform_0, window_bounds = array<i64: 2, 8, 16>}, {transform_indices = @transform_1, window_bounds = array<i64: 2, 8, 16>}, {transform_indices = @transform_2, window_bounds = array<i64: 2, 1, 16>}, {transform_indices = @transform_3, window_bounds = array<i64: 2, 1, 16>}, {transform_indices = @transform_4, window_bounds = array<i64: 2, 1, 16>}, {pipeline_mode = #tpu.pipeline_mode<synchronous>, transform_indices = @transform_5, window_bounds = array<i64: 1, 16>}, {pipeline_mode = #tpu.pipeline_mode<synchronous>, transform_indices = @transform_6, window_bounds = array<i64: 1, 16>}, {pipeline_mode = #tpu.pipeline_mode<synchronous>, transform_indices = @transform_7, window_bounds = array<i64: 2, 16, 32>}, {pipeline_mode = #tpu.pipeline_mode<synchronous>, transform_indices = @transform_8, window_bounds = array<i64: 2, 16, 32>}, {pipeline_mode = #tpu.pipeline_mode<synchronous>, transform_indices = @transform_9, window_bounds = array<i64: 2, 4, 32>}, {pipeline_mode = #tpu.pipeline_mode<synchronous>, transform_indices = @transform_10, window_bounds = array<i64: 2, 1, 32>}, {pipeline_mode = #tpu.pipeline_mode<synchronous>, transform_indices = @transform_11, window_bounds = array<i64: 2, 32, 32>}, {pipeline_mode = #tpu.pipeline_mode<synchronous>, transform_indices = @transform_12, window_bounds = array<i64: 2, 1, 32>}, {pipeline_mode = #tpu.pipeline_mode<synchronous>, transform_indices = @transform_13, window_bounds = array<i64: 2, 32, 8>}, {pipeline_mode = #tpu.pipeline_mode<synchronous>, transform_indices = @transform_14, window_bounds = array<i64: 2, 32, 8>}, {pipeline_mode = #tpu.pipeline_mode<synchronous>, transform_indices = @transform_15, window_bounds = array<i64: 2, 8, 32>}, {pipeline_mode = #tpu.pipeline_mode<synchronous>, transform_indices = @transform_16, window_bounds = array<i64: 2, 1, 32>}, {pipeline_mode = #tpu.pipeline_mode<synchronous>, transform_indices = @transform_17, window_bounds = array<i64: 2, 32, 16>}, {pipeline_mode = #tpu.pipeline_mode<synchronous>, transform_indices = @transform_18, window_bounds = array<i64: 1, 16>}, {pipeline_mode = #tpu.pipeline_mode<synchronous>, transform_indices = @transform_19, window_bounds = array<i64: 1, 16>}, {pipeline_mode = #tpu.pipeline_mode<synchronous>, transform_indices = @transform_20, window_bounds = array<i64: 1, 16>}, {pipeline_mode = #tpu.pipeline_mode<synchronous>, transform_indices = @transform_21, window_bounds = array<i64: 1, 16>}, {pipeline_mode = #tpu.pipeline_mode<synchronous>, transform_indices = @transform_22, window_bounds = array<i64: 16, 16>}, {pipeline_mode = #tpu.pipeline_mode<synchronous>, transform_indices = @transform_23, window_bounds = array<i64: 16, 16>}, {pipeline_mode = #tpu.pipeline_mode<synchronous>, transform_indices = @transform_24, window_bounds = array<i64: 1, 16>}, {pipeline_mode = #tpu.pipeline_mode<synchronous>, transform_indices = @transform_25, window_bounds = array<i64: 1, 16>}, {pipeline_mode = #tpu.pipeline_mode<synchronous>, transform_indices = @transform_26, window_bounds = array<i64: 1, 1>}, {transform_indices = @transform_27, window_bounds = array<i64: 2, 8, 16>}]} {
    %c0 = arith.constant 0 : index
    %c0_0 = arith.constant 0 : index
    %c0_1 = arith.constant 0 : index
    %0 = vector.load %arg1[%c0, %c0_0, %c0_1] : memref<2x8x16xf32, #tpu.memory_space<vmem>>, vector<2x8x16xf32>
    %c0_2 = arith.constant 0 : index
    %c0_3 = arith.constant 0 : index
    %c0_4 = arith.constant 0 : index
    %1 = vector.load %arg2[%c0_2, %c0_3, %c0_4] : memref<2x8x16xf32, #tpu.memory_space<vmem>>, vector<2x8x16xf32>
    %cst = arith.constant dense<0.000000e+00> : vector<2x8xf32>
    %2 = vector.multi_reduction <add>, %0, %cst [2] : vector<2x8x16xf32> to vector<2x8xf32>
    %3 = vector.shape_cast %2 : vector<2x8xf32> to vector<2x8x1xf32>
    %cst_5 = arith.constant 1.600000e+01 : f32
    %4 = vector.broadcast %cst_5 : f32 to vector<2x8x1xf32>
    %5 = arith.divf %3, %4 : vector<2x8x1xf32>
    %6 = vector.broadcast %5 : vector<2x8x1xf32> to vector<2x8x16xf32>
    %7 = arith.subf %0, %6 : vector<2x8x16xf32>
    %8 = arith.mulf %7, %7 : vector<2x8x16xf32>
    %cst_6 = arith.constant dense<0.000000e+00> : vector<2x8xf32>
    %9 = vector.multi_reduction <add>, %8, %cst_6 [2] : vector<2x8x16xf32> to vector<2x8xf32>
    %10 = vector.shape_cast %9 : vector<2x8xf32> to vector<2x8x1xf32>
    %cst_7 = arith.constant 1.600000e+01 : f32
    %11 = vector.broadcast %cst_7 : f32 to vector<2x8x1xf32>
    %12 = arith.divf %10, %11 : vector<2x8x1xf32>
    %cst_8 = arith.constant 9.99999974E-6 : f32
    %13 = vector.broadcast %cst_8 : f32 to vector<2x8x1xf32>
    %14 = arith.addf %12, %13 : vector<2x8x1xf32>
    %15 = math.rsqrt %14 : vector<2x8x1xf32>
    %16 = vector.broadcast %15 : vector<2x8x1xf32> to vector<2x8x16xf32>
    %17 = arith.mulf %7, %16 : vector<2x8x16xf32>
    %c0_9 = arith.constant 0 : index
    %c0_10 = arith.constant 0 : index
    %18 = vector.load %arg6[%c0_9, %c0_10] : memref<1x16xf32, #tpu.memory_space<vmem>>, vector<1x16xf32>
    %19 = vector.shape_cast %18 : vector<1x16xf32> to vector<1x1x16xf32>
    %20 = vector.broadcast %19 : vector<1x1x16xf32> to vector<2x8x16xf32>
    %21 = arith.mulf %17, %20 : vector<2x8x16xf32>
    %c0_11 = arith.constant 0 : index
    %c0_12 = arith.constant 0 : index
    %22 = vector.load %arg7[%c0_11, %c0_12] : memref<1x16xf32, #tpu.memory_space<vmem>>, vector<1x16xf32>
    %23 = vector.shape_cast %22 : vector<1x16xf32> to vector<1x1x16xf32>
    %24 = vector.broadcast %23 : vector<1x1x16xf32> to vector<2x8x16xf32>
    %25 = arith.addf %21, %24 : vector<2x8x16xf32>
    %c0_13 = arith.constant 0 : index
    %c0_14 = arith.constant 0 : index
    %c0_15 = arith.constant 0 : index
    %26 = vector.load %arg4[%c0_13, %c0_14, %c0_15] : memref<2x1x16xf32, #tpu.memory_space<vmem>>, vector<2x1x16xf32>
    %cst_16 = arith.constant 1.000000e+00 : f32
    %27 = vector.broadcast %cst_16 : f32 to vector<2x1x16xf32>
    %28 = arith.addf %27, %26 : vector<2x1x16xf32>
    %29 = vector.broadcast %28 : vector<2x1x16xf32> to vector<2x8x16xf32>
    %30 = arith.mulf %25, %29 : vector<2x8x16xf32>
    %c0_17 = arith.constant 0 : index
    %c0_18 = arith.constant 0 : index
    %c0_19 = arith.constant 0 : index
    %31 = vector.load %arg3[%c0_17, %c0_18, %c0_19] : memref<2x1x16xf32, #tpu.memory_space<vmem>>, vector<2x1x16xf32>
    %32 = vector.broadcast %31 : vector<2x1x16xf32> to vector<2x8x16xf32>
    %33 = arith.addf %30, %32 : vector<2x8x16xf32>
    %34 = arith.mulf %33, %1 : vector<2x8x16xf32>
    %35 = vector.shape_cast %33 : vector<2x8x16xf32> to vector<16x16xf32>
    %c0_20 = arith.constant 0 : index
    %c0_21 = arith.constant 0 : index
    %c0_22 = arith.constant 0 : index
    %36 = vector.load %arg8[%c0_20, %c0_21, %c0_22] : memref<2x16x32xf32, #tpu.memory_space<vmem>>, vector<1x16x32xf32>
    %37 = vector.shape_cast %36 : vector<1x16x32xf32> to vector<16x32xf32>
    %cst_23 = arith.constant dense<0.000000e+00> : vector<16x32xf32>
    %38 = tpu.matmul %35, %37, %cst_23 {dimension_numbers = #tpu.dot_dimension_numbers<[1], [0], [0], [1], [0, 0, 1, 1], [], []>} : vector<16x16xf32>, vector<16x32xf32>, vector<16x32xf32> -> vector<16x32xf32>
    %39 = vector.shape_cast %38 : vector<16x32xf32> to vector<2x8x32xf32>
    %c0_24 = arith.constant 0 : index
    %c0_25 = arith.constant 0 : index
    %c0_26 = arith.constant 0 : index
    %40 = vector.load %arg9[%c0_24, %c0_25, %c0_26] : memref<2x16x32xf32, #tpu.memory_space<vmem>>, vector<1x16x32xf32>
    %41 = vector.shape_cast %40 : vector<1x16x32xf32> to vector<16x32xf32>
    %cst_27 = arith.constant dense<0.000000e+00> : vector<16x32xf32>
    %42 = tpu.matmul %35, %41, %cst_27 {dimension_numbers = #tpu.dot_dimension_numbers<[1], [0], [0], [1], [0, 0, 1, 1], [], []>} : vector<16x16xf32>, vector<16x32xf32>, vector<16x32xf32> -> vector<16x32xf32>
    %43 = vector.shape_cast %42 : vector<16x32xf32> to vector<2x8x32xf32>
    %c0_28 = arith.constant 0 : index
    %c0_29 = arith.constant 0 : index
    %c0_30 = arith.constant 0 : index
    %44 = vector.load %arg10[%c0_28, %c0_29, %c0_30] : memref<2x4x32xf32, #tpu.memory_space<vmem>>, vector<1x4x32xf32>
    %45 = vector.shape_cast %44 : vector<1x4x32xf32> to vector<4x32xf32>
    %cst_31 = arith.constant 0.000000e+00 : f32
    %46 = vector.broadcast %cst_31 : f32 to vector<2x3x32xf32>
    %c0_32 = arith.constant 0 : index
    %c0_33 = arith.constant 0 : index
    %c0_34 = arith.constant 0 : index
    %47 = vector.load %arg35[%c0_32, %c0_33, %c0_34] : memref<2x11x32xf32, #tpu.memory_space<vmem>>, vector<2x3x32xf32>
    tpu.vector_store %arg35[%c0_32, %c0_33, %c0_34], %46 {strides = array<i32>} : memref<2x11x32xf32, #tpu.memory_space<vmem>>, vector<2x3x32xf32>,
    %c0_35 = arith.constant 0 : index
    %c3 = arith.constant 3 : index
    %c0_36 = arith.constant 0 : index
    %48 = vector.load %arg35[%c0_35, %c3, %c0_36] : memref<2x11x32xf32, #tpu.memory_space<vmem>>, vector<2x8x32xf32>
    tpu.vector_store %arg35[%c0_35, %c3, %c0_36], %39 {strides = array<i32>} : memref<2x11x32xf32, #tpu.memory_space<vmem>>, vector<2x8x32xf32>,
    %49 = vector.extract_strided_slice %45 {offsets = [3, 0], sizes = [1, 32], strides = [1, 1]} : vector<4x32xf32> to vector<1x32xf32>
    %50 = vector.shape_cast %49 : vector<1x32xf32> to vector<1x1x32xf32>
    %51 = vector.broadcast %50 : vector<1x1x32xf32> to vector<2x8x32xf32>
    %52 = arith.mulf %39, %51 : vector<2x8x32xf32>
    %c0_37 = arith.constant 0 : index
    %c0_38 = arith.constant 0 : index
    %c0_39 = arith.constant 0 : index
    %53 = vector.load %arg35[%c0_37, %c0_38, %c0_39] : memref<2x11x32xf32, #tpu.memory_space<vmem>>, vector<2x8x32xf32>
    %54 = vector.extract_strided_slice %45 {offsets = [0, 0], sizes = [1, 32], strides = [1, 1]} : vector<4x32xf32> to vector<1x32xf32>
    %55 = vector.shape_cast %54 : vector<1x32xf32> to vector<1x1x32xf32>
    %56 = vector.broadcast %55 : vector<1x1x32xf32> to vector<2x8x32xf32>
    %57 = arith.mulf %53, %56 : vector<2x8x32xf32>
    %58 = arith.addf %52, %57 : vector<2x8x32xf32>
    %c0_40 = arith.constant 0 : index
    %c1 = arith.constant 1 : index
    %c0_41 = arith.constant 0 : index
    %59 = vector.load %arg35[%c0_40, %c1, %c0_41] : memref<2x11x32xf32, #tpu.memory_space<vmem>>, vector<2x8x32xf32>
    %60 = vector.extract_strided_slice %45 {offsets = [1, 0], sizes = [1, 32], strides = [1, 1]} : vector<4x32xf32> to vector<1x32xf32>
    %61 = vector.shape_cast %60 : vector<1x32xf32> to vector<1x1x32xf32>
    %62 = vector.broadcast %61 : vector<1x1x32xf32> to vector<2x8x32xf32>
    %63 = arith.mulf %59, %62 : vector<2x8x32xf32>
    %64 = arith.addf %58, %63 : vector<2x8x32xf32>
    %c0_42 = arith.constant 0 : index
    %c2 = arith.constant 2 : index
    %c0_43 = arith.constant 0 : index
    %65 = vector.load %arg35[%c0_42, %c2, %c0_43] : memref<2x11x32xf32, #tpu.memory_space<vmem>>, vector<2x8x32xf32>
    %66 = vector.extract_strided_slice %45 {offsets = [2, 0], sizes = [1, 32], strides = [1, 1]} : vector<4x32xf32> to vector<1x32xf32>
    %67 = vector.shape_cast %66 : vector<1x32xf32> to vector<1x1x32xf32>
    %68 = vector.broadcast %67 : vector<1x1x32xf32> to vector<2x8x32xf32>
    %69 = arith.mulf %65, %68 : vector<2x8x32xf32>
    %70 = arith.addf %64, %69 : vector<2x8x32xf32>
    %c0_44 = arith.constant 0 : index
    %c0_45 = arith.constant 0 : index
    %c0_46 = arith.constant 0 : index
    %71 = vector.load %arg11[%c0_44, %c0_45, %c0_46] : memref<2x1x32xf32, #tpu.memory_space<vmem>>, vector<1x1x32xf32>
    %72 = vector.shape_cast %71 : vector<1x1x32xf32> to vector<1x32xf32>
    %73 = vector.shape_cast %72 : vector<1x32xf32> to vector<1x1x32xf32>
    %74 = vector.broadcast %73 : vector<1x1x32xf32> to vector<2x8x32xf32>
    %75 = arith.addf %70, %74 : vector<2x8x32xf32>
    %cst_47 = arith.constant 0.000000e+00 : f32
    %76 = vector.broadcast %cst_47 : f32 to vector<2x8x32xf32>
    %77 = arith.subf %76, %75 : vector<2x8x32xf32>
    %78 = math.exp %77 : vector<2x8x32xf32>
    %cst_48 = arith.constant 1.000000e+00 : f32
    %79 = vector.broadcast %cst_48 : f32 to vector<2x8x32xf32>
    %80 = arith.addf %79, %78 : vector<2x8x32xf32>
    %cst_49 = arith.constant 1.000000e+00 : f32
    %81 = vector.broadcast %cst_49 : f32 to vector<2x8x32xf32>
    %82 = arith.divf %81, %80 : vector<2x8x32xf32>
    %83 = arith.mulf %75, %82 : vector<2x8x32xf32>
    %c0_50 = arith.constant 0 : index
    %c0_51 = arith.constant 0 : index
    %c0_52 = arith.constant 0 : index
    %84 = vector.load %arg29[%c0_50, %c0_51, %c0_52] : memref<2x8x32xf32, #tpu.memory_space<vmem>>, vector<2x8x32xf32>
    tpu.vector_store %arg29[%c0_50, %c0_51, %c0_52], %83 {strides = array<i32>} : memref<2x8x32xf32, #tpu.memory_space<vmem>>, vector<2x8x32xf32>,
    %85 = vector.shape_cast %83 : vector<2x8x32xf32> to vector<16x32xf32>
    %c0_53 = arith.constant 0 : index
    %c0_54 = arith.constant 0 : index
    %c0_55 = arith.constant 0 : index
    %86 = vector.load %arg12[%c0_53, %c0_54, %c0_55] : memref<2x32x32xf32, #tpu.memory_space<vmem>>, vector<1x32x32xf32>
    %87 = vector.shape_cast %86 : vector<1x32x32xf32> to vector<32x32xf32>
    %cst_56 = arith.constant dense<0.000000e+00> : vector<16x32xf32>
    %88 = tpu.matmul %85, %87, %cst_56 {dimension_numbers = #tpu.dot_dimension_numbers<[1], [0], [0], [1], [0, 0, 1, 1], [], []>} : vector<16x32xf32>, vector<32x32xf32>, vector<16x32xf32> -> vector<16x32xf32>
    %89 = vector.shape_cast %88 : vector<16x32xf32> to vector<2x8x32xf32>
    %c0_57 = arith.constant 0 : index
    %c0_58 = arith.constant 0 : index
    %c0_59 = arith.constant 0 : index
    %90 = vector.load %arg13[%c0_57, %c0_58, %c0_59] : memref<2x1x32xf32, #tpu.memory_space<vmem>>, vector<1x1x32xf32>
    %91 = vector.shape_cast %90 : vector<1x1x32xf32> to vector<1x32xf32>
    %92 = vector.shape_cast %91 : vector<1x32xf32> to vector<1x1x32xf32>
    %93 = vector.broadcast %92 : vector<1x1x32xf32> to vector<2x8x32xf32>
    %94 = arith.addf %89, %93 : vector<2x8x32xf32>
    %cst_60 = arith.constant 0.000000e+00 : f32
    %95 = vector.broadcast %cst_60 : f32 to vector<2x8x32xf32>
    %96 = arith.maximumf %94, %95 : vector<2x8x32xf32>
    %97 = math.absf %94 : vector<2x8x32xf32>
    %cst_61 = arith.constant 0.000000e+00 : f32
    %98 = vector.broadcast %cst_61 : f32 to vector<2x8x32xf32>
    %99 = arith.subf %98, %97 : vector<2x8x32xf32>
    %100 = math.exp %99 : vector<2x8x32xf32>
    %101 = math.log1p %100 : vector<2x8x32xf32>
    %102 = arith.addf %96, %101 : vector<2x8x32xf32>
    %c0_62 = arith.constant 0 : index
    %c0_63 = arith.constant 0 : index
    %c0_64 = arith.constant 0 : index
    %103 = vector.load %arg30[%c0_62, %c0_63, %c0_64] : memref<2x8x32xf32, #tpu.memory_space<vmem>>, vector<2x8x32xf32>
    tpu.vector_store %arg30[%c0_62, %c0_63, %c0_64], %102 {strides = array<i32>} : memref<2x8x32xf32, #tpu.memory_space<vmem>>, vector<2x8x32xf32>,
    %c0_65 = arith.constant 0 : index
    %c0_66 = arith.constant 0 : index
    %c0_67 = arith.constant 0 : index
    %104 = vector.load %arg14[%c0_65, %c0_66, %c0_67] : memref<2x32x8xf32, #tpu.memory_space<vmem>>, vector<1x32x8xf32>
    %105 = vector.shape_cast %104 : vector<1x32x8xf32> to vector<32x8xf32>
    %cst_68 = arith.constant dense<0.000000e+00> : vector<16x8xf32>
    %106 = tpu.matmul %85, %105, %cst_68 {dimension_numbers = #tpu.dot_dimension_numbers<[1], [0], [0], [1], [0, 0, 1, 1], [], []>} : vector<16x32xf32>, vector<32x8xf32>, vector<16x8xf32> -> vector<16x8xf32>
    %107 = vector.shape_cast %106 : vector<16x8xf32> to vector<2x8x8xf32>
    %c0_69 = arith.constant 0 : index
    %c0_70 = arith.constant 0 : index
    %c0_71 = arith.constant 0 : index
    %108 = vector.load %arg31[%c0_69, %c0_70, %c0_71] : memref<2x8x8xf32, #tpu.memory_space<vmem>>, vector<2x8x8xf32>
    tpu.vector_store %arg31[%c0_69, %c0_70, %c0_71], %107 {strides = array<i32>} : memref<2x8x8xf32, #tpu.memory_space<vmem>>, vector<2x8x8xf32>,
    %c0_72 = arith.constant 0 : index
    %c0_73 = arith.constant 0 : index
    %c0_74 = arith.constant 0 : index
    %109 = vector.load %arg15[%c0_72, %c0_73, %c0_74] : memref<2x32x8xf32, #tpu.memory_space<vmem>>, vector<1x32x8xf32>
    %110 = vector.shape_cast %109 : vector<1x32x8xf32> to vector<32x8xf32>
    %cst_75 = arith.constant dense<0.000000e+00> : vector<16x8xf32>
    %111 = tpu.matmul %85, %110, %cst_75 {dimension_numbers = #tpu.dot_dimension_numbers<[1], [0], [0], [1], [0, 0, 1, 1], [], []>} : vector<16x32xf32>, vector<32x8xf32>, vector<16x8xf32> -> vector<16x8xf32>
    %112 = vector.shape_cast %111 : vector<16x8xf32> to vector<2x8x8xf32>
    %c0_76 = arith.constant 0 : index
    %c0_77 = arith.constant 0 : index
    %c0_78 = arith.constant 0 : index
    %113 = vector.load %arg32[%c0_76, %c0_77, %c0_78] : memref<2x8x8xf32, #tpu.memory_space<vmem>>, vector<2x8x8xf32>
    tpu.vector_store %arg32[%c0_76, %c0_77, %c0_78], %112 {strides = array<i32>} : memref<2x8x8xf32, #tpu.memory_space<vmem>>, vector<2x8x8xf32>,
    %c0_79 = arith.constant 0 : index
    %c0_80 = arith.constant 0 : index
    %c0_81 = arith.constant 0 : index
    %114 = vector.load %arg16[%c0_79, %c0_80, %c0_81] : memref<2x8x32xf32, #tpu.memory_space<vmem>>, vector<1x8x32xf32>
    %115 = vector.shape_cast %114 : vector<1x8x32xf32> to vector<8x32xf32>
    %cst_82 = arith.constant 0.000000e+00 : f32
    %116 = vector.broadcast %cst_82 : f32 to vector<2x8x32xf32>
    %c0_83 = arith.constant 0 : index
    %c0_84 = arith.constant 0 : index
    %c0_85 = arith.constant 0 : index
    %117 = vector.load %arg34[%c0_83, %c0_84, %c0_85] : memref<2x8x32xf32, #tpu.memory_space<vmem>>, vector<2x8x32xf32>
    tpu.vector_store %arg34[%c0_83, %c0_84, %c0_85], %116 {strides = array<i32>} : memref<2x8x32xf32, #tpu.memory_space<vmem>>, vector<2x8x32xf32>,
    %c0_i32 = arith.constant 0 : i32
    %c8_i32 = arith.constant 8 : i32
    %118 = arith.addi %c0_i32, %c8_i32 : i32
    %c1_i32 = arith.constant 1 : i32
    scf.for %arg36 = %c0_i32 to %118 step %c1_i32  : i32 {
      %c0_233 = arith.constant 0 : index
      %339 = arith.index_cast %arg36 : i32 to index
      %c0_234 = arith.constant 0 : index
      %340 = vector.load %arg30[%c0_233, %339, %c0_234] : memref<2x8x32xf32, #tpu.memory_space<vmem>>, vector<2x1x32xf32>
      %c0_235 = arith.constant 0 : index
      %341 = arith.index_cast %arg36 : i32 to index
      %c0_236 = arith.constant 0 : index
      %342 = vector.load %arg29[%c0_235, %341, %c0_236] : memref<2x8x32xf32, #tpu.memory_space<vmem>>, vector<2x1x32xf32>
      %c0_237 = arith.constant 0 : index
      %343 = arith.index_cast %arg36 : i32 to index
      %c0_238 = arith.constant 0 : index
      %344 = vector.load %arg31[%c0_237, %343, %c0_238] : memref<2x8x8xf32, #tpu.memory_space<vmem>>, vector<2x1x8xf32>
      %345 = vector.shape_cast %344 : vector<2x1x8xf32> to vector<2x8x1xf32>
      %c0_239 = arith.constant 0 : index
      %346 = arith.index_cast %arg36 : i32 to index
      %c0_240 = arith.constant 0 : index
      %347 = vector.load %arg32[%c0_239, %346, %c0_240] : memref<2x8x8xf32, #tpu.memory_space<vmem>>, vector<2x1x8xf32>
      %348 = vector.shape_cast %347 : vector<2x1x8xf32> to vector<2x8x1xf32>
      %349 = vector.shape_cast %115 : vector<8x32xf32> to vector<1x8x32xf32>
      %350 = vector.broadcast %340 : vector<2x1x32xf32> to vector<2x8x32xf32>
      %351 = vector.broadcast %349 : vector<1x8x32xf32> to vector<2x8x32xf32>
      %352 = arith.mulf %350, %351 : vector<2x8x32xf32>
      %353 = math.exp %352 : vector<2x8x32xf32>
      %c0_241 = arith.constant 0 : index
      %c0_242 = arith.constant 0 : index
      %c0_243 = arith.constant 0 : index
      %354 = vector.load %arg34[%c0_241, %c0_242, %c0_243] : memref<2x8x32xf32, #tpu.memory_space<vmem>>, vector<2x8x32xf32>
      %355 = arith.mulf %353, %354 : vector<2x8x32xf32>
      %356 = arith.mulf %340, %342 : vector<2x1x32xf32>
      %357 = vector.broadcast %356 : vector<2x1x32xf32> to vector<2x8x32xf32>
      %358 = vector.broadcast %345 : vector<2x8x1xf32> to vector<2x8x32xf32>
      %359 = arith.mulf %357, %358 : vector<2x8x32xf32>
      %360 = arith.addf %355, %359 : vector<2x8x32xf32>
      %c0_244 = arith.constant 0 : index
      %c0_245 = arith.constant 0 : index
      %c0_246 = arith.constant 0 : index
      %361 = vector.load %arg34[%c0_244, %c0_245, %c0_246] : memref<2x8x32xf32, #tpu.memory_space<vmem>>, vector<2x8x32xf32>
      tpu.vector_store %arg34[%c0_244, %c0_245, %c0_246], %360 {strides = array<i32>} : memref<2x8x32xf32, #tpu.memory_space<vmem>>, vector<2x8x32xf32>,
      %362 = vector.broadcast %348 : vector<2x8x1xf32> to vector<2x8x32xf32>
      %363 = arith.mulf %360, %362 : vector<2x8x32xf32>
      %cst_247 = arith.constant dense<0.000000e+00> : vector<2x32xf32>
      %364 = vector.multi_reduction <add>, %363, %cst_247 [1] : vector<2x8x32xf32> to vector<2x32xf32>
      %365 = vector.shape_cast %364 : vector<2x32xf32> to vector<2x1x32xf32>
      %c0_248 = arith.constant 0 : index
      %366 = arith.index_cast %arg36 : i32 to index
      %c0_249 = arith.constant 0 : index
      %367 = vector.load %arg33[%c0_248, %366, %c0_249] : memref<2x8x32xf32, #tpu.memory_space<vmem>>, vector<2x1x32xf32>
      tpu.vector_store %arg33[%c0_248, %366, %c0_249], %365 {strides = array<i32>} : memref<2x8x32xf32, #tpu.memory_space<vmem>>, vector<2x1x32xf32>,
    }
    %c8_i32_86 = arith.constant 8 : i32
    %c0_87 = arith.constant 0 : index
    %c0_88 = arith.constant 0 : index
    %c0_89 = arith.constant 0 : index
    %119 = vector.load %arg33[%c0_87, %c0_88, %c0_89] : memref<2x8x32xf32, #tpu.memory_space<vmem>>, vector<2x8x32xf32>
    %c0_90 = arith.constant 0 : index
    %c0_91 = arith.constant 0 : index
    %c0_92 = arith.constant 0 : index
    %120 = vector.load %arg29[%c0_90, %c0_91, %c0_92] : memref<2x8x32xf32, #tpu.memory_space<vmem>>, vector<2x8x32xf32>
    %c0_93 = arith.constant 0 : index
    %c0_94 = arith.constant 0 : index
    %c0_95 = arith.constant 0 : index
    %121 = vector.load %arg17[%c0_93, %c0_94, %c0_95] : memref<2x1x32xf32, #tpu.memory_space<vmem>>, vector<1x1x32xf32>
    %122 = vector.shape_cast %121 : vector<1x1x32xf32> to vector<1x32xf32>
    %123 = vector.shape_cast %122 : vector<1x32xf32> to vector<1x1x32xf32>
    %124 = vector.broadcast %123 : vector<1x1x32xf32> to vector<2x8x32xf32>
    %125 = arith.mulf %120, %124 : vector<2x8x32xf32>
    %126 = arith.addf %119, %125 : vector<2x8x32xf32>
    %cst_96 = arith.constant 0.000000e+00 : f32
    %127 = vector.broadcast %cst_96 : f32 to vector<2x8x32xf32>
    %128 = arith.subf %127, %43 : vector<2x8x32xf32>
    %129 = math.exp %128 : vector<2x8x32xf32>
    %cst_97 = arith.constant 1.000000e+00 : f32
    %130 = vector.broadcast %cst_97 : f32 to vector<2x8x32xf32>
    %131 = arith.addf %130, %129 : vector<2x8x32xf32>
    %cst_98 = arith.constant 1.000000e+00 : f32
    %132 = vector.broadcast %cst_98 : f32 to vector<2x8x32xf32>
    %133 = arith.divf %132, %131 : vector<2x8x32xf32>
    %134 = arith.mulf %43, %133 : vector<2x8x32xf32>
    %135 = arith.mulf %126, %134 : vector<2x8x32xf32>
    %136 = vector.shape_cast %135 : vector<2x8x32xf32> to vector<16x32xf32>
    %c0_99 = arith.constant 0 : index
    %c0_100 = arith.constant 0 : index
    %c0_101 = arith.constant 0 : index
    %137 = vector.load %arg18[%c0_99, %c0_100, %c0_101] : memref<2x32x16xf32, #tpu.memory_space<vmem>>, vector<1x32x16xf32>
    %138 = vector.shape_cast %137 : vector<1x32x16xf32> to vector<32x16xf32>
    %cst_102 = arith.constant dense<0.000000e+00> : vector<16x16xf32>
    %139 = tpu.matmul %136, %138, %cst_102 {dimension_numbers = #tpu.dot_dimension_numbers<[1], [0], [0], [1], [0, 0, 1, 1], [], []>} : vector<16x32xf32>, vector<32x16xf32>, vector<16x16xf32> -> vector<16x16xf32>
    %140 = vector.shape_cast %139 : vector<16x16xf32> to vector<2x8x16xf32>
    %141 = vector.shape_cast %34 : vector<2x8x16xf32> to vector<16x16xf32>
    %c1_103 = arith.constant 1 : index
    %c0_104 = arith.constant 0 : index
    %c0_105 = arith.constant 0 : index
    %142 = vector.load %arg8[%c1_103, %c0_104, %c0_105] : memref<2x16x32xf32, #tpu.memory_space<vmem>>, vector<1x16x32xf32>
    %143 = vector.shape_cast %142 : vector<1x16x32xf32> to vector<16x32xf32>
    %cst_106 = arith.constant dense<0.000000e+00> : vector<16x32xf32>
    %144 = tpu.matmul %141, %143, %cst_106 {dimension_numbers = #tpu.dot_dimension_numbers<[1], [0], [0], [1], [0, 0, 1, 1], [], []>} : vector<16x16xf32>, vector<16x32xf32>, vector<16x32xf32> -> vector<16x32xf32>
    %145 = vector.shape_cast %144 : vector<16x32xf32> to vector<2x8x32xf32>
    %c1_107 = arith.constant 1 : index
    %c0_108 = arith.constant 0 : index
    %c0_109 = arith.constant 0 : index
    %146 = vector.load %arg9[%c1_107, %c0_108, %c0_109] : memref<2x16x32xf32, #tpu.memory_space<vmem>>, vector<1x16x32xf32>
    %147 = vector.shape_cast %146 : vector<1x16x32xf32> to vector<16x32xf32>
    %cst_110 = arith.constant dense<0.000000e+00> : vector<16x32xf32>
    %148 = tpu.matmul %141, %147, %cst_110 {dimension_numbers = #tpu.dot_dimension_numbers<[1], [0], [0], [1], [0, 0, 1, 1], [], []>} : vector<16x16xf32>, vector<16x32xf32>, vector<16x32xf32> -> vector<16x32xf32>
    %149 = vector.shape_cast %148 : vector<16x32xf32> to vector<2x8x32xf32>
    %c1_111 = arith.constant 1 : index
    %c0_112 = arith.constant 0 : index
    %c0_113 = arith.constant 0 : index
    %150 = vector.load %arg10[%c1_111, %c0_112, %c0_113] : memref<2x4x32xf32, #tpu.memory_space<vmem>>, vector<1x4x32xf32>
    %151 = vector.shape_cast %150 : vector<1x4x32xf32> to vector<4x32xf32>
    %cst_114 = arith.constant 0.000000e+00 : f32
    %152 = vector.broadcast %cst_114 : f32 to vector<2x3x32xf32>
    %c0_115 = arith.constant 0 : index
    %c0_116 = arith.constant 0 : index
    %c0_117 = arith.constant 0 : index
    %153 = vector.load %arg35[%c0_115, %c0_116, %c0_117] : memref<2x11x32xf32, #tpu.memory_space<vmem>>, vector<2x3x32xf32>
    tpu.vector_store %arg35[%c0_115, %c0_116, %c0_117], %152 {strides = array<i32>} : memref<2x11x32xf32, #tpu.memory_space<vmem>>, vector<2x3x32xf32>,
    %c0_118 = arith.constant 0 : index
    %c3_119 = arith.constant 3 : index
    %c0_120 = arith.constant 0 : index
    %154 = vector.load %arg35[%c0_118, %c3_119, %c0_120] : memref<2x11x32xf32, #tpu.memory_space<vmem>>, vector<2x8x32xf32>
    tpu.vector_store %arg35[%c0_118, %c3_119, %c0_120], %145 {strides = array<i32>} : memref<2x11x32xf32, #tpu.memory_space<vmem>>, vector<2x8x32xf32>,
    %155 = vector.extract_strided_slice %151 {offsets = [3, 0], sizes = [1, 32], strides = [1, 1]} : vector<4x32xf32> to vector<1x32xf32>
    %156 = vector.shape_cast %155 : vector<1x32xf32> to vector<1x1x32xf32>
    %157 = vector.broadcast %156 : vector<1x1x32xf32> to vector<2x8x32xf32>
    %158 = arith.mulf %145, %157 : vector<2x8x32xf32>
    %c0_121 = arith.constant 0 : index
    %c0_122 = arith.constant 0 : index
    %c0_123 = arith.constant 0 : index
    %159 = vector.load %arg35[%c0_121, %c0_122, %c0_123] : memref<2x11x32xf32, #tpu.memory_space<vmem>>, vector<2x8x32xf32>
    %160 = vector.extract_strided_slice %151 {offsets = [0, 0], sizes = [1, 32], strides = [1, 1]} : vector<4x32xf32> to vector<1x32xf32>
    %161 = vector.shape_cast %160 : vector<1x32xf32> to vector<1x1x32xf32>
    %162 = vector.broadcast %161 : vector<1x1x32xf32> to vector<2x8x32xf32>
    %163 = arith.mulf %159, %162 : vector<2x8x32xf32>
    %164 = arith.addf %158, %163 : vector<2x8x32xf32>
    %c0_124 = arith.constant 0 : index
    %c1_125 = arith.constant 1 : index
    %c0_126 = arith.constant 0 : index
    %165 = vector.load %arg35[%c0_124, %c1_125, %c0_126] : memref<2x11x32xf32, #tpu.memory_space<vmem>>, vector<2x8x32xf32>
    %166 = vector.extract_strided_slice %151 {offsets = [1, 0], sizes = [1, 32], strides = [1, 1]} : vector<4x32xf32> to vector<1x32xf32>
    %167 = vector.shape_cast %166 : vector<1x32xf32> to vector<1x1x32xf32>
    %168 = vector.broadcast %167 : vector<1x1x32xf32> to vector<2x8x32xf32>
    %169 = arith.mulf %165, %168 : vector<2x8x32xf32>
    %170 = arith.addf %164, %169 : vector<2x8x32xf32>
    %c0_127 = arith.constant 0 : index
    %c2_128 = arith.constant 2 : index
    %c0_129 = arith.constant 0 : index
    %171 = vector.load %arg35[%c0_127, %c2_128, %c0_129] : memref<2x11x32xf32, #tpu.memory_space<vmem>>, vector<2x8x32xf32>
    %172 = vector.extract_strided_slice %151 {offsets = [2, 0], sizes = [1, 32], strides = [1, 1]} : vector<4x32xf32> to vector<1x32xf32>
    %173 = vector.shape_cast %172 : vector<1x32xf32> to vector<1x1x32xf32>
    %174 = vector.broadcast %173 : vector<1x1x32xf32> to vector<2x8x32xf32>
    %175 = arith.mulf %171, %174 : vector<2x8x32xf32>
    %176 = arith.addf %170, %175 : vector<2x8x32xf32>
    %c1_130 = arith.constant 1 : index
    %c0_131 = arith.constant 0 : index
    %c0_132 = arith.constant 0 : index
    %177 = vector.load %arg11[%c1_130, %c0_131, %c0_132] : memref<2x1x32xf32, #tpu.memory_space<vmem>>, vector<1x1x32xf32>
    %178 = vector.shape_cast %177 : vector<1x1x32xf32> to vector<1x32xf32>
    %179 = vector.shape_cast %178 : vector<1x32xf32> to vector<1x1x32xf32>
    %180 = vector.broadcast %179 : vector<1x1x32xf32> to vector<2x8x32xf32>
    %181 = arith.addf %176, %180 : vector<2x8x32xf32>
    %cst_133 = arith.constant 0.000000e+00 : f32
    %182 = vector.broadcast %cst_133 : f32 to vector<2x8x32xf32>
    %183 = arith.subf %182, %181 : vector<2x8x32xf32>
    %184 = math.exp %183 : vector<2x8x32xf32>
    %cst_134 = arith.constant 1.000000e+00 : f32
    %185 = vector.broadcast %cst_134 : f32 to vector<2x8x32xf32>
    %186 = arith.addf %185, %184 : vector<2x8x32xf32>
    %cst_135 = arith.constant 1.000000e+00 : f32
    %187 = vector.broadcast %cst_135 : f32 to vector<2x8x32xf32>
    %188 = arith.divf %187, %186 : vector<2x8x32xf32>
    %189 = arith.mulf %181, %188 : vector<2x8x32xf32>
    %c0_136 = arith.constant 0 : index
    %c0_137 = arith.constant 0 : index
    %c0_138 = arith.constant 0 : index
    %190 = vector.load %arg29[%c0_136, %c0_137, %c0_138] : memref<2x8x32xf32, #tpu.memory_space<vmem>>, vector<2x8x32xf32>
    tpu.vector_store %arg29[%c0_136, %c0_137, %c0_138], %189 {strides = array<i32>} : memref<2x8x32xf32, #tpu.memory_space<vmem>>, vector<2x8x32xf32>,
    %191 = vector.shape_cast %189 : vector<2x8x32xf32> to vector<16x32xf32>
    %c1_139 = arith.constant 1 : index
    %c0_140 = arith.constant 0 : index
    %c0_141 = arith.constant 0 : index
    %192 = vector.load %arg12[%c1_139, %c0_140, %c0_141] : memref<2x32x32xf32, #tpu.memory_space<vmem>>, vector<1x32x32xf32>
    %193 = vector.shape_cast %192 : vector<1x32x32xf32> to vector<32x32xf32>
    %cst_142 = arith.constant dense<0.000000e+00> : vector<16x32xf32>
    %194 = tpu.matmul %191, %193, %cst_142 {dimension_numbers = #tpu.dot_dimension_numbers<[1], [0], [0], [1], [0, 0, 1, 1], [], []>} : vector<16x32xf32>, vector<32x32xf32>, vector<16x32xf32> -> vector<16x32xf32>
    %195 = vector.shape_cast %194 : vector<16x32xf32> to vector<2x8x32xf32>
    %c1_143 = arith.constant 1 : index
    %c0_144 = arith.constant 0 : index
    %c0_145 = arith.constant 0 : index
    %196 = vector.load %arg13[%c1_143, %c0_144, %c0_145] : memref<2x1x32xf32, #tpu.memory_space<vmem>>, vector<1x1x32xf32>
    %197 = vector.shape_cast %196 : vector<1x1x32xf32> to vector<1x32xf32>
    %198 = vector.shape_cast %197 : vector<1x32xf32> to vector<1x1x32xf32>
    %199 = vector.broadcast %198 : vector<1x1x32xf32> to vector<2x8x32xf32>
    %200 = arith.addf %195, %199 : vector<2x8x32xf32>
    %cst_146 = arith.constant 0.000000e+00 : f32
    %201 = vector.broadcast %cst_146 : f32 to vector<2x8x32xf32>
    %202 = arith.maximumf %200, %201 : vector<2x8x32xf32>
    %203 = math.absf %200 : vector<2x8x32xf32>
    %cst_147 = arith.constant 0.000000e+00 : f32
    %204 = vector.broadcast %cst_147 : f32 to vector<2x8x32xf32>
    %205 = arith.subf %204, %203 : vector<2x8x32xf32>
    %206 = math.exp %205 : vector<2x8x32xf32>
    %207 = math.log1p %206 : vector<2x8x32xf32>
    %208 = arith.addf %202, %207 : vector<2x8x32xf32>
    %c0_148 = arith.constant 0 : index
    %c0_149 = arith.constant 0 : index
    %c0_150 = arith.constant 0 : index
    %209 = vector.load %arg30[%c0_148, %c0_149, %c0_150] : memref<2x8x32xf32, #tpu.memory_space<vmem>>, vector<2x8x32xf32>
    tpu.vector_store %arg30[%c0_148, %c0_149, %c0_150], %208 {strides = array<i32>} : memref<2x8x32xf32, #tpu.memory_space<vmem>>, vector<2x8x32xf32>,
    %c1_151 = arith.constant 1 : index
    %c0_152 = arith.constant 0 : index
    %c0_153 = arith.constant 0 : index
    %210 = vector.load %arg14[%c1_151, %c0_152, %c0_153] : memref<2x32x8xf32, #tpu.memory_space<vmem>>, vector<1x32x8xf32>
    %211 = vector.shape_cast %210 : vector<1x32x8xf32> to vector<32x8xf32>
    %cst_154 = arith.constant dense<0.000000e+00> : vector<16x8xf32>
    %212 = tpu.matmul %191, %211, %cst_154 {dimension_numbers = #tpu.dot_dimension_numbers<[1], [0], [0], [1], [0, 0, 1, 1], [], []>} : vector<16x32xf32>, vector<32x8xf32>, vector<16x8xf32> -> vector<16x8xf32>
    %213 = vector.shape_cast %212 : vector<16x8xf32> to vector<2x8x8xf32>
    %c0_155 = arith.constant 0 : index
    %c0_156 = arith.constant 0 : index
    %c0_157 = arith.constant 0 : index
    %214 = vector.load %arg31[%c0_155, %c0_156, %c0_157] : memref<2x8x8xf32, #tpu.memory_space<vmem>>, vector<2x8x8xf32>
    tpu.vector_store %arg31[%c0_155, %c0_156, %c0_157], %213 {strides = array<i32>} : memref<2x8x8xf32, #tpu.memory_space<vmem>>, vector<2x8x8xf32>,
    %c1_158 = arith.constant 1 : index
    %c0_159 = arith.constant 0 : index
    %c0_160 = arith.constant 0 : index
    %215 = vector.load %arg15[%c1_158, %c0_159, %c0_160] : memref<2x32x8xf32, #tpu.memory_space<vmem>>, vector<1x32x8xf32>
    %216 = vector.shape_cast %215 : vector<1x32x8xf32> to vector<32x8xf32>
    %cst_161 = arith.constant dense<0.000000e+00> : vector<16x8xf32>
    %217 = tpu.matmul %191, %216, %cst_161 {dimension_numbers = #tpu.dot_dimension_numbers<[1], [0], [0], [1], [0, 0, 1, 1], [], []>} : vector<16x32xf32>, vector<32x8xf32>, vector<16x8xf32> -> vector<16x8xf32>
    %218 = vector.shape_cast %217 : vector<16x8xf32> to vector<2x8x8xf32>
    %c0_162 = arith.constant 0 : index
    %c0_163 = arith.constant 0 : index
    %c0_164 = arith.constant 0 : index
    %219 = vector.load %arg32[%c0_162, %c0_163, %c0_164] : memref<2x8x8xf32, #tpu.memory_space<vmem>>, vector<2x8x8xf32>
    tpu.vector_store %arg32[%c0_162, %c0_163, %c0_164], %218 {strides = array<i32>} : memref<2x8x8xf32, #tpu.memory_space<vmem>>, vector<2x8x8xf32>,
    %c1_165 = arith.constant 1 : index
    %c0_166 = arith.constant 0 : index
    %c0_167 = arith.constant 0 : index
    %220 = vector.load %arg16[%c1_165, %c0_166, %c0_167] : memref<2x8x32xf32, #tpu.memory_space<vmem>>, vector<1x8x32xf32>
    %221 = vector.shape_cast %220 : vector<1x8x32xf32> to vector<8x32xf32>
    %cst_168 = arith.constant 0.000000e+00 : f32
    %222 = vector.broadcast %cst_168 : f32 to vector<2x8x32xf32>
    %c0_169 = arith.constant 0 : index
    %c0_170 = arith.constant 0 : index
    %c0_171 = arith.constant 0 : index
    %223 = vector.load %arg34[%c0_169, %c0_170, %c0_171] : memref<2x8x32xf32, #tpu.memory_space<vmem>>, vector<2x8x32xf32>
    tpu.vector_store %arg34[%c0_169, %c0_170, %c0_171], %222 {strides = array<i32>} : memref<2x8x32xf32, #tpu.memory_space<vmem>>, vector<2x8x32xf32>,
    %c0_i32_172 = arith.constant 0 : i32
    %c8_i32_173 = arith.constant 8 : i32
    %224 = arith.addi %c0_i32_172, %c8_i32_173 : i32
    %c1_i32_174 = arith.constant 1 : i32
    scf.for %arg36 = %c0_i32_172 to %224 step %c1_i32_174  : i32 {
      %c0_233 = arith.constant 0 : index
      %339 = arith.index_cast %arg36 : i32 to index
      %c0_234 = arith.constant 0 : index
      %340 = vector.load %arg30[%c0_233, %339, %c0_234] : memref<2x8x32xf32, #tpu.memory_space<vmem>>, vector<2x1x32xf32>
      %c0_235 = arith.constant 0 : index
      %341 = arith.index_cast %arg36 : i32 to index
      %c0_236 = arith.constant 0 : index
      %342 = vector.load %arg29[%c0_235, %341, %c0_236] : memref<2x8x32xf32, #tpu.memory_space<vmem>>, vector<2x1x32xf32>
      %c0_237 = arith.constant 0 : index
      %343 = arith.index_cast %arg36 : i32 to index
      %c0_238 = arith.constant 0 : index
      %344 = vector.load %arg31[%c0_237, %343, %c0_238] : memref<2x8x8xf32, #tpu.memory_space<vmem>>, vector<2x1x8xf32>
      %345 = vector.shape_cast %344 : vector<2x1x8xf32> to vector<2x8x1xf32>
      %c0_239 = arith.constant 0 : index
      %346 = arith.index_cast %arg36 : i32 to index
      %c0_240 = arith.constant 0 : index
      %347 = vector.load %arg32[%c0_239, %346, %c0_240] : memref<2x8x8xf32, #tpu.memory_space<vmem>>, vector<2x1x8xf32>
      %348 = vector.shape_cast %347 : vector<2x1x8xf32> to vector<2x8x1xf32>
      %349 = vector.shape_cast %221 : vector<8x32xf32> to vector<1x8x32xf32>
      %350 = vector.broadcast %340 : vector<2x1x32xf32> to vector<2x8x32xf32>
      %351 = vector.broadcast %349 : vector<1x8x32xf32> to vector<2x8x32xf32>
      %352 = arith.mulf %350, %351 : vector<2x8x32xf32>
      %353 = math.exp %352 : vector<2x8x32xf32>
      %c0_241 = arith.constant 0 : index
      %c0_242 = arith.constant 0 : index
      %c0_243 = arith.constant 0 : index
      %354 = vector.load %arg34[%c0_241, %c0_242, %c0_243] : memref<2x8x32xf32, #tpu.memory_space<vmem>>, vector<2x8x32xf32>
      %355 = arith.mulf %353, %354 : vector<2x8x32xf32>
      %356 = arith.mulf %340, %342 : vector<2x1x32xf32>
      %357 = vector.broadcast %356 : vector<2x1x32xf32> to vector<2x8x32xf32>
      %358 = vector.broadcast %345 : vector<2x8x1xf32> to vector<2x8x32xf32>
      %359 = arith.mulf %357, %358 : vector<2x8x32xf32>
      %360 = arith.addf %355, %359 : vector<2x8x32xf32>
      %c0_244 = arith.constant 0 : index
      %c0_245 = arith.constant 0 : index
      %c0_246 = arith.constant 0 : index
      %361 = vector.load %arg34[%c0_244, %c0_245, %c0_246] : memref<2x8x32xf32, #tpu.memory_space<vmem>>, vector<2x8x32xf32>
      tpu.vector_store %arg34[%c0_244, %c0_245, %c0_246], %360 {strides = array<i32>} : memref<2x8x32xf32, #tpu.memory_space<vmem>>, vector<2x8x32xf32>,
      %362 = vector.broadcast %348 : vector<2x8x1xf32> to vector<2x8x32xf32>
      %363 = arith.mulf %360, %362 : vector<2x8x32xf32>
      %cst_247 = arith.constant dense<0.000000e+00> : vector<2x32xf32>
      %364 = vector.multi_reduction <add>, %363, %cst_247 [1] : vector<2x8x32xf32> to vector<2x32xf32>
      %365 = vector.shape_cast %364 : vector<2x32xf32> to vector<2x1x32xf32>
      %c0_248 = arith.constant 0 : index
      %366 = arith.index_cast %arg36 : i32 to index
      %c0_249 = arith.constant 0 : index
      %367 = vector.load %arg33[%c0_248, %366, %c0_249] : memref<2x8x32xf32, #tpu.memory_space<vmem>>, vector<2x1x32xf32>
      tpu.vector_store %arg33[%c0_248, %366, %c0_249], %365 {strides = array<i32>} : memref<2x8x32xf32, #tpu.memory_space<vmem>>, vector<2x1x32xf32>,
    }
    %c8_i32_175 = arith.constant 8 : i32
    %c0_176 = arith.constant 0 : index
    %c0_177 = arith.constant 0 : index
    %c0_178 = arith.constant 0 : index
    %225 = vector.load %arg33[%c0_176, %c0_177, %c0_178] : memref<2x8x32xf32, #tpu.memory_space<vmem>>, vector<2x8x32xf32>
    %c0_179 = arith.constant 0 : index
    %c0_180 = arith.constant 0 : index
    %c0_181 = arith.constant 0 : index
    %226 = vector.load %arg29[%c0_179, %c0_180, %c0_181] : memref<2x8x32xf32, #tpu.memory_space<vmem>>, vector<2x8x32xf32>
    %c1_182 = arith.constant 1 : index
    %c0_183 = arith.constant 0 : index
    %c0_184 = arith.constant 0 : index
    %227 = vector.load %arg17[%c1_182, %c0_183, %c0_184] : memref<2x1x32xf32, #tpu.memory_space<vmem>>, vector<1x1x32xf32>
    %228 = vector.shape_cast %227 : vector<1x1x32xf32> to vector<1x32xf32>
    %229 = vector.shape_cast %228 : vector<1x32xf32> to vector<1x1x32xf32>
    %230 = vector.broadcast %229 : vector<1x1x32xf32> to vector<2x8x32xf32>
    %231 = arith.mulf %226, %230 : vector<2x8x32xf32>
    %232 = arith.addf %225, %231 : vector<2x8x32xf32>
    %cst_185 = arith.constant 0.000000e+00 : f32
    %233 = vector.broadcast %cst_185 : f32 to vector<2x8x32xf32>
    %234 = arith.subf %233, %149 : vector<2x8x32xf32>
    %235 = math.exp %234 : vector<2x8x32xf32>
    %cst_186 = arith.constant 1.000000e+00 : f32
    %236 = vector.broadcast %cst_186 : f32 to vector<2x8x32xf32>
    %237 = arith.addf %236, %235 : vector<2x8x32xf32>
    %cst_187 = arith.constant 1.000000e+00 : f32
    %238 = vector.broadcast %cst_187 : f32 to vector<2x8x32xf32>
    %239 = arith.divf %238, %237 : vector<2x8x32xf32>
    %240 = arith.mulf %149, %239 : vector<2x8x32xf32>
    %241 = arith.mulf %232, %240 : vector<2x8x32xf32>
    %242 = vector.shape_cast %241 : vector<2x8x32xf32> to vector<16x32xf32>
    %c1_188 = arith.constant 1 : index
    %c0_189 = arith.constant 0 : index
    %c0_190 = arith.constant 0 : index
    %243 = vector.load %arg18[%c1_188, %c0_189, %c0_190] : memref<2x32x16xf32, #tpu.memory_space<vmem>>, vector<1x32x16xf32>
    %244 = vector.shape_cast %243 : vector<1x32x16xf32> to vector<32x16xf32>
    %cst_191 = arith.constant dense<0.000000e+00> : vector<16x16xf32>
    %245 = tpu.matmul %242, %244, %cst_191 {dimension_numbers = #tpu.dot_dimension_numbers<[1], [0], [0], [1], [0, 0, 1, 1], [], []>} : vector<16x32xf32>, vector<32x16xf32>, vector<16x16xf32> -> vector<16x16xf32>
    %246 = vector.shape_cast %245 : vector<16x16xf32> to vector<2x8x16xf32>
    %cst_192 = arith.constant dense<0.000000e+00> : vector<2x8xf32>
    %247 = vector.multi_reduction <add>, %140, %cst_192 [2] : vector<2x8x16xf32> to vector<2x8xf32>
    %248 = vector.shape_cast %247 : vector<2x8xf32> to vector<2x8x1xf32>
    %cst_193 = arith.constant dense<0.000000e+00> : vector<2x8xf32>
    %249 = vector.multi_reduction <add>, %246, %cst_193 [2] : vector<2x8x16xf32> to vector<2x8xf32>
    %250 = vector.shape_cast %249 : vector<2x8xf32> to vector<2x8x1xf32>
    %251 = arith.addf %248, %250 : vector<2x8x1xf32>
    %cst_194 = arith.constant 3.200000e+01 : f32
    %252 = vector.broadcast %cst_194 : f32 to vector<2x8x1xf32>
    %253 = arith.divf %251, %252 : vector<2x8x1xf32>
    %254 = vector.broadcast %253 : vector<2x8x1xf32> to vector<2x8x16xf32>
    %255 = arith.subf %140, %254 : vector<2x8x16xf32>
    %256 = vector.broadcast %253 : vector<2x8x1xf32> to vector<2x8x16xf32>
    %257 = arith.subf %246, %256 : vector<2x8x16xf32>
    %258 = arith.mulf %255, %255 : vector<2x8x16xf32>
    %cst_195 = arith.constant dense<0.000000e+00> : vector<2x8xf32>
    %259 = vector.multi_reduction <add>, %258, %cst_195 [2] : vector<2x8x16xf32> to vector<2x8xf32>
    %260 = vector.shape_cast %259 : vector<2x8xf32> to vector<2x8x1xf32>
    %261 = arith.mulf %257, %257 : vector<2x8x16xf32>
    %cst_196 = arith.constant dense<0.000000e+00> : vector<2x8xf32>
    %262 = vector.multi_reduction <add>, %261, %cst_196 [2] : vector<2x8x16xf32> to vector<2x8xf32>
    %263 = vector.shape_cast %262 : vector<2x8xf32> to vector<2x8x1xf32>
    %264 = arith.addf %260, %263 : vector<2x8x1xf32>
    %cst_197 = arith.constant 3.200000e+01 : f32
    %265 = vector.broadcast %cst_197 : f32 to vector<2x8x1xf32>
    %266 = arith.divf %264, %265 : vector<2x8x1xf32>
    %cst_198 = arith.constant 9.99999974E-6 : f32
    %267 = vector.broadcast %cst_198 : f32 to vector<2x8x1xf32>
    %268 = arith.addf %266, %267 : vector<2x8x1xf32>
    %269 = math.rsqrt %268 : vector<2x8x1xf32>
    %270 = vector.broadcast %269 : vector<2x8x1xf32> to vector<2x8x16xf32>
    %271 = arith.mulf %255, %270 : vector<2x8x16xf32>
    %c0_199 = arith.constant 0 : index
    %c0_200 = arith.constant 0 : index
    %272 = vector.load %arg19[%c0_199, %c0_200] : memref<1x16xf32, #tpu.memory_space<vmem>>, vector<1x16xf32>
    %273 = vector.shape_cast %272 : vector<1x16xf32> to vector<1x1x16xf32>
    %274 = vector.broadcast %273 : vector<1x1x16xf32> to vector<2x8x16xf32>
    %275 = arith.mulf %271, %274 : vector<2x8x16xf32>
    %c0_201 = arith.constant 0 : index
    %c0_202 = arith.constant 0 : index
    %276 = vector.load %arg21[%c0_201, %c0_202] : memref<1x16xf32, #tpu.memory_space<vmem>>, vector<1x16xf32>
    %277 = vector.shape_cast %276 : vector<1x16xf32> to vector<1x1x16xf32>
    %278 = vector.broadcast %277 : vector<1x1x16xf32> to vector<2x8x16xf32>
    %279 = arith.addf %275, %278 : vector<2x8x16xf32>
    %280 = vector.broadcast %269 : vector<2x8x1xf32> to vector<2x8x16xf32>
    %281 = arith.mulf %257, %280 : vector<2x8x16xf32>
    %c0_203 = arith.constant 0 : index
    %c0_204 = arith.constant 0 : index
    %282 = vector.load %arg20[%c0_203, %c0_204] : memref<1x16xf32, #tpu.memory_space<vmem>>, vector<1x16xf32>
    %283 = vector.shape_cast %282 : vector<1x16xf32> to vector<1x1x16xf32>
    %284 = vector.broadcast %283 : vector<1x1x16xf32> to vector<2x8x16xf32>
    %285 = arith.mulf %281, %284 : vector<2x8x16xf32>
    %c0_205 = arith.constant 0 : index
    %c0_206 = arith.constant 0 : index
    %286 = vector.load %arg22[%c0_205, %c0_206] : memref<1x16xf32, #tpu.memory_space<vmem>>, vector<1x16xf32>
    %287 = vector.shape_cast %286 : vector<1x16xf32> to vector<1x1x16xf32>
    %288 = vector.broadcast %287 : vector<1x1x16xf32> to vector<2x8x16xf32>
    %289 = arith.addf %285, %288 : vector<2x8x16xf32>
    %290 = vector.shape_cast %279 : vector<2x8x16xf32> to vector<16x16xf32>
    %c0_207 = arith.constant 0 : index
    %c0_208 = arith.constant 0 : index
    %291 = vector.load %arg23[%c0_207, %c0_208] : memref<16x16xf32, #tpu.memory_space<vmem>>, vector<16x16xf32>
    %cst_209 = arith.constant dense<0.000000e+00> : vector<16x16xf32>
    %292 = tpu.matmul %290, %291, %cst_209 {dimension_numbers = #tpu.dot_dimension_numbers<[1], [0], [0], [1], [0, 0, 1, 1], [], []>} : vector<16x16xf32>, vector<16x16xf32>, vector<16x16xf32> -> vector<16x16xf32>
    %293 = vector.shape_cast %289 : vector<2x8x16xf32> to vector<16x16xf32>
    %c0_210 = arith.constant 0 : index
    %c0_211 = arith.constant 0 : index
    %294 = vector.load %arg24[%c0_210, %c0_211] : memref<16x16xf32, #tpu.memory_space<vmem>>, vector<16x16xf32>
    %cst_212 = arith.constant dense<0.000000e+00> : vector<16x16xf32>
    %295 = tpu.matmul %293, %294, %cst_212 {dimension_numbers = #tpu.dot_dimension_numbers<[1], [0], [0], [1], [0, 0, 1, 1], [], []>} : vector<16x16xf32>, vector<16x16xf32>, vector<16x16xf32> -> vector<16x16xf32>
    %296 = arith.addf %292, %295 : vector<16x16xf32>
    %297 = vector.shape_cast %296 : vector<16x16xf32> to vector<2x8x16xf32>
    %c0_213 = arith.constant 0 : index
    %c0_214 = arith.constant 0 : index
    %298 = vector.load %arg25[%c0_213, %c0_214] : memref<1x16xf32, #tpu.memory_space<vmem>>, vector<1x16xf32>
    %299 = vector.shape_cast %298 : vector<1x16xf32> to vector<1x1x16xf32>
    %300 = vector.broadcast %299 : vector<1x1x16xf32> to vector<2x8x16xf32>
    %301 = arith.addf %297, %300 : vector<2x8x16xf32>
    %cst_215 = arith.constant 0.000000e+00 : f32
    %302 = vector.broadcast %cst_215 : f32 to vector<2x8x16xf32>
    %303 = arith.subf %302, %301 : vector<2x8x16xf32>
    %304 = math.exp %303 : vector<2x8x16xf32>
    %cst_216 = arith.constant 1.000000e+00 : f32
    %305 = vector.broadcast %cst_216 : f32 to vector<2x8x16xf32>
    %306 = arith.addf %305, %304 : vector<2x8x16xf32>
    %cst_217 = arith.constant 1.000000e+00 : f32
    %307 = vector.broadcast %cst_217 : f32 to vector<2x8x16xf32>
    %308 = arith.divf %307, %306 : vector<2x8x16xf32>
    %309 = arith.mulf %301, %308 : vector<2x8x16xf32>
    %c0_218 = arith.constant 0 : index
    %c0_219 = arith.constant 0 : index
    %310 = vector.load %arg26[%c0_218, %c0_219] : memref<1x16xf32, #tpu.memory_space<vmem>>, vector<1x16xf32>
    %311 = vector.shape_cast %310 : vector<1x16xf32> to vector<1x1x16xf32>
    %312 = vector.broadcast %311 : vector<1x1x16xf32> to vector<2x8x16xf32>
    %313 = arith.mulf %309, %312 : vector<2x8x16xf32>
    %cst_220 = arith.constant dense<0.000000e+00> : vector<2x8xf32>
    %314 = vector.multi_reduction <add>, %313, %cst_220 [2] : vector<2x8x16xf32> to vector<2x8xf32>
    %315 = vector.shape_cast %314 : vector<2x8xf32> to vector<2x8x1xf32>
    %c0_221 = arith.constant 0 : index
    %c0_222 = arith.constant 0 : index
    %316 = vector.load %arg27[%c0_221, %c0_222] : memref<1x1xf32, #tpu.memory_space<vmem>>, vector<1x1xf32>
    %317 = vector.shape_cast %316 : vector<1x1xf32> to vector<1x1x1xf32>
    %318 = vector.broadcast %317 : vector<1x1x1xf32> to vector<2x8x1xf32>
    %319 = arith.addf %315, %318 : vector<2x8x1xf32>
    %cst_223 = arith.constant 0.000000e+00 : f32
    %320 = vector.broadcast %cst_223 : f32 to vector<2x8x1xf32>
    %321 = arith.subf %320, %319 : vector<2x8x1xf32>
    %322 = math.exp %321 : vector<2x8x1xf32>
    %cst_224 = arith.constant 1.000000e+00 : f32
    %323 = vector.broadcast %cst_224 : f32 to vector<2x8x1xf32>
    %324 = arith.addf %323, %322 : vector<2x8x1xf32>
    %cst_225 = arith.constant 1.000000e+00 : f32
    %325 = vector.broadcast %cst_225 : f32 to vector<2x8x1xf32>
    %326 = arith.divf %325, %324 : vector<2x8x1xf32>
    %327 = vector.broadcast %326 : vector<2x8x1xf32> to vector<2x8x16xf32>
    %328 = arith.mulf %327, %140 : vector<2x8x16xf32>
    %cst_226 = arith.constant 1.000000e+00 : f32
    %329 = vector.broadcast %cst_226 : f32 to vector<2x8x1xf32>
    %330 = arith.subf %329, %326 : vector<2x8x1xf32>
    %331 = vector.broadcast %330 : vector<2x8x1xf32> to vector<2x8x16xf32>
    %332 = arith.mulf %331, %246 : vector<2x8x16xf32>
    %333 = arith.addf %328, %332 : vector<2x8x16xf32>
    %c0_227 = arith.constant 0 : index
    %c0_228 = arith.constant 0 : index
    %c0_229 = arith.constant 0 : index
    %334 = vector.load %arg5[%c0_227, %c0_228, %c0_229] : memref<2x1x16xf32, #tpu.memory_space<vmem>>, vector<2x1x16xf32>
    %335 = vector.broadcast %334 : vector<2x1x16xf32> to vector<2x8x16xf32>
    %336 = arith.mulf %335, %333 : vector<2x8x16xf32>
    %337 = arith.addf %0, %336 : vector<2x8x16xf32>
    %c0_230 = arith.constant 0 : index
    %c0_231 = arith.constant 0 : index
    %c0_232 = arith.constant 0 : index
    %338 = vector.load %arg28[%c0_230, %c0_231, %c0_232] : memref<2x8x16xf32, #tpu.memory_space<vmem>>, vector<2x8x16xf32>
    tpu.vector_store %arg28[%c0_230, %c0_231, %c0_232], %337 {strides = array<i32>} : memref<2x8x16xf32, #tpu.memory_space<vmem>>, vector<2x8x16xf32>,
    return
  }
  func.func @transform_0(%arg0: i32) -> (i32, i32, i32) {
    %c0_i32 = arith.constant 0 : i32
    %c0_i32_0 = arith.constant 0 : i32
    %c0_i32_1 = arith.constant 0 : i32
    return %arg0, %c0_i32, %c0_i32_0 : i32, i32, i32
  }
  func.func @transform_1(%arg0: i32) -> (i32, i32, i32) {
    %c0_i32 = arith.constant 0 : i32
    %c0_i32_0 = arith.constant 0 : i32
    %c0_i32_1 = arith.constant 0 : i32
    return %arg0, %c0_i32, %c0_i32_0 : i32, i32, i32
  }
  func.func @transform_2(%arg0: i32) -> (i32, i32, i32) {
    %c0_i32 = arith.constant 0 : i32
    %c0_i32_0 = arith.constant 0 : i32
    %c0_i32_1 = arith.constant 0 : i32
    return %arg0, %c0_i32, %c0_i32_0 : i32, i32, i32
  }
  func.func @transform_3(%arg0: i32) -> (i32, i32, i32) {
    %c0_i32 = arith.constant 0 : i32
    %c0_i32_0 = arith.constant 0 : i32
    %c0_i32_1 = arith.constant 0 : i32
    return %arg0, %c0_i32, %c0_i32_0 : i32, i32, i32
  }
  func.func @transform_4(%arg0: i32) -> (i32, i32, i32) {
    %c0_i32 = arith.constant 0 : i32
    %c0_i32_0 = arith.constant 0 : i32
    %c0_i32_1 = arith.constant 0 : i32
    return %arg0, %c0_i32, %c0_i32_0 : i32, i32, i32
  }
  func.func @transform_5(%arg0: i32) -> (i32, i32) {
    %c0_i32 = arith.constant 0 : i32
    %c0_i32_0 = arith.constant 0 : i32
    %c0_i32_1 = arith.constant 0 : i32
    return %c0_i32, %c0_i32_0 : i32, i32
  }
  func.func @transform_6(%arg0: i32) -> (i32, i32) {
    %c0_i32 = arith.constant 0 : i32
    %c0_i32_0 = arith.constant 0 : i32
    %c0_i32_1 = arith.constant 0 : i32
    return %c0_i32, %c0_i32_0 : i32, i32
  }
  func.func @transform_7(%arg0: i32) -> (i32, i32, i32) {
    %c0_i32 = arith.constant 0 : i32
    %c0_i32_0 = arith.constant 0 : i32
    %c0_i32_1 = arith.constant 0 : i32
    %c0_i32_2 = arith.constant 0 : i32
    return %c0_i32, %c0_i32_0, %c0_i32_1 : i32, i32, i32
  }
  func.func @transform_8(%arg0: i32) -> (i32, i32, i32) {
    %c0_i32 = arith.constant 0 : i32
    %c0_i32_0 = arith.constant 0 : i32
    %c0_i32_1 = arith.constant 0 : i32
    %c0_i32_2 = arith.constant 0 : i32
    return %c0_i32, %c0_i32_0, %c0_i32_1 : i32, i32, i32
  }
  func.func @transform_9(%arg0: i32) -> (i32, i32, i32) {
    %c0_i32 = arith.constant 0 : i32
    %c0_i32_0 = arith.constant 0 : i32
    %c0_i32_1 = arith.constant 0 : i32
    %c0_i32_2 = arith.constant 0 : i32
    return %c0_i32, %c0_i32_0, %c0_i32_1 : i32, i32, i32
  }
  func.func @transform_10(%arg0: i32) -> (i32, i32, i32) {
    %c0_i32 = arith.constant 0 : i32
    %c0_i32_0 = arith.constant 0 : i32
    %c0_i32_1 = arith.constant 0 : i32
    %c0_i32_2 = arith.constant 0 : i32
    return %c0_i32, %c0_i32_0, %c0_i32_1 : i32, i32, i32
  }
  func.func @transform_11(%arg0: i32) -> (i32, i32, i32) {
    %c0_i32 = arith.constant 0 : i32
    %c0_i32_0 = arith.constant 0 : i32
    %c0_i32_1 = arith.constant 0 : i32
    %c0_i32_2 = arith.constant 0 : i32
    return %c0_i32, %c0_i32_0, %c0_i32_1 : i32, i32, i32
  }
  func.func @transform_12(%arg0: i32) -> (i32, i32, i32) {
    %c0_i32 = arith.constant 0 : i32
    %c0_i32_0 = arith.constant 0 : i32
    %c0_i32_1 = arith.constant 0 : i32
    %c0_i32_2 = arith.constant 0 : i32
    return %c0_i32, %c0_i32_0, %c0_i32_1 : i32, i32, i32
  }
  func.func @transform_13(%arg0: i32) -> (i32, i32, i32) {
    %c0_i32 = arith.constant 0 : i32
    %c0_i32_0 = arith.constant 0 : i32
    %c0_i32_1 = arith.constant 0 : i32
    %c0_i32_2 = arith.constant 0 : i32
    return %c0_i32, %c0_i32_0, %c0_i32_1 : i32, i32, i32
  }
  func.func @transform_14(%arg0: i32) -> (i32, i32, i32) {
    %c0_i32 = arith.constant 0 : i32
    %c0_i32_0 = arith.constant 0 : i32
    %c0_i32_1 = arith.constant 0 : i32
    %c0_i32_2 = arith.constant 0 : i32
    return %c0_i32, %c0_i32_0, %c0_i32_1 : i32, i32, i32
  }
  func.func @transform_15(%arg0: i32) -> (i32, i32, i32) {
    %c0_i32 = arith.constant 0 : i32
    %c0_i32_0 = arith.constant 0 : i32
    %c0_i32_1 = arith.constant 0 : i32
    %c0_i32_2 = arith.constant 0 : i32
    return %c0_i32, %c0_i32_0, %c0_i32_1 : i32, i32, i32
  }
  func.func @transform_16(%arg0: i32) -> (i32, i32, i32) {
    %c0_i32 = arith.constant 0 : i32
    %c0_i32_0 = arith.constant 0 : i32
    %c0_i32_1 = arith.constant 0 : i32
    %c0_i32_2 = arith.constant 0 : i32
    return %c0_i32, %c0_i32_0, %c0_i32_1 : i32, i32, i32
  }
  func.func @transform_17(%arg0: i32) -> (i32, i32, i32) {
    %c0_i32 = arith.constant 0 : i32
    %c0_i32_0 = arith.constant 0 : i32
    %c0_i32_1 = arith.constant 0 : i32
    %c0_i32_2 = arith.constant 0 : i32
    return %c0_i32, %c0_i32_0, %c0_i32_1 : i32, i32, i32
  }
  func.func @transform_18(%arg0: i32) -> (i32, i32) {
    %c0_i32 = arith.constant 0 : i32
    %c0_i32_0 = arith.constant 0 : i32
    %c0_i32_1 = arith.constant 0 : i32
    return %c0_i32, %c0_i32_0 : i32, i32
  }
  func.func @transform_19(%arg0: i32) -> (i32, i32) {
    %c0_i32 = arith.constant 0 : i32
    %c0_i32_0 = arith.constant 0 : i32
    %c0_i32_1 = arith.constant 0 : i32
    return %c0_i32, %c0_i32_0 : i32, i32
  }
  func.func @transform_20(%arg0: i32) -> (i32, i32) {
    %c0_i32 = arith.constant 0 : i32
    %c0_i32_0 = arith.constant 0 : i32
    %c0_i32_1 = arith.constant 0 : i32
    return %c0_i32, %c0_i32_0 : i32, i32
  }
  func.func @transform_21(%arg0: i32) -> (i32, i32) {
    %c0_i32 = arith.constant 0 : i32
    %c0_i32_0 = arith.constant 0 : i32
    %c0_i32_1 = arith.constant 0 : i32
    return %c0_i32, %c0_i32_0 : i32, i32
  }
  func.func @transform_22(%arg0: i32) -> (i32, i32) {
    %c0_i32 = arith.constant 0 : i32
    %c0_i32_0 = arith.constant 0 : i32
    %c0_i32_1 = arith.constant 0 : i32
    return %c0_i32, %c0_i32_0 : i32, i32
  }
  func.func @transform_23(%arg0: i32) -> (i32, i32) {
    %c0_i32 = arith.constant 0 : i32
    %c0_i32_0 = arith.constant 0 : i32
    %c0_i32_1 = arith.constant 0 : i32
    return %c0_i32, %c0_i32_0 : i32, i32
  }
  func.func @transform_24(%arg0: i32) -> (i32, i32) {
    %c0_i32 = arith.constant 0 : i32
    %c0_i32_0 = arith.constant 0 : i32
    %c0_i32_1 = arith.constant 0 : i32
    return %c0_i32, %c0_i32_0 : i32, i32
  }
  func.func @transform_25(%arg0: i32) -> (i32, i32) {
    %c0_i32 = arith.constant 0 : i32
    %c0_i32_0 = arith.constant 0 : i32
    %c0_i32_1 = arith.constant 0 : i32
    return %c0_i32, %c0_i32_0 : i32, i32
  }
  func.func @transform_26(%arg0: i32) -> (i32, i32) {
    %c0_i32 = arith.constant 0 : i32
    %c0_i32_0 = arith.constant 0 : i32
    %c0_i32_1 = arith.constant 0 : i32
    return %c0_i32, %c0_i32_0 : i32, i32
  }
  func.func @transform_27(%arg0: i32) -> (i32, i32, i32) {
    %c0_i32 = arith.constant 0 : i32
    %c0_i32_0 = arith.constant 0 : i32
    %c0_i32_1 = arith.constant 0 : i32
    return %arg0, %c0_i32, %c0_i32_0 : i32, i32, i32
  }
}

</mosaic_0001>

<llo_original>
// kernel: tpu_custom_call.1
$region0: #{tpu_custom_call.1}
  #allocation0 [shape = 'u32[]', space=smem, size = 0x4, offset = 0x4, fixed_abs, tag = 'smem constant byte address 0x4 - core index']
  #allocation1 [shape = 'u32[144,128]{1,0:T(1,128)}', space=vmem, size = 0x12000, scoped, tag = 'internal scratch']
  #allocation2 [shape = 'f32[2,8,32]{2,1,0:T(8,128)}', space=vmem, size = 0x2000, scoped, tag = 'scratch operand']
  #allocation3 [shape = 'f32[2,8,32]{2,1,0:T(8,128)}', space=vmem, size = 0x2000, scoped, tag = 'scratch operand']
  #allocation4 [shape = 'f32[2,8,8]{2,1,0:T(8,128)}', space=vmem, size = 0x2000, scoped, tag = 'scratch operand']
  #allocation5 [shape = 'f32[2,8,8]{2,1,0:T(8,128)}', space=vmem, size = 0x2000, scoped, tag = 'scratch operand']
  #allocation6 [shape = 'f32[2,8,32]{2,1,0:T(8,128)}', space=vmem, size = 0x2000, scoped, tag = 'scratch operand']
  #allocation7 [shape = 'f32[2,8,32]{2,1,0:T(8,128)}', space=vmem, size = 0x2000, scoped, tag = 'scratch operand']
  #allocation8 [shape = 'f32[2,11,32]{2,1,0:T(8,128)}', space=vmem, size = 0x4000, scoped, tag = 'scratch operand']
  #allocation9 [shape = 'f32[1,1]{1,0:T(1,128)S(1)}', space=vmem, size = 0x200, scoped, tag = 'scoped memory for tpu_custom_call.1']
  %s0 = inlined_call_operand.vmem [shape: f32[4,8,16], index: 0, kind: input, shape index: {}]
  %s1 = inlined_call_operand.vmem [shape: f32[4,8,16], index: 1, kind: input, shape index: {}]
  %s2 = inlined_call_operand.hbm [shape: f32[4,1,16], index: 2, kind: input, shape index: {}]
  %s3 = inlined_call_operand.hbm [shape: f32[4,1,16], index: 3, kind: input, shape index: {}]
  %s4 = inlined_call_operand.hbm [shape: f32[4,1,16], index: 4, kind: input, shape index: {}]
  %s5 = inlined_call_operand.vmem [shape: f32[1,16], index: 5, kind: input, shape index: {}]
  %s6 = inlined_call_operand.hbm [shape: f32[1,16], index: 6, kind: input, shape index: {}]
  %s7 = inlined_call_operand.vmem [shape: f32[2,16,32], index: 7, kind: input, shape index: {}]
  %s8 = inlined_call_operand.vmem [shape: f32[2,16,32], index: 8, kind: input, shape index: {}]
  %s9 = inlined_call_operand.hbm [shape: f32[2,4,32], index: 9, kind: input, shape index: {}]
  %s10 = inlined_call_operand.hbm [shape: f32[2,1,32], index: 10, kind: input, shape index: {}]
  %s11 = inlined_call_operand.vmem [shape: f32[2,32,32], index: 11, kind: input, shape index: {}]
  %s12 = inlined_call_operand.hbm [shape: f32[2,1,32], index: 12, kind: input, shape index: {}]
  %s13 = inlined_call_operand.vmem [shape: f32[2,32,8], index: 13, kind: input, shape index: {}]
  %s14 = inlined_call_operand.vmem [shape: f32[2,32,8], index: 14, kind: input, shape index: {}]
  %s15 = inlined_call_operand.vmem [shape: f32[2,8,32], index: 15, kind: input, shape index: {}]
  %s16 = inlined_call_operand.vmem [shape: f32[2,1,32], index: 16, kind: input, shape index: {}]
  %s17 = inlined_call_operand.vmem [shape: f32[2,32,16], index: 17, kind: input, shape index: {}]
  %s18 = inlined_call_operand.vmem [shape: f32[1,16], index: 18, kind: input, shape index: {}]
  %s19 = inlined_call_operand.vmem [shape: f32[1,16], index: 19, kind: input, shape index: {}]
  %s20 = inlined_call_operand.vmem [shape: f32[1,16], index: 20, kind: input, shape index: {}]
  %s21 = inlined_call_operand.vmem [shape: f32[1,16], index: 21, kind: input, shape index: {}]
  %s22 = inlined_call_operand.vmem [shape: f32[16,16], index: 22, kind: input, shape index: {}]
  %s23 = inlined_call_operand.vmem [shape: f32[16,16], index: 23, kind: input, shape index: {}]
  %s24 = inlined_call_operand.vmem [shape: f32[1,16], index: 24, kind: input, shape index: {}]
  %s25 = inlined_call_operand.vmem [shape: f32[1,16], index: 25, kind: input, shape index: {}]
  %s26 = inlined_call_operand.<no memory space> [shape: f32[1,1], index: 26, kind: input, shape index: {}]
  %s27 = inlined_call_operand.hbm [shape: f32[4,8,16], index: 27, kind: output, shape index: {}]
  %s28 = sld [smem:[#allocation0]]
  $region183: #{tpu_custom_call.1} parent=0
    _
  %s30 = ssub.s32 1, %s28
  %s31 = scalar_select 0, %s30, %s28
  %v32 = vstv %s26
  %33 = vst [vmem:[#allocation9] sm:$0x1] %v32
  $region1: #{tpu_custom_call.1} parent=0
    #allocation10 [shape = 'u8[2048]{0}', space=vmem, size = 0x800, scoped, tag = 'input window, operand 2']
    #allocation11 [shape = 's32[2]{0}', space=sflag, size = 0x8, scoped, tag = 'scoped memory for tpu_custom_call.1']
    #allocation12 [shape = 's32[2]{0}', space=sflag, size = 0x8, scoped, tag = 'scoped memory for tpu_custom_call.1']
    #allocation13 [shape = 'u8[2048]{0}', space=vmem, size = 0x800, scoped, tag = 'input window, operand 3']
    #allocation14 [shape = 's32[2]{0}', space=sflag, size = 0x8, scoped, tag = 'scoped memory for tpu_custom_call.1']
    #allocation15 [shape = 'u8[2048]{0}', space=vmem, size = 0x800, scoped, tag = 'input window, operand 4']
    #allocation16 [shape = 'u8[512]{0}', space=vmem, size = 0x400, scoped, tag = 'input window, operand 6, single buffered']
    #allocation17 [shape = 's32[1]{0}', space=sflag, size = 0x4, scoped, tag = 'scoped memory for tpu_custom_call.1']
    #allocation18 [shape = 'u8[4096]{0}', space=vmem, size = 0x1000, scoped, tag = 'input window, operand 9, single buffered']
    #allocation19 [shape = 'u8[1024]{0}', space=vmem, size = 0x400, scoped, tag = 'input window, operand 10, single buffered']
    #allocation20 [shape = 's32[1]{0}', space=sflag, size = 0x4, scoped, tag = 'scoped memory for tpu_custom_call.1']
    #allocation21 [shape = 'u8[1024]{0}', space=vmem, size = 0x400, scoped, tag = 'input window, operand 12, single buffered']
    #allocation22 [shape = 'u8[16384]{0}', space=vmem, size = 0x4000, scoped, tag = 'output window, operand 0']
    %34 = vsyncpa [#allocation11], 0
    %s35 = scalar_lea.sflag [#allocation11], 1
    %36 = vsyncpa %s35, 0
    %37 = vsyncpa [#allocation14], 0
    %s38 = scalar_lea.sflag [#allocation14], 1
    %39 = vsyncpa %s38, 0
    %40 = vsyncpa [#allocation17], 0
    %41 = vsyncpa [#allocation20], 0
    %42 = vsyncpa [#allocation12], 0
    %s43 = scalar_lea.sflag [#allocation12], 1
    %44 = vsyncpa %s43, 0
    loop: start=0, step=1, limit=4
    $region2: #{tpu_custom_call.1} parent=1 // loop_pre_header
      _
    $region3: #{tpu_custom_call.1} parent=1 // loop_header
      %s46 = sphi 0, %s50
      %p47 = scmp.ge.s32.totalorder %s46, 4
      %s56 = sphi 0, %s58
      %s59 = sphi 0, %s56
      %s60 = sphi 0, %s59
      %s76 = sphi 0, %s60
      %s82 = sphi 0, %s84
      %s85 = sphi 0, %s82
      %s86 = sphi 0, %s85
      %s102 = sphi 0, %s86
      %s108 = sphi 0, %s110
      %s111 = sphi 0, %s108
      %s112 = sphi 0, %s111
      %s128 = sphi 0, %s112
      %s134 = sphi 0, %s136
      %s137 = sphi 0, %s134
      %s138 = sphi 0, %s137
      %s154 = sphi 0, %s138
      %s160 = sphi 0, %s162
      %s163 = sphi 0, %s160
      %s164 = sphi 0, %s163
      %s180 = sphi 0, %s164
      %s184 = sphi 0, %s184
      %s186 = sphi 0, %s184
      %s187 = sphi 0, %s186
      %s201 = sphi 0, %s187
      %s205 = sphi 0, %s205
      %s207 = sphi 0, %s205
      %s208 = sphi 0, %s207
      %s222 = sphi 0, %s208
      %s226 = sphi 0, %s226
      %s228 = sphi 0, %s226
      %s229 = sphi 0, %s228
      %s243 = sphi 0, %s229
      %s247 = sphi 0, %s247
      %s249 = sphi 0, %s247
      %s250 = sphi 0, %s249
      %s264 = sphi 0, %s250
      %s268 = sphi 0, %s268
      %s270 = sphi 0, %s268
      %s271 = sphi 0, %s270
      %s285 = sphi 0, %s271
      %s289 = sphi 0, %s289
      %s291 = sphi 0, %s289
      %s292 = sphi 0, %s291
      %s306 = sphi 0, %s292
      %s310 = sphi 0, %s310
      %s312 = sphi 0, %s310
      %s313 = sphi 0, %s312
      %s327 = sphi 0, %s313
      %s331 = sphi 0, %s331
      %s333 = sphi 0, %s331
      %s334 = sphi 0, %s333
      %s348 = sphi 0, %s334
      %s352 = sphi 0, %s352
      %s354 = sphi 0, %s352
      %s355 = sphi 0, %s354
      %s369 = sphi 0, %s355
      %s373 = sphi 0, %s373
      %s375 = sphi 0, %s373
      %s376 = sphi 0, %s375
      %s390 = sphi 0, %s376
      %s394 = sphi 0, %s394
      %s396 = sphi 0, %s394
      %s397 = sphi 0, %s396
      %s411 = sphi 0, %s397
      %s415 = sphi 0, %s415
      %s417 = sphi 0, %s415
      %s418 = sphi 0, %s417
      %s432 = sphi 0, %s418
      %s436 = sphi 0, %s436
      %s438 = sphi 0, %s436
      %s439 = sphi 0, %s438
      %s453 = sphi 0, %s439
      %s457 = sphi 0, %s457
      %s459 = sphi 0, %s457
      %s460 = sphi 0, %s459
      %s474 = sphi 0, %s460
      %s478 = sphi 0, %s478
      %s480 = sphi 0, %s478
      %s481 = sphi 0, %s480
      %s495 = sphi 0, %s481
      %s499 = sphi 0, %s499
      %s501 = sphi 0, %s499
      %s502 = sphi 0, %s501
      %s516 = sphi 0, %s502
      %s520 = sphi 0, %s520
      %s522 = sphi 0, %s520
      %s523 = sphi 0, %s522
      %s537 = sphi 0, %s523
      %s541 = sphi 0, %s541
      %s543 = sphi 0, %s541
      %s544 = sphi 0, %s543
      %s558 = sphi 0, %s544
      %s562 = sphi 0, %s562
      %s564 = sphi 0, %s562
      %s565 = sphi 0, %s564
      %s579 = sphi 0, %s565
      %s583 = sphi 0, %s583
      %s585 = sphi 0, %s583
      %s586 = sphi 0, %s585
      %s600 = sphi 0, %s586
      %s604 = sphi 0, %s604
      %s606 = sphi 0, %s604
      %s607 = sphi 0, %s606
      %s621 = sphi 0, %s607
      %s625 = sphi 0, %s625
      %s627 = sphi 0, %s625
      %s628 = sphi 0, %s627
      %s642 = sphi 0, %s628
      %s648 = sphi 0, %s650
      %s651 = sphi 0, %s648
      %s652 = sphi 0, %s651
      %s668 = sphi 0, %s652
    $region4: #{tpu_custom_call.1} parent=1 // loop_header_branch
      %49 = sbr.rel (%p47) target = $region8
    $region5: #{tpu_custom_call.1} parent=1 // loop_body
      %s51 = ssub.s32 %s46, 1
      %s52 = ssub.s32 %s46, 2
      %s53 = sadd.s32 %s46, 1
      %s54 = ssub.s32 %s46, %s53
      %p55 = scmp.eq.s32.totalorder %s54, 0
      %s57 = sadd.s32 %s56, 1
      %s58 = scalar_select %p55, %s56, %s57
      %p61 = pneg %p55
      %p62 = scmp.eq.s32.totalorder %s46, 1
      %p63 = por %p61, %p62
      %p64 = scmp.ne.s32.totalorder %s56, %s59
      %p65 = scmp.eq.s32.totalorder %s46, 0
      %p66 = por %p64, %p65
      %p67 = scmp.ne.s32.totalorder %s56, %s59
      %p68 = scmp.eq.s32.totalorder %s51, 1
      %p69 = por %p67, %p68
      %p70 = scmp.ne.s32.totalorder %s59, %s60
      %p71 = scmp.eq.s32.totalorder %s51, 0
      %p72 = por %p70, %p71
      %p73 = scmp.ne.s32.totalorder %s59, %s60
      %p74 = scmp.eq.s32.totalorder %s52, 1
      %p75 = por %p73, %p74
      %p77 = scmp.ne.s32.totalorder %s60, %s76
      %p78 = scmp.eq.s32.totalorder %s52, 0
      %p79 = por %p77, %p78
      %s80 = ssub.s32 %s46, %s53
      %p81 = scmp.eq.s32.totalorder %s80, 0
      %s83 = sadd.s32 %s82, 1
      %s84 = scalar_select %p81, %s82, %s83
      %p87 = pneg %p81
      %p88 = scmp.eq.s32.totalorder %s46, 1
      %p89 = por %p87, %p88
      %p90 = scmp.ne.s32.totalorder %s82, %s85
      %p91 = scmp.eq.s32.totalorder %s46, 0
      %p92 = por %p90, %p91
      %p93 = scmp.ne.s32.totalorder %s82, %s85
      %p94 = scmp.eq.s32.totalorder %s51, 1
      %p95 = por %p93, %p94
      %p96 = scmp.ne.s32.totalorder %s85, %s86
      %p97 = scmp.eq.s32.totalorder %s51, 0
      %p98 = por %p96, %p97
      %p99 = scmp.ne.s32.totalorder %s85, %s86
      %p100 = scmp.eq.s32.totalorder %s52, 1
      %p101 = por %p99, %p100
      %p103 = scmp.ne.s32.totalorder %s86, %s102
      %p104 = scmp.eq.s32.totalorder %s52, 0
      %p105 = por %p103, %p104
      %s106 = ssub.s32 %s46, %s53
      %p107 = scmp.eq.s32.totalorder %s106, 0
      %s109 = sadd.s32 %s108, 1
      %s110 = scalar_select %p107, %s108, %s109
      %p113 = pneg %p107
      %p114 = scmp.eq.s32.totalorder %s46, 1
      %p115 = por %p113, %p114
      %p116 = scmp.ne.s32.totalorder %s108, %s111
      %p117 = scmp.eq.s32.totalorder %s46, 0
      %p118 = por %p116, %p117
      %p119 = scmp.ne.s32.totalorder %s108, %s111
      %p120 = scmp.eq.s32.totalorder %s51, 1
      %p121 = por %p119, %p120
      %p122 = scmp.ne.s32.totalorder %s111, %s112
      %p123 = scmp.eq.s32.totalorder %s51, 0
      %p124 = por %p122, %p123
      %p125 = scmp.ne.s32.totalorder %s111, %s112
      %p126 = scmp.eq.s32.totalorder %s52, 1
      %p127 = por %p125, %p126
      %p129 = scmp.ne.s32.totalorder %s112, %s128
      %p130 = scmp.eq.s32.totalorder %s52, 0
      %p131 = por %p129, %p130
      %s132 = ssub.s32 %s46, %s53
      %p133 = scmp.eq.s32.totalorder %s132, 0
      %s135 = sadd.s32 %s134, 1
      %s136 = scalar_select %p133, %s134, %s135
      %p139 = pneg %p133
      %p140 = scmp.eq.s32.totalorder %s46, 1
      %p141 = por %p139, %p140
      %p142 = scmp.ne.s32.totalorder %s134, %s137
      %p143 = scmp.eq.s32.totalorder %s46, 0
      %p144 = por %p142, %p143
      %p145 = scmp.ne.s32.totalorder %s134, %s137
      %p146 = scmp.eq.s32.totalorder %s51, 1
      %p147 = por %p145, %p146
      %p148 = scmp.ne.s32.totalorder %s137, %s138
      %p149 = scmp.eq.s32.totalorder %s51, 0
      %p150 = por %p148, %p149
      %p151 = scmp.ne.s32.totalorder %s137, %s138
      %p152 = scmp.eq.s32.totalorder %s52, 1
      %p153 = por %p151, %p152
      %p155 = scmp.ne.s32.totalorder %s138, %s154
      %p156 = scmp.eq.s32.totalorder %s52, 0
      %p157 = por %p155, %p156
      %s158 = ssub.s32 %s46, %s53
      %p159 = scmp.eq.s32.totalorder %s158, 0
      %s161 = sadd.s32 %s160, 1
      %s162 = scalar_select %p159, %s160, %s161
      %p165 = pneg %p159
      %p166 = scmp.eq.s32.totalorder %s46, 1
      %p167 = por %p165, %p166
      %p168 = scmp.ne.s32.totalorder %s160, %s163
      %p169 = scmp.eq.s32.totalorder %s46, 0
      %p170 = por %p168, %p169
      %p171 = scmp.ne.s32.totalorder %s160, %s163
      %p172 = scmp.eq.s32.totalorder %s51, 1
      %p173 = por %p171, %p172
      %p174 = scmp.ne.s32.totalorder %s163, %s164
      %p175 = scmp.eq.s32.totalorder %s51, 0
      %p176 = por %p174, %p175
      %p177 = scmp.ne.s32.totalorder %s163, %s164
      %p178 = scmp.eq.s32.totalorder %s52, 1
      %p179 = por %p177, %p178
      %p181 = scmp.ne.s32.totalorder %s164, %s180
      %p182 = scmp.eq.s32.totalorder %s52, 0
      %p183 = por %p181, %p182
      %s185 = sadd.s32 %s184, 1
      %p188 = scmp.eq.s32.totalorder %s46, 1
      %p189 = scmp.ne.s32.totalorder %s184, %s186
      %p190 = scmp.eq.s32.totalorder %s46, 0
      %p191 = por %p189, %p190
      %p192 = scmp.ne.s32.totalorder %s184, %s186
      %p193 = scmp.eq.s32.totalorder %s51, 1
      %p194 = por %p192, %p193
      %p195 = scmp.ne.s32.totalorder %s186, %s187
      %p196 = scmp.eq.s32.totalorder %s51, 0
      %p197 = por %p195, %p196
      %p198 = scmp.ne.s32.totalorder %s186, %s187
      %p199 = scmp.eq.s32.totalorder %s52, 1
      %p200 = por %p198, %p199
      %p202 = scmp.ne.s32.totalorder %s187, %s201
      %p203 = scmp.eq.s32.totalorder %s52, 0
      %p204 = por %p202, %p203
      %s206 = sadd.s32 %s205, 1
      %p209 = scmp.eq.s32.totalorder %s46, 1
      %p210 = scmp.ne.s32.totalorder %s205, %s207
      %p211 = scmp.eq.s32.totalorder %s46, 0
      %p212 = por %p210, %p211
      %p213 = scmp.ne.s32.totalorder %s205, %s207
      %p214 = scmp.eq.s32.totalorder %s51, 1
      %p215 = por %p213, %p214
      %p216 = scmp.ne.s32.totalorder %s207, %s208
      %p217 = scmp.eq.s32.totalorder %s51, 0
      %p218 = por %p216, %p217
      %p219 = scmp.ne.s32.totalorder %s207, %s208
      %p220 = scmp.eq.s32.totalorder %s52, 1
      %p221 = por %p219, %p220
      %p223 = scmp.ne.s32.totalorder %s208, %s222
      %p224 = scmp.eq.s32.totalorder %s52, 0
      %p225 = por %p223, %p224
      %s227 = sadd.s32 %s226, 1
      %p230 = scmp.eq.s32.totalorder %s46, 1
      %p231 = scmp.ne.s32.totalorder %s226, %s228
      %p232 = scmp.eq.s32.totalorder %s46, 0
      %p233 = por %p231, %p232
      %p234 = scmp.ne.s32.totalorder %s226, %s228
      %p235 = scmp.eq.s32.totalorder %s51, 1
      %p236 = por %p234, %p235
      %p237 = scmp.ne.s32.totalorder %s228, %s229
      %p238 = scmp.eq.s32.totalorder %s51, 0
      %p239 = por %p237, %p238
      %p240 = scmp.ne.s32.totalorder %s228, %s229
      %p241 = scmp.eq.s32.totalorder %s52, 1
      %p242 = por %p240, %p241
      %p244 = scmp.ne.s32.totalorder %s229, %s243
      %p245 = scmp.eq.s32.totalorder %s52, 0
      %p246 = por %p244, %p245
      %s248 = sadd.s32 %s247, 1
      %p251 = scmp.eq.s32.totalorder %s46, 1
      %p252 = scmp.ne.s32.totalorder %s247, %s249
      %p253 = scmp.eq.s32.totalorder %s46, 0
      %p254 = por %p252, %p253
      %p255 = scmp.ne.s32.totalorder %s247, %s249
      %p256 = scmp.eq.s32.totalorder %s51, 1
      %p257 = por %p255, %p256
      %p258 = scmp.ne.s32.totalorder %s249, %s250
      %p259 = scmp.eq.s32.totalorder %s51, 0
      %p260 = por %p258, %p259
      %p261 = scmp.ne.s32.totalorder %s249, %s250
      %p262 = scmp.eq.s32.totalorder %s52, 1
      %p263 = por %p261, %p262
      %p265 = scmp.ne.s32.totalorder %s250, %s264
      %p266 = scmp.eq.s32.totalorder %s52, 0
      %p267 = por %p265, %p266
      %s269 = sadd.s32 %s268, 1
      %p272 = scmp.eq.s32.totalorder %s46, 1
      %p273 = scmp.ne.s32.totalorder %s268, %s270
      %p274 = scmp.eq.s32.totalorder %s46, 0
      %p275 = por %p273, %p274
      %p276 = scmp.ne.s32.totalorder %s268, %s270
      %p277 = scmp.eq.s32.totalorder %s51, 1
      %p278 = por %p276, %p277
      %p279 = scmp.ne.s32.totalorder %s270, %s271
      %p280 = scmp.eq.s32.totalorder %s51, 0
      %p281 = por %p279, %p280
      %p282 = scmp.ne.s32.totalorder %s270, %s271
      %p283 = scmp.eq.s32.totalorder %s52, 1
      %p284 = por %p282, %p283
      %p286 = scmp.ne.s32.totalorder %s271, %s285
      %p287 = scmp.eq.s32.totalorder %s52, 0
      %p288 = por %p286, %p287
      %s290 = sadd.s32 %s289, 1
      %p293 = scmp.eq.s32.totalorder %s46, 1
      %p294 = scmp.ne.s32.totalorder %s289, %s291
      %p295 = scmp.eq.s32.totalorder %s46, 0
      %p296 = por %p294, %p295
      %p297 = scmp.ne.s32.totalorder %s289, %s291
      %p298 = scmp.eq.s32.totalorder %s51, 1
      %p299 = por %p297, %p298
      %p300 = scmp.ne.s32.totalorder %s291, %s292
      %p301 = scmp.eq.s32.totalorder %s51, 0
      %p302 = por %p300, %p301
      %p303 = scmp.ne.s32.totalorder %s291, %s292
      %p304 = scmp.eq.s32.totalorder %s52, 1
      %p305 = por %p303, %p304
      %p307 = scmp.ne.s32.totalorder %s292, %s306
      %p308 = scmp.eq.s32.totalorder %s52, 0
      %p309 = por %p307, %p308
      %s311 = sadd.s32 %s310, 1
      %p314 = scmp.eq.s32.totalorder %s46, 1
      %p315 = scmp.ne.s32.totalorder %s310, %s312
      %p316 = scmp.eq.s32.totalorder %s46, 0
      %p317 = por %p315, %p316
      %p318 = scmp.ne.s32.totalorder %s310, %s312
      %p319 = scmp.eq.s32.totalorder %s51, 1
      %p320 = por %p318, %p319
      %p321 = scmp.ne.s32.totalorder %s312, %s313
      %p322 = scmp.eq.s32.totalorder %s51, 0
      %p323 = por %p321, %p322
      %p324 = scmp.ne.s32.totalorder %s312, %s313
      %p325 = scmp.eq.s32.totalorder %s52, 1
      %p326 = por %p324, %p325
      %p328 = scmp.ne.s32.totalorder %s313, %s327
      %p329 = scmp.eq.s32.totalorder %s52, 0
      %p330 = por %p328, %p329
      %s332 = sadd.s32 %s331, 1
      %p335 = scmp.eq.s32.totalorder %s46, 1
      %p336 = scmp.ne.s32.totalorder %s331, %s333
      %p337 = scmp.eq.s32.totalorder %s46, 0
      %p338 = por %p336, %p337
      %p339 = scmp.ne.s32.totalorder %s331, %s333
      %p340 = scmp.eq.s32.totalorder %s51, 1
      %p341 = por %p339, %p340
      %p342 = scmp.ne.s32.totalorder %s333, %s334
      %p343 = scmp.eq.s32.totalorder %s51, 0
      %p344 = por %p342, %p343
      %p345 = scmp.ne.s32.totalorder %s333, %s334
      %p346 = scmp.eq.s32.totalorder %s52, 1
      %p347 = por %p345, %p346
      %p349 = scmp.ne.s32.totalorder %s334, %s348
      %p350 = scmp.eq.s32.totalorder %s52, 0
      %p351 = por %p349, %p350
      %s353 = sadd.s32 %s352, 1
      %p356 = scmp.eq.s32.totalorder %s46, 1
      %p357 = scmp.ne.s32.totalorder %s352, %s354
      %p358 = scmp.eq.s32.totalorder %s46, 0
      %p359 = por %p357, %p358
      %p360 = scmp.ne.s32.totalorder %s352, %s354
      %p361 = scmp.eq.s32.totalorder %s51, 1
      %p362 = por %p360, %p361
      %p363 = scmp.ne.s32.totalorder %s354, %s355
      %p364 = scmp.eq.s32.totalorder %s51, 0
      %p365 = por %p363, %p364
      %p366 = scmp.ne.s32.totalorder %s354, %s355
      %p367 = scmp.eq.s32.totalorder %s52, 1
      %p368 = por %p366, %p367
      %p370 = scmp.ne.s32.totalorder %s355, %s369
      %p371 = scmp.eq.s32.totalorder %s52, 0
      %p372 = por %p370, %p371
      %s374 = sadd.s32 %s373, 1
      %p377 = scmp.eq.s32.totalorder %s46, 1
      %p378 = scmp.ne.s32.totalorder %s373, %s375
      %p379 = scmp.eq.s32.totalorder %s46, 0
      %p380 = por %p378, %p379
      %p381 = scmp.ne.s32.totalorder %s373, %s375
      %p382 = scmp.eq.s32.totalorder %s51, 1
      %p383 = por %p381, %p382
      %p384 = scmp.ne.s32.totalorder %s375, %s376
      %p385 = scmp.eq.s32.totalorder %s51, 0
      %p386 = por %p384, %p385
      %p387 = scmp.ne.s32.totalorder %s375, %s376
      %p388 = scmp.eq.s32.totalorder %s52, 1
      %p389 = por %p387, %p388
      %p391 = scmp.ne.s32.totalorder %s376, %s390
      %p392 = scmp.eq.s32.totalorder %s52, 0
      %p393 = por %p391, %p392
      %s395 = sadd.s32 %s394, 1
      %p398 = scmp.eq.s32.totalorder %s46, 1
      %p399 = scmp.ne.s32.totalorder %s394, %s396
      %p400 = scmp.eq.s32.totalorder %s46, 0
      %p401 = por %p399, %p400
      %p402 = scmp.ne.s32.totalorder %s394, %s396
      %p403 = scmp.eq.s32.totalorder %s51, 1
      %p404 = por %p402, %p403
      %p405 = scmp.ne.s32.totalorder %s396, %s397
      %p406 = scmp.eq.s32.totalorder %s51, 0
      %p407 = por %p405, %p406
      %p408 = scmp.ne.s32.totalorder %s396, %s397
      %p409 = scmp.eq.s32.totalorder %s52, 1
      %p410 = por %p408, %p409
      %p412 = scmp.ne.s32.totalorder %s397, %s411
      %p413 = scmp.eq.s32.totalorder %s52, 0
      %p414 = por %p412, %p413
      %s416 = sadd.s32 %s415, 1
      %p419 = scmp.eq.s32.totalorder %s46, 1
      %p420 = scmp.ne.s32.totalorder %s415, %s417
      %p421 = scmp.eq.s32.totalorder %s46, 0
      %p422 = por %p420, %p421
      %p423 = scmp.ne.s32.totalorder %s415, %s417
      %p424 = scmp.eq.s32.totalorder %s51, 1
      %p425 = por %p423, %p424
      %p426 = scmp.ne.s32.totalorder %s417, %s418
      %p427 = scmp.eq.s32.totalorder %s51, 0
      %p428 = por %p426, %p427
      %p429 = scmp.ne.s32.totalorder %s417, %s418
      %p430 = scmp.eq.s32.totalorder %s52, 1
      %p431 = por %p429, %p430
      %p433 = scmp.ne.s32.totalorder %s418, %s432
      %p434 = scmp.eq.s32.totalorder %s52, 0
      %p435 = por %p433, %p434
      %s437 = sadd.s32 %s436, 1
      %p440 = scmp.eq.s32.totalorder %s46, 1
      %p441 = scmp.ne.s32.totalorder %s436, %s438
      %p442 = scmp.eq.s32.totalorder %s46, 0
      %p443 = por %p441, %p442
      %p444 = scmp.ne.s32.totalorder %s436, %s438
      %p445 = scmp.eq.s32.totalorder %s51, 1
      %p446 = por %p444, %p445
      %p447 = scmp.ne.s32.totalorder %s438, %s439
      %p448 = scmp.eq.s32.totalorder %s51, 0
      %p449 = por %p447, %p448
      %p450 = scmp.ne.s32.totalorder %s438, %s439
      %p451 = scmp.eq.s32.totalorder %s52, 1
      %p452 = por %p450, %p451
      %p454 = scmp.ne.s32.totalorder %s439, %s453
      %p455 = scmp.eq.s32.totalorder %s52, 0
      %p456 = por %p454, %p455
      %s458 = sadd.s32 %s457, 1
      %p461 = scmp.eq.s32.totalorder %s46, 1
      %p462 = scmp.ne.s32.totalorder %s457, %s459
      %p463 = scmp.eq.s32.totalorder %s46, 0
      %p464 = por %p462, %p463
      %p465 = scmp.ne.s32.totalorder %s457, %s459
      %p466 = scmp.eq.s32.totalorder %s51, 1
      %p467 = por %p465, %p466
      %p468 = scmp.ne.s32.totalorder %s459, %s460
      %p469 = scmp.eq.s32.totalorder %s51, 0
      %p470 = por %p468, %p469
      %p471 = scmp.ne.s32.totalorder %s459, %s460
      %p472 = scmp.eq.s32.totalorder %s52, 1
      %p473 = por %p471, %p472
      %p475 = scmp.ne.s32.totalorder %s460, %s474
      %p476 = scmp.eq.s32.totalorder %s52, 0
      %p477 = por %p475, %p476
      %s479 = sadd.s32 %s478, 1
      %p482 = scmp.eq.s32.totalorder %s46, 1
      %p483 = scmp.ne.s32.totalorder %s478, %s480
      %p484 = scmp.eq.s32.totalorder %s46, 0
      %p485 = por %p483, %p484
      %p486 = scmp.ne.s32.totalorder %s478, %s480
      %p487 = scmp.eq.s32.totalorder %s51, 1
      %p488 = por %p486, %p487
      %p489 = scmp.ne.s32.totalorder %s480, %s481
      %p490 = scmp.eq.s32.totalorder %s51, 0
      %p491 = por %p489, %p490
      %p492 = scmp.ne.s32.totalorder %s480, %s481
      %p493 = scmp.eq.s32.totalorder %s52, 1
      %p494 = por %p492, %p493
      %p496 = scmp.ne.s32.totalorder %s481, %s495
      %p497 = scmp.eq.s32.totalorder %s52, 0
      %p498 = por %p496, %p497
      %s500 = sadd.s32 %s499, 1
      %p503 = scmp.eq.s32.totalorder %s46, 1
      %p504 = scmp.ne.s32.totalorder %s499, %s501
      %p505 = scmp.eq.s32.totalorder %s46, 0
      %p506 = por %p504, %p505
      %p507 = scmp.ne.s32.totalorder %s499, %s501
      %p508 = scmp.eq.s32.totalorder %s51, 1
      %p509 = por %p507, %p508
      %p510 = scmp.ne.s32.totalorder %s501, %s502
      %p511 = scmp.eq.s32.totalorder %s51, 0
      %p512 = por %p510, %p511
      %p513 = scmp.ne.s32.totalorder %s501, %s502
      %p514 = scmp.eq.s32.totalorder %s52, 1
      %p515 = por %p513, %p514
      %p517 = scmp.ne.s32.totalorder %s502, %s516
      %p518 = scmp.eq.s32.totalorder %s52, 0
      %p519 = por %p517, %p518
      %s521 = sadd.s32 %s520, 1
      %p524 = scmp.eq.s32.totalorder %s46, 1
      %p525 = scmp.ne.s32.totalorder %s520, %s522
      %p526 = scmp.eq.s32.totalorder %s46, 0
      %p527 = por %p525, %p526
      %p528 = scmp.ne.s32.totalorder %s520, %s522
      %p529 = scmp.eq.s32.totalorder %s51, 1
      %p530 = por %p528, %p529
      %p531 = scmp.ne.s32.totalorder %s522, %s523
      %p532 = scmp.eq.s32.totalorder %s51, 0
      %p533 = por %p531, %p532
      %p534 = scmp.ne.s32.totalorder %s522, %s523
      %p535 = scmp.eq.s32.totalorder %s52, 1
      %p536 = por %p534, %p535
      %p538 = scmp.ne.s32.totalorder %s523, %s537
      %p539 = scmp.eq.s32.totalorder %s52, 0
      %p540 = por %p538, %p539
      %s542 = sadd.s32 %s541, 1
      %p545 = scmp.eq.s32.totalorder %s46, 1
      %p546 = scmp.ne.s32.totalorder %s541, %s543
      %p547 = scmp.eq.s32.totalorder %s46, 0
      %p548 = por %p546, %p547
      %p549 = scmp.ne.s32.totalorder %s541, %s543
      %p550 = scmp.eq.s32.totalorder %s51, 1
      %p551 = por %p549, %p550
      %p552 = scmp.ne.s32.totalorder %s543, %s544
      %p553 = scmp.eq.s32.totalorder %s51, 0
      %p554 = por %p552, %p553
      %p555 = scmp.ne.s32.totalorder %s543, %s544
      %p556 = scmp.eq.s32.totalorder %s52, 1
      %p557 = por %p555, %p556
      %p559 = scmp.ne.s32.totalorder %s544, %s558
      %p560 = scmp.eq.s32.totalorder %s52, 0
      %p561 = por %p559, %p560
      %s563 = sadd.s32 %s562, 1
      %p566 = scmp.eq.s32.totalorder %s46, 1
      %p567 = scmp.ne.s32.totalorder %s562, %s564
      %p568 = scmp.eq.s32.totalorder %s46, 0
      %p569 = por %p567, %p568
      %p570 = scmp.ne.s32.totalorder %s562, %s564
      %p571 = scmp.eq.s32.totalorder %s51, 1
      %p572 = por %p570, %p571
      %p573 = scmp.ne.s32.totalorder %s564, %s565
      %p574 = scmp.eq.s32.totalorder %s51, 0
      %p575 = por %p573, %p574
      %p576 = scmp.ne.s32.totalorder %s564, %s565
      %p577 = scmp.eq.s32.totalorder %s52, 1
      %p578 = por %p576, %p577
      %p580 = scmp.ne.s32.totalorder %s565, %s579
      %p581 = scmp.eq.s32.totalorder %s52, 0
      %p582 = por %p580, %p581
      %s584 = sadd.s32 %s583, 1
      %p587 = scmp.eq.s32.totalorder %s46, 1
      %p588 = scmp.ne.s32.totalorder %s583, %s585
      %p589 = scmp.eq.s32.totalorder %s46, 0
      %p590 = por %p588, %p589
      %p591 = scmp.ne.s32.totalorder %s583, %s585
      %p592 = scmp.eq.s32.totalorder %s51, 1
      %p593 = por %p591, %p592
      %p594 = scmp.ne.s32.totalorder %s585, %s586
      %p595 = scmp.eq.s32.totalorder %s51, 0
      %p596 = por %p594, %p595
      %p597 = scmp.ne.s32.totalorder %s585, %s586
      %p598 = scmp.eq.s32.totalorder %s52, 1
      %p599 = por %p597, %p598
      %p601 = scmp.ne.s32.totalorder %s586, %s600
      %p602 = scmp.eq.s32.totalorder %s52, 0
      %p603 = por %p601, %p602
      %s605 = sadd.s32 %s604, 1
      %p608 = scmp.eq.s32.totalorder %s46, 1
      %p609 = scmp.ne.s32.totalorder %s604, %s606
      %p610 = scmp.eq.s32.totalorder %s46, 0
      %p611 = por %p609, %p610
      %p612 = scmp.ne.s32.totalorder %s604, %s606
      %p613 = scmp.eq.s32.totalorder %s51, 1
      %p614 = por %p612, %p613
      %p615 = scmp.ne.s32.totalorder %s606, %s607
      %p616 = scmp.eq.s32.totalorder %s51, 0
      %p617 = por %p615, %p616
      %p618 = scmp.ne.s32.totalorder %s606, %s607
      %p619 = scmp.eq.s32.totalorder %s52, 1
      %p620 = por %p618, %p619
      %p622 = scmp.ne.s32.totalorder %s607, %s621
      %p623 = scmp.eq.s32.totalorder %s52, 0
      %p624 = por %p622, %p623
      %s626 = sadd.s32 %s625, 1
      %p629 = scmp.eq.s32.totalorder %s46, 1
      %p630 = scmp.ne.s32.totalorder %s625, %s627
      %p631 = scmp.eq.s32.totalorder %s46, 0
      %p632 = por %p630, %p631
      %p633 = scmp.ne.s32.totalorder %s625, %s627
      %p634 = scmp.eq.s32.totalorder %s51, 1
      %p635 = por %p633, %p634
      %p636 = scmp.ne.s32.totalorder %s627, %s628
      %p637 = scmp.eq.s32.totalorder %s51, 0
      %p638 = por %p636, %p637
      %p639 = scmp.ne.s32.totalorder %s627, %s628
      %p640 = scmp.eq.s32.totalorder %s52, 1
      %p641 = por %p639, %p640
      %p643 = scmp.ne.s32.totalorder %s628, %s642
      %p644 = scmp.eq.s32.totalorder %s52, 0
      %p645 = por %p643, %p644
      %s646 = ssub.s32 %s46, %s53
      %p647 = scmp.eq.s32.totalorder %s646, 0
      %s649 = sadd.s32 %s648, 1
      %s650 = scalar_select %p647, %s648, %s649
      %p653 = pneg %p647
      %p654 = scmp.eq.s32.totalorder %s46, 1
      %p655 = por %p653, %p654
      %p656 = scmp.ne.s32.totalorder %s648, %s651
      %p657 = scmp.eq.s32.totalorder %s46, 0
      %p658 = por %p656, %p657
      %p659 = scmp.ne.s32.totalorder %s648, %s651
      %p660 = scmp.eq.s32.totalorder %s51, 1
      %p661 = por %p659, %p660
      %p662 = scmp.ne.s32.totalorder %s651, %s652
      %p663 = scmp.eq.s32.totalorder %s51, 0
      %p664 = por %p662, %p663
      %p665 = scmp.ne.s32.totalorder %s651, %s652
      %p666 = scmp.eq.s32.totalorder %s52, 1
      %p667 = por %p665, %p666
      %p669 = scmp.ne.s32.totalorder %s652, %s668
      %p670 = scmp.eq.s32.totalorder %s52, 0
      %p671 = por %p669, %p670
      %p672 = scmp.le.s32.totalorder 1, %s46
      %p673 = scmp.lt.s32.totalorder %s46, 3
      %p674 = pnand %p672, %p673
      %p675 = pneg %p674
      // Predicated region
      $region9: #{tpu_custom_call.1} parent=5 // pred_check
        _
      $region10: #{tpu_custom_call.1} parent=5 // pred_check_branch
        %677 = sbr.rel (%p674) target = $region12
      $region11: #{tpu_custom_call.1} parent=5 // pred_region
        %s678 = ssub.s32 %s46, 1
        // Predicated region
        $region13: #{tpu_custom_call.1} parent=11 // pred_check
          %p679 = pneg %p197
        $region14: #{tpu_custom_call.1} parent=11 // pred_check_branch
          %681 = sbr.rel (%p679) target = $region16
        $region15: #{tpu_custom_call.1} parent=11 // pred_region
          _
        $region16: #{tpu_custom_call.1} parent=11 // pred_fallthru
          _
        // Predicated region
        $region17: #{tpu_custom_call.1} parent=11 // pred_check
          %p682 = pneg %p218
        $region18: #{tpu_custom_call.1} parent=11 // pred_check_branch
          %684 = sbr.rel (%p682) target = $region20
        $region19: #{tpu_custom_call.1} parent=11 // pred_region
          %s686 = ssub.s32 16, 16
          %687 = vsyncadd [#allocation17], %s686
          %s689 = sshll.u32 [#allocation16], 4
          %s690 = int_to_ptr.vmem [resolvable:$true] %s689
          %692 = dma.hbm_to_vmem [thread:$0]  %s6, 16, %s690, [#allocation17]
        $region20: #{tpu_custom_call.1} parent=11 // pred_fallthru
          _
        // Predicated region
        $region21: #{tpu_custom_call.1} parent=11 // pred_check
          %p693 = pneg %p239
        $region22: #{tpu_custom_call.1} parent=11 // pred_check_branch
          %695 = sbr.rel (%p693) target = $region24
        $region23: #{tpu_custom_call.1} parent=11 // pred_region
          _
        $region24: #{tpu_custom_call.1} parent=11 // pred_fallthru
          _
        // Predicated region
        $region25: #{tpu_custom_call.1} parent=11 // pred_check
          %p696 = pneg %p260
        $region26: #{tpu_custom_call.1} parent=11 // pred_check_branch
          %698 = sbr.rel (%p696) target = $region28
        $region27: #{tpu_custom_call.1} parent=11 // pred_region
          _
        $region28: #{tpu_custom_call.1} parent=11 // pred_fallthru
          _
        // Predicated region
        $region29: #{tpu_custom_call.1} parent=11 // pred_check
          %p699 = pneg %p281
        $region30: #{tpu_custom_call.1} parent=11 // pred_check_branch
          %701 = sbr.rel (%p699) target = $region32
        $region31: #{tpu_custom_call.1} parent=11 // pred_region
          %s703 = ssub.s32 128, 128
          %704 = vsyncadd [#allocation17], %s703
          %s705 = sshll.u32 [#allocation18], 4
          %s706 = int_to_ptr.vmem [resolvable:$true] %s705
          %711 = dma.hbm_to_vmem [thread:$0]  %s9, 128, %s706, [#allocation17], 64, 64, 4
        $region32: #{tpu_custom_call.1} parent=11 // pred_fallthru
          _
        // Predicated region
        $region33: #{tpu_custom_call.1} parent=11 // pred_check
          %p712 = pneg %p302
        $region34: #{tpu_custom_call.1} parent=11 // pred_check_branch
          %714 = sbr.rel (%p712) target = $region36
        $region35: #{tpu_custom_call.1} parent=11 // pred_region
          %s716 = ssub.s32 32, 32
          %717 = vsyncadd [#allocation20], %s716
          %s718 = sshll.u32 [#allocation19], 4
          %s719 = int_to_ptr.vmem [resolvable:$true] %s718
          %724 = dma.hbm_to_vmem [thread:$0]  %s10, 32, %s719, [#allocation20], 16, 16, 1
        $region36: #{tpu_custom_call.1} parent=11 // pred_fallthru
          _
        // Predicated region
        $region37: #{tpu_custom_call.1} parent=11 // pred_check
          %p725 = pneg %p323
        $region38: #{tpu_custom_call.1} parent=11 // pred_check_branch
          %727 = sbr.rel (%p725) target = $region40
        $region39: #{tpu_custom_call.1} parent=11 // pred_region
          _
        $region40: #{tpu_custom_call.1} parent=11 // pred_fallthru
          _
        // Predicated region
        $region41: #{tpu_custom_call.1} parent=11 // pred_check
          %p728 = pneg %p344
        $region42: #{tpu_custom_call.1} parent=11 // pred_check_branch
          %730 = sbr.rel (%p728) target = $region44
        $region43: #{tpu_custom_call.1} parent=11 // pred_region
          %s732 = ssub.s32 32, 32
          %733 = vsyncadd [#allocation20], %s732
          %s734 = sshll.u32 [#allocation21], 4
          %s735 = int_to_ptr.vmem [resolvable:$true] %s734
          %740 = dma.hbm_to_vmem [thread:$0]  %s12, 32, %s735, [#allocation20], 16, 16, 1
        $region44: #{tpu_custom_call.1} parent=11 // pred_fallthru
          _
        // Predicated region
        $region45: #{tpu_custom_call.1} parent=11 // pred_check
          %p741 = pneg %p365
        $region46: #{tpu_custom_call.1} parent=11 // pred_check_branch
          %743 = sbr.rel (%p741) target = $region48
        $region47: #{tpu_custom_call.1} parent=11 // pred_region
          _
        $region48: #{tpu_custom_call.1} parent=11 // pred_fallthru
          _
        // Predicated region
        $region49: #{tpu_custom_call.1} parent=11 // pred_check
          %p744 = pneg %p386
        $region50: #{tpu_custom_call.1} parent=11 // pred_check_branch
          %746 = sbr.rel (%p744) target = $region52
        $region51: #{tpu_custom_call.1} parent=11 // pred_region
          _
        $region52: #{tpu_custom_call.1} parent=11 // pred_fallthru
          _
        // Predicated region
        $region53: #{tpu_custom_call.1} parent=11 // pred_check
          %p747 = pneg %p407
        $region54: #{tpu_custom_call.1} parent=11 // pred_check_branch
          %749 = sbr.rel (%p747) target = $region56
        $region55: #{tpu_custom_call.1} parent=11 // pred_region
          _
        $region56: #{tpu_custom_call.1} parent=11 // pred_fallthru
          _
        // Predicated region
        $region57: #{tpu_custom_call.1} parent=11 // pred_check
          %p750 = pneg %p428
        $region58: #{tpu_custom_call.1} parent=11 // pred_check_branch
          %752 = sbr.rel (%p750) target = $region60
        $region59: #{tpu_custom_call.1} parent=11 // pred_region
          _
        $region60: #{tpu_custom_call.1} parent=11 // pred_fallthru
          _
        // Predicated region
        $region61: #{tpu_custom_call.1} parent=11 // pred_check
          %p753 = pneg %p449
        $region62: #{tpu_custom_call.1} parent=11 // pred_check_branch
          %755 = sbr.rel (%p753) target = $region64
        $region63: #{tpu_custom_call.1} parent=11 // pred_region
          _
        $region64: #{tpu_custom_call.1} parent=11 // pred_fallthru
          _
        // Predicated region
        $region65: #{tpu_custom_call.1} parent=11 // pred_check
          %p756 = pneg %p470
        $region66: #{tpu_custom_call.1} parent=11 // pred_check_branch
          %758 = sbr.rel (%p756) target = $region68
        $region67: #{tpu_custom_call.1} parent=11 // pred_region
          _
        $region68: #{tpu_custom_call.1} parent=11 // pred_fallthru
          _
        // Predicated region
        $region69: #{tpu_custom_call.1} parent=11 // pred_check
          %p759 = pneg %p491
        $region70: #{tpu_custom_call.1} parent=11 // pred_check_branch
          %761 = sbr.rel (%p759) target = $region72
        $region71: #{tpu_custom_call.1} parent=11 // pred_region
          _
        $region72: #{tpu_custom_call.1} parent=11 // pred_fallthru
          _
        // Predicated region
        $region73: #{tpu_custom_call.1} parent=11 // pred_check
          %p762 = pneg %p512
        $region74: #{tpu_custom_call.1} parent=11 // pred_check_branch
          %764 = sbr.rel (%p762) target = $region76
        $region75: #{tpu_custom_call.1} parent=11 // pred_region
          _
        $region76: #{tpu_custom_call.1} parent=11 // pred_fallthru
          _
        // Predicated region
        $region77: #{tpu_custom_call.1} parent=11 // pred_check
          %p765 = pneg %p533
        $region78: #{tpu_custom_call.1} parent=11 // pred_check_branch
          %767 = sbr.rel (%p765) target = $region80
        $region79: #{tpu_custom_call.1} parent=11 // pred_region
          _
        $region80: #{tpu_custom_call.1} parent=11 // pred_fallthru
          _
        // Predicated region
        $region81: #{tpu_custom_call.1} parent=11 // pred_check
          %p768 = pneg %p554
        $region82: #{tpu_custom_call.1} parent=11 // pred_check_branch
          %770 = sbr.rel (%p768) target = $region84
        $region83: #{tpu_custom_call.1} parent=11 // pred_region
          _
        $region84: #{tpu_custom_call.1} parent=11 // pred_fallthru
          _
        // Predicated region
        $region85: #{tpu_custom_call.1} parent=11 // pred_check
          %p771 = pneg %p575
        $region86: #{tpu_custom_call.1} parent=11 // pred_check_branch
          %773 = sbr.rel (%p771) target = $region88
        $region87: #{tpu_custom_call.1} parent=11 // pred_region
          _
        $region88: #{tpu_custom_call.1} parent=11 // pred_fallthru
          _
        // Predicated region
        $region89: #{tpu_custom_call.1} parent=11 // pred_check
          %p774 = pneg %p596
        $region90: #{tpu_custom_call.1} parent=11 // pred_check_branch
          %776 = sbr.rel (%p774) target = $region92
        $region91: #{tpu_custom_call.1} parent=11 // pred_region
          _
        $region92: #{tpu_custom_call.1} parent=11 // pred_fallthru
          _
        // Predicated region
        $region93: #{tpu_custom_call.1} parent=11 // pred_check
          %p777 = pneg %p617
        $region94: #{tpu_custom_call.1} parent=11 // pred_check_branch
          %779 = sbr.rel (%p777) target = $region96
        $region95: #{tpu_custom_call.1} parent=11 // pred_region
          _
        $region96: #{tpu_custom_call.1} parent=11 // pred_fallthru
          _
        // Predicated region
        $region97: #{tpu_custom_call.1} parent=11 // pred_check
          %p780 = pneg %p638
        $region98: #{tpu_custom_call.1} parent=11 // pred_check_branch
          %782 = sbr.rel (%p780) target = $region100
        $region99: #{tpu_custom_call.1} parent=11 // pred_region
          _
        $region100: #{tpu_custom_call.1} parent=11 // pred_fallthru
          _
      $region12: #{tpu_custom_call.1} parent=5 // pred_fallthru
        _
      %p783 = scmp.lt.s32.totalorder %s46, 2
      // Predicated region
      $region101: #{tpu_custom_call.1} parent=5 // pred_check
        %p784 = pneg %p783
      $region102: #{tpu_custom_call.1} parent=5 // pred_check_branch
        %786 = sbr.rel (%p784) target = $region104
      $region103: #{tpu_custom_call.1} parent=5 // pred_region
        // Predicated region
        $region105: #{tpu_custom_call.1} parent=103 // pred_check
          %p787 = pneg %p66
        $region106: #{tpu_custom_call.1} parent=103 // pred_check_branch
          %789 = sbr.rel (%p787) target = $region108
        $region107: #{tpu_custom_call.1} parent=103 // pred_region
          %s790 = smul.u32 2, %s46
          %p791 = scmp.lt.s32.totalorder %s790, 3
          %s792 = scalar_select %p791, %s790, 3
          %s793 = smul.addr %s792, 8
          %s794 = scalar_lea.vmem %s0, %s793
          %s795 = smul.u32 2, %s46
        $region108: #{tpu_custom_call.1} parent=103 // pred_fallthru
          _
        // Predicated region
        $region109: #{tpu_custom_call.1} parent=103 // pred_check
          %p796 = pneg %p92
        $region110: #{tpu_custom_call.1} parent=103 // pred_check_branch
          %798 = sbr.rel (%p796) target = $region112
        $region111: #{tpu_custom_call.1} parent=103 // pred_region
          %s799 = smul.u32 2, %s46
          %p800 = scmp.lt.s32.totalorder %s799, 3
          %s801 = scalar_select %p800, %s799, 3
          %s802 = smul.addr %s801, 8
          %s803 = scalar_lea.vmem %s1, %s802
          %s804 = smul.u32 2, %s46
        $region112: #{tpu_custom_call.1} parent=103 // pred_fallthru
          _
        // Predicated region
        $region113: #{tpu_custom_call.1} parent=103 // pred_check
          %p805 = pneg %p118
        $region114: #{tpu_custom_call.1} parent=103 // pred_check_branch
          %807 = sbr.rel (%p805) target = $region116
        $region115: #{tpu_custom_call.1} parent=103 // pred_region
          %s808 = sand.u32 %s108, 1
          %s809 = scalar_lea.sflag [#allocation11], %s808
          %s810 = sand.u32 %s108, 1
          %s811 = smul.addr %s810, 2
          %s812 = scalar_lea.vmem [#allocation10], %s811
          %s813 = smul.u32 2, %s46
          %s815 = ssub.s32 32, 32
          %816 = vsyncadd %s809, %s815
          %s817 = smul.addr %s813, 16
          %s818 = scalar_lea.hbm %s2, %s817
          %s819 = sshll.u32 %s812, 4
          %s820 = int_to_ptr.vmem [resolvable:$true] %s819
          %825 = dma.hbm_to_vmem [thread:$0]  %s818, 32, %s820, %s809, 16, 16, 1
        $region116: #{tpu_custom_call.1} parent=103 // pred_fallthru
          _
        // Predicated region
        $region117: #{tpu_custom_call.1} parent=103 // pred_check
          %p826 = pneg %p144
        $region118: #{tpu_custom_call.1} parent=103 // pred_check_branch
          %828 = sbr.rel (%p826) target = $region120
        $region119: #{tpu_custom_call.1} parent=103 // pred_region
          %s829 = sand.u32 %s46, 1
          %s830 = scalar_lea.sflag [#allocation14], %s829
          %s831 = sand.u32 %s134, 1
          %s832 = smul.addr %s831, 2
          %s833 = scalar_lea.vmem [#allocation13], %s832
          %s834 = smul.u32 2, %s46
          %s836 = ssub.s32 32, 32
          %837 = vsyncadd %s830, %s836
          %s838 = smul.addr %s834, 16
          %s839 = scalar_lea.hbm %s3, %s838
          %s840 = sshll.u32 %s833, 4
          %s841 = int_to_ptr.vmem [resolvable:$true] %s840
          %846 = dma.hbm_to_vmem [thread:$0]  %s839, 32, %s841, %s830, 16, 16, 1
        $region120: #{tpu_custom_call.1} parent=103 // pred_fallthru
          _
        // Predicated region
        $region121: #{tpu_custom_call.1} parent=103 // pred_check
          %p847 = pneg %p170
        $region122: #{tpu_custom_call.1} parent=103 // pred_check_branch
          %849 = sbr.rel (%p847) target = $region124
        $region123: #{tpu_custom_call.1} parent=103 // pred_region
          %s850 = sand.u32 %s46, 1
          %s851 = scalar_lea.sflag [#allocation14], %s850
          %s852 = sand.u32 %s160, 1
          %s853 = smul.addr %s852, 2
          %s854 = scalar_lea.vmem [#allocation15], %s853
          %s855 = smul.u32 2, %s46
          %s857 = ssub.s32 32, 32
          %858 = vsyncadd %s851, %s857
          %s859 = smul.addr %s855, 16
          %s860 = scalar_lea.hbm %s4, %s859
          %s861 = sshll.u32 %s854, 4
          %s862 = int_to_ptr.vmem [resolvable:$true] %s861
          %867 = dma.hbm_to_vmem [thread:$0]  %s860, 32, %s862, %s851, 16, 16, 1
        $region124: #{tpu_custom_call.1} parent=103 // pred_fallthru
          _
      $region104: #{tpu_custom_call.1} parent=5 // pred_fallthru
        _
      %p868 = scmp.le.s32.totalorder 1, %s46
      %p869 = scmp.lt.s32.totalorder %s46, 3
      %p870 = pnand %p868, %p869
      %p871 = pneg %p870
      // Predicated region
      $region125: #{tpu_custom_call.1} parent=5 // pred_check
        _
      $region126: #{tpu_custom_call.1} parent=5 // pred_check_branch
        %873 = sbr.rel (%p870) target = $region128
      $region127: #{tpu_custom_call.1} parent=5 // pred_region
        %s874 = ssub.s32 %s46, 1
        %s875 = sand.u32 %s111, 1
        %s876 = scalar_lea.sflag [#allocation11], %s875
        %s877 = sand.u32 %s111, 1
        %s878 = smul.addr %s877, 2
        %s879 = scalar_lea.vmem [#allocation10], %s878
        // Predicated region
        $region129: #{tpu_custom_call.1} parent=127 // pred_check
          %p880 = pneg %p124
        $region130: #{tpu_custom_call.1} parent=127 // pred_check_branch
          %882 = sbr.rel (%p880) target = $region132
        $region131: #{tpu_custom_call.1} parent=127 // pred_region
          %883 = dma.done %s876, 32
        $region132: #{tpu_custom_call.1} parent=127 // pred_fallthru
          _
        %s884 = sand.u32 %s51, 1
        %s885 = scalar_lea.sflag [#allocation14], %s884
        %s886 = sand.u32 %s137, 1
        %s887 = smul.addr %s886, 2
        %s888 = scalar_lea.vmem [#allocation13], %s887
        // Predicated region
        $region133: #{tpu_custom_call.1} parent=127 // pred_check
          %p889 = pneg %p150
        $region134: #{tpu_custom_call.1} parent=127 // pred_check_branch
          %891 = sbr.rel (%p889) target = $region136
        $region135: #{tpu_custom_call.1} parent=127 // pred_region
          %892 = dma.done %s885, 32
        $region136: #{tpu_custom_call.1} parent=127 // pred_fallthru
          _
        %s893 = sand.u32 %s51, 1
        %s894 = scalar_lea.sflag [#allocation14], %s893
        %s895 = sand.u32 %s163, 1
        %s896 = smul.addr %s895, 2
        %s897 = scalar_lea.vmem [#allocation15], %s896
        // Predicated region
        $region137: #{tpu_custom_call.1} parent=127 // pred_check
          %p898 = pneg %p176
        $region138: #{tpu_custom_call.1} parent=127 // pred_check_branch
          %900 = sbr.rel (%p898) target = $region140
        $region139: #{tpu_custom_call.1} parent=127 // pred_region
          %901 = dma.done %s894, 32
        $region140: #{tpu_custom_call.1} parent=127 // pred_fallthru
          _
        // Predicated region
        $region141: #{tpu_custom_call.1} parent=127 // pred_check
          %p902 = pneg %p218
        $region142: #{tpu_custom_call.1} parent=127 // pred_check_branch
          %904 = sbr.rel (%p902) target = $region144
        $region143: #{tpu_custom_call.1} parent=127 // pred_region
          %905 = dma.done [#allocation17], 16
        $region144: #{tpu_custom_call.1} parent=127 // pred_fallthru
          _
        // Predicated region
        $region145: #{tpu_custom_call.1} parent=127 // pred_check
          %p906 = pneg %p281
        $region146: #{tpu_custom_call.1} parent=127 // pred_check_branch
          %908 = sbr.rel (%p906) target = $region148
        $region147: #{tpu_custom_call.1} parent=127 // pred_region
          %909 = dma.done [#allocation17], 128
        $region148: #{tpu_custom_call.1} parent=127 // pred_fallthru
          _
        // Predicated region
        $region149: #{tpu_custom_call.1} parent=127 // pred_check
          %p910 = pneg %p302
        $region150: #{tpu_custom_call.1} parent=127 // pred_check_branch
          %912 = sbr.rel (%p910) target = $region152
        $region151: #{tpu_custom_call.1} parent=127 // pred_region
          %913 = dma.done [#allocation20], 32
        $region152: #{tpu_custom_call.1} parent=127 // pred_fallthru
          _
        // Predicated region
        $region153: #{tpu_custom_call.1} parent=127 // pred_check
          %p914 = pneg %p344
        $region154: #{tpu_custom_call.1} parent=127 // pred_check_branch
          %916 = sbr.rel (%p914) target = $region156
        $region155: #{tpu_custom_call.1} parent=127 // pred_region
          %917 = dma.done [#allocation20], 32
        $region156: #{tpu_custom_call.1} parent=127 // pred_fallthru
          _
        %s918 = smul.u32 2, %s51
        %p919 = scmp.lt.s32.totalorder %s918, 3
        %s920 = scalar_select %p919, %s918, 3
        %s921 = smul.addr %s920, 8
        %s922 = scalar_lea.vmem %s0, %s921
        %p923 = pneg %p72
        %p924 = pneg %p69
        %s925 = smul.u32 2, %s51
        %p926 = scmp.lt.s32.totalorder %s925, 3
        %s927 = scalar_select %p926, %s925, 3
        %s928 = smul.addr %s927, 8
        %s929 = scalar_lea.vmem %s1, %s928
        %p930 = pneg %p98
        %p931 = pneg %p95
        %s932 = sand.u32 %s111, 1
        %s933 = scalar_lea.sflag [#allocation11], %s932
        %s934 = sand.u32 %s111, 1
        %s935 = smul.addr %s934, 2
        %s936 = scalar_lea.vmem [#allocation10], %s935
        %p937 = pneg %p124
        %p938 = pneg %p121
        %s939 = sand.u32 %s51, 1
        %s940 = scalar_lea.sflag [#allocation14], %s939
        %s941 = sand.u32 %s137, 1
        %s942 = smul.addr %s941, 2
        %s943 = scalar_lea.vmem [#allocation13], %s942
        %p944 = pneg %p150
        %p945 = pneg %p147
        %s946 = sand.u32 %s51, 1
        %s947 = scalar_lea.sflag [#allocation14], %s946
        %s948 = sand.u32 %s163, 1
        %s949 = smul.addr %s948, 2
        %s950 = scalar_lea.vmem [#allocation15], %s949
        %p951 = pneg %p176
        %p952 = pneg %p173
        %p953 = pneg %p197
        %p954 = pneg %p194
        %p955 = pneg %p218
        %p956 = pneg %p215
        %p957 = pneg %p239
        %p958 = pneg %p236
        %p959 = pneg %p260
        %p960 = pneg %p257
        %p961 = pneg %p281
        %p962 = pneg %p278
        %p963 = pneg %p302
        %p964 = pneg %p299
        %p965 = pneg %p323
        %p966 = pneg %p320
        %p967 = pneg %p344
        %p968 = pneg %p341
        %p969 = pneg %p365
        %p970 = pneg %p362
        %p971 = pneg %p386
        %p972 = pneg %p383
        %p973 = pneg %p407
        %p974 = pneg %p404
        %p975 = pneg %p428
        %p976 = pneg %p425
        %p977 = pneg %p449
        %p978 = pneg %p446
        %p979 = pneg %p470
        %p980 = pneg %p467
        %p981 = pneg %p491
        %p982 = pneg %p488
        %p983 = pneg %p512
        %p984 = pneg %p509
        %p985 = pneg %p533
        %p986 = pneg %p530
        %p987 = pneg %p554
        %p988 = pneg %p551
        %p989 = pneg %p575
        %p990 = pneg %p572
        %p991 = pneg %p596
        %p992 = pneg %p593
        %p993 = pneg %p617
        %p994 = pneg %p614
        %p995 = pneg %p638
        %p996 = pneg %p635
        %p997 = pneg %p664
        %p998 = pneg %p661
        %s999 = sand.u32 %s651, 1
        %s1000 = scalar_lea.sflag [#allocation12], %s999
        %s1001 = sand.u32 %s651, 1
        %s1002 = smul.addr %s1001, 16
        %s1003 = scalar_lea.vmem [#allocation22], %s1002
        %s1004 = smul.u32 2, %s51
        %p1005 = scmp.lt.s32.totalorder %s1004, 3
        %s1006 = scalar_select %p1005, %s1004, 3
        %s1007 = smul.addr %s1006, 8
        %s1008 = scalar_lea.vmem %s0, %s1007
        %s1009 = smul.u32 2, %s51
        %s1010 = smul.u32 2, %s51
        %p1011 = scmp.lt.s32.totalorder %s1010, 3
        %s1012 = scalar_select %p1011, %s1010, 3
        %s1013 = smul.addr %s1012, 8
        %s1014 = scalar_lea.vmem %s1, %s1013
        %s1015 = smul.u32 2, %s51
        %s1016 = smul.u32 2, %s51
        %s1017 = smul.u32 2, %s51
        %s1018 = smul.u32 2, %s51
        %s1019 = smul.u32 2, %s51
        %v1020 = vld [vmem:[%s1008] sm:$0xff]
        %v1021 = vld [vmem:[%s1008 + $0x8] sm:$0xff]
        %v1022 = vld [vmem:[%s1014] sm:$0xff]
        %v1023 = vld [vmem:[%s1014 + $0x8] sm:$0xff]
        %vm1024 = vcmask 130048
        %v1025 = vsel %vm1024, %v1020, 0.0
        %1026 = vadd.xlane.f32.xlu0 %v1025
        %v1027 = vpop.xlane.xlu0 %1026
        %v1028 = vsel %vm1024, %v1021, 0.0
        %1029 = vadd.xlane.f32.xlu0 %v1028
        %v1030 = vpop.xlane.xlu0 %1029
        %v1031 = vrcp.pop 16.0
        %v1032 = vmul.f32 %v1027, %v1031
        %v1033 = vmul.f32 %v1030, %v1031
        %v1034 = vsub.f32 %v1020, %v1032
        %v1035 = vsub.f32 %v1021, %v1033
        %v1036 = vmul.f32 %v1034, %v1034
        %v1037 = vmul.f32 %v1035, %v1035
        %v1038 = vsel %vm1024, %v1036, 0.0
        %1039 = vadd.xlane.f32.xlu0 %v1038
        %v1040 = vpop.xlane.xlu0 %1039
        %v1041 = vsel %vm1024, %v1037, 0.0
        %1042 = vadd.xlane.f32.xlu0 %v1041
        %v1043 = vpop.xlane.xlu0 %1042
        %v1044 = vmul.f32 %v1040, %v1031
        %v1045 = vmul.f32 %v1043, %v1031
        %v1046 = vadd.f32 %v1044, 1e-05
        %v1047 = vadd.f32 %v1045, 1e-05
        %v1048 = vrsqrt.pop %v1046
        %v1049 = vrsqrt.pop %v1047
        %v1050 = vmul.f32 %v1034, %v1048
        %v1051 = vmul.f32 %v1035, %v1049
        %v1052 = vld [vmem:[%s5] sm:$0x1]
        %v1054 = vlaneseq
        %v1055 = vshrl.u32 %v1054, 7
        %v1056 = vsub.s32 0, %v1055
        %v1057 = vrot.slane %v1052, %v1056
        %v1059 = vmul.f32 %v1050, %v1057
        %v1060 = vmul.f32 %v1051, %v1057
        %v1061 = vld [vmem:[#allocation16] sm:$0x1]
        %v1063 = vlaneseq
        %v1064 = vshrl.u32 %v1063, 7
        %v1065 = vsub.s32 0, %v1064
        %v1066 = vrot.slane %v1061, %v1065
        %v1068 = vadd.f32 %v1059, %v1066
        %v1069 = vadd.f32 %v1060, %v1066
        %v1070 = vld [vmem:[%s888] sm:$0x1]
        %v1071 = vld [vmem:[%s888 + $0x1] sm:$0x1]
        %v1072 = vadd.f32 %v1070, 1.0
        %v1073 = vadd.f32 %v1071, 1.0
        %v1076 = vlaneseq
        %v1077 = vshrl.u32 %v1076, 7
        %v1078 = vsub.s32 0, %v1077
        %v1079 = vrot.slane %v1072, %v1078
        %v1080 = vlaneseq
        %v1081 = vshrl.u32 %v1080, 7
        %v1082 = vsub.s32 0, %v1081
        %v1083 = vrot.slane %v1073, %v1082
        %v1086 = vmul.f32 %v1068, %v1079
        %v1087 = vmul.f32 %v1069, %v1083
        %v1088 = vld [vmem:[%s879] sm:$0x1]
        %v1089 = vld [vmem:[%s879 + $0x1] sm:$0x1]
        %v1092 = vlaneseq
        %v1093 = vshrl.u32 %v1092, 7
        %v1094 = vsub.s32 0, %v1093
        %v1095 = vrot.slane %v1088, %v1094
        %v1096 = vlaneseq
        %v1097 = vshrl.u32 %v1096, 7
        %v1098 = vsub.s32 0, %v1097
        %v1099 = vrot.slane %v1089, %v1098
        %v1102 = vadd.f32 %v1086, %v1095
        %v1103 = vadd.f32 %v1087, %v1099
        %v1104 = vmul.f32 %v1102, %v1022
        %v1105 = vmul.f32 %v1103, %v1023
        %v1106 = vld [vmem:[%s7] sm:$0xff]
        %v1107 = vld [vmem:[%s7 + $0x8] sm:$0xff]
        %v1109 = vsel %vm1024, %v1102, 0
        %v1112 = vsel %vm1024, %v1103, 0
        %1114 = vmatprep.subr.mxu0 0.0
        %1115 = vmatpush1.msra.mxu0 %v1106
        %1116 = vmatprep.subr.mxu0 0.0
        %1117 = vmatpush1.msra.mxu0 %v1107
        %1118 = vmatprep.subr.mxu0 0.0
        %1119 = vmatpush1.msra.mxu0 0.0
        %1120 = vmatprep.subr.mxu0 0.0
        %1121 = vmatpush1.msra.mxu0 0.0
        %1122 = vmatprep.subr.mxu0 0.0
        %1123 = vmatpush1.msra.mxu0 0.0
        %1124 = vmatprep.subr.mxu0 0.0
        %1125 = vmatpush1.msra.mxu0 0.0
        %1126 = vmatprep.subr.mxu0 0.0
        %1127 = vmatpush1.msra.mxu0 0.0
        %1128 = vmatprep.subr.mxu0 0.0
        %1129 = vmatpush1.msra.mxu0 0.0
        %1130 = vmatprep.subr.mxu0 0.0
        %1131 = vmatpush1.msra.mxu0 0.0
        %1132 = vmatprep.subr.mxu0 0.0
        %1133 = vmatpush1.msra.mxu0 0.0
        %1134 = vmatprep.subr.mxu0 0.0
        %1135 = vmatpush1.msra.mxu0 0.0
        %1136 = vmatprep.subr.mxu0 0.0
        %1137 = vmatpush1.msra.mxu0 0.0
        %1138 = vmatprep.subr.mxu0 0.0
        %1139 = vmatpush1.msra.mxu0 0.0
        %1140 = vmatprep.subr.mxu0 0.0
        %1141 = vmatpush1.msra.mxu0 0.0
        %1142 = vmatprep.subr.mxu0 0.0
        %1143 = vmatpush1.msra.mxu0 0.0
        %1144 = vmatprep.subr.mxu0 0.0
        %1145 = vmatpush1.msra.mxu0 0.0
        %1146 = vmatprep.subr.mxu0 0.0
        %1147 = vmatpush1.msra.mxu0 0.0
        %1148 = vmatprep.subr.mxu0 0.0
        %1149 = vmatpush1.msra.mxu0 0.0
        %1150 = vmatprep.subr.mxu0 0.0
        %1151 = vmatpush1.msra.mxu0 0.0
        %1152 = vmatprep.subr.mxu0 0.0
        %1153 = vmatpush1.msra.mxu0 0.0
        %1154 = vmatprep.subr.mxu0 0.0
        %1155 = vmatpush1.msra.mxu0 0.0
        %1156 = vmatprep.subr.mxu0 0.0
        %1157 = vmatpush1.msra.mxu0 0.0
        %1158 = vmatprep.subr.mxu0 0.0
        %1159 = vmatpush1.msra.mxu0 0.0
        %1160 = vmatprep.subr.mxu0 0.0
        %1161 = vmatpush1.msra.mxu0 0.0
        %1162 = vmatprep.subr.mxu0 0.0
        %1163 = vmatpush1.msra.mxu0 0.0
        %1164 = vmatprep.subr.mxu0 0.0
        %1165 = vmatpush1.msra.mxu0 0.0
        %1166 = vmatprep.subr.mxu0 0.0
        %1167 = vmatpush1.msra.mxu0 0.0
        %1168 = vmatprep.subr.mxu0 0.0
        %1169 = vmatpush1.msra.mxu0 0.0
        %1170 = vmatprep.subr.mxu0 0.0
        %1171 = vmatpush1.msra.mxu0 0.0
        %1172 = vmatprep.subr.mxu0 0.0
        %1173 = vmatpush1.msra.mxu0 0.0
        %1174 = vmatprep.subr.mxu0 0.0
        %1175 = vmatpush1.msra.mxu0 0.0
        %1176 = vmatprep.subr.mxu0 0.0
        %1177 = vmatpush1.msra.mxu0 0.0
        %1178 = vmatprep.mubr.f32.mxu0 0.0
        %1179 = vmatmul.mubr.f32.gmra.mrb[0].mxu0 %v1109
        %v1180 = vpop.f32.mrb[0].mxu0
        %v1181 = vadd.f32 0.0, %v1180
        %v1182 = vpop.f32.mrb[0].mxu0
        %1183 = vmatprep.mubr.f32.mxu0 0.0
        %1184 = vmatmul.mubr.f32.gmra.mrb[0].mxu0 %v1112
        %v1185 = vpop.f32.mrb[0].mxu0
        %v1186 = vadd.f32 0.0, %v1185
        %v1187 = vpop.f32.mrb[0].mxu0
        %1188 = vdwg.mxu0
        %v1189 = vld [vmem:[%s8] sm:$0xff]
        %v1190 = vld [vmem:[%s8 + $0x8] sm:$0xff]
        %1191 = vmatprep.subr.mxu0 0.0
        %1192 = vmatpush1.msra.mxu0 %v1189
        %1193 = vmatprep.subr.mxu0 0.0
        %1194 = vmatpush1.msra.mxu0 %v1190
        %1195 = vmatprep.subr.mxu0 0.0
        %1196 = vmatpush1.msra.mxu0 0.0
        %1197 = vmatprep.subr.mxu0 0.0
        %1198 = vmatpush1.msra.mxu0 0.0
        %1199 = vmatprep.subr.mxu0 0.0
        %1200 = vmatpush1.msra.mxu0 0.0
        %1201 = vmatprep.subr.mxu0 0.0
        %1202 = vmatpush1.msra.mxu0 0.0
        %1203 = vmatprep.subr.mxu0 0.0
        %1204 = vmatpush1.msra.mxu0 0.0
        %1205 = vmatprep.subr.mxu0 0.0
        %1206 = vmatpush1.msra.mxu0 0.0
        %1207 = vmatprep.subr.mxu0 0.0
        %1208 = vmatpush1.msra.mxu0 0.0
        %1209 = vmatprep.subr.mxu0 0.0
        %1210 = vmatpush1.msra.mxu0 0.0
        %1211 = vmatprep.subr.mxu0 0.0
        %1212 = vmatpush1.msra.mxu0 0.0
        %1213 = vmatprep.subr.mxu0 0.0
        %1214 = vmatpush1.msra.mxu0 0.0
        %1215 = vmatprep.subr.mxu0 0.0
        %1216 = vmatpush1.msra.mxu0 0.0
        %1217 = vmatprep.subr.mxu0 0.0
        %1218 = vmatpush1.msra.mxu0 0.0
        %1219 = vmatprep.subr.mxu0 0.0
        %1220 = vmatpush1.msra.mxu0 0.0
        %1221 = vmatprep.subr.mxu0 0.0
        %1222 = vmatpush1.msra.mxu0 0.0
        %1223 = vmatprep.subr.mxu0 0.0
        %1224 = vmatpush1.msra.mxu0 0.0
        %1225 = vmatprep.subr.mxu0 0.0
        %1226 = vmatpush1.msra.mxu0 0.0
        %1227 = vmatprep.subr.mxu0 0.0
        %1228 = vmatpush1.msra.mxu0 0.0
        %1229 = vmatprep.subr.mxu0 0.0
        %1230 = vmatpush1.msra.mxu0 0.0
        %1231 = vmatprep.subr.mxu0 0.0
        %1232 = vmatpush1.msra.mxu0 0.0
        %1233 = vmatprep.subr.mxu0 0.0
        %1234 = vmatpush1.msra.mxu0 0.0
        %1235 = vmatprep.subr.mxu0 0.0
        %1236 = vmatpush1.msra.mxu0 0.0
        %1237 = vmatprep.subr.mxu0 0.0
        %1238 = vmatpush1.msra.mxu0 0.0
        %1239 = vmatprep.subr.mxu0 0.0
        %1240 = vmatpush1.msra.mxu0 0.0
        %1241 = vmatprep.subr.mxu0 0.0
        %1242 = vmatpush1.msra.mxu0 0.0
        %1243 = vmatprep.subr.mxu0 0.0
        %1244 = vmatpush1.msra.mxu0 0.0
        %1245 = vmatprep.subr.mxu0 0.0
        %1246 = vmatpush1.msra.mxu0 0.0
        %1247 = vmatprep.subr.mxu0 0.0
        %1248 = vmatpush1.msra.mxu0 0.0
        %1249 = vmatprep.subr.mxu0 0.0
        %1250 = vmatpush1.msra.mxu0 0.0
        %1251 = vmatprep.subr.mxu0 0.0
        %1252 = vmatpush1.msra.mxu0 0.0
        %1253 = vmatprep.subr.mxu0 0.0
        %1254 = vmatpush1.msra.mxu0 0.0
        %1255 = vmatprep.mubr.f32.mxu0 0.0
        %1256 = vmatmul.mubr.f32.gmra.mrb[0].mxu0 %v1109
        %v1257 = vpop.f32.mrb[0].mxu0
        %v1258 = vadd.f32 0.0, %v1257
        %v1259 = vpop.f32.mrb[0].mxu0
        %1260 = vmatprep.mubr.f32.mxu0 0.0
        %1261 = vmatmul.mubr.f32.gmra.mrb[0].mxu0 %v1112
        %v1262 = vpop.f32.mrb[0].mxu0
        %v1263 = vadd.f32 0.0, %v1262
        %v1264 = vpop.f32.mrb[0].mxu0
        %1265 = vdwg.mxu0
        %v1266 = vld [vmem:[#allocation18] sm:$0xf]
        %vm1267 = vcmask 256000
        %1268 = vst.msk [vmem:[#allocation8] sm:$0x7] %vm1267, 0.0
        %1269 = vst.msk [vmem:[#allocation8 + $0x10] sm:$0x7] %vm1267, 0.0
        %vm1270 = vcmask 261120
        %1271 = vst.msk [vmem:[#allocation8 + $0x3] sm:$0xff] %vm1270, %v1181
        %1272 = vst.msk [vmem:[#allocation8 + $0x13] sm:$0xff] %vm1270, %v1186
        %v1273 = vlaneseq
        %v1274 = vshrl.u32 %v1273, 7
        %v1275 = vsub.s32 3, %v1274
        %v1276 = vrot.slane %v1266, %v1275
        %v1277 = vmul.f32 %v1181, %v1276
        %v1278 = vmul.f32 %v1186, %v1276
        %v1279 = vld [vmem:[#allocation8] sm:$0xff]
        %v1280 = vld [vmem:[#allocation8 + $0x10] sm:$0xff]
        %v1281 = vlaneseq
        %v1282 = vshrl.u32 %v1281, 7
        %v1283 = vsub.s32 0, %v1282
        %v1284 = vrot.slane %v1266, %v1283
        %v1285 = vmul.f32 %v1279, %v1284
        %v1286 = vmul.f32 %v1280, %v1284
        %v1287 = vadd.f32 %v1277, %v1285
        %v1288 = vadd.f32 %v1278, %v1286
        %v1289 = vld [vmem:[#allocation8 + $0x1] sm:$0xff]
        %v1290 = vld [vmem:[#allocation8 + $0x11] sm:$0xff]
        %v1291 = vlaneseq
        %v1292 = vshrl.u32 %v1291, 7
        %v1293 = vsub.s32 1, %v1292
        %v1294 = vrot.slane %v1266, %v1293
        %v1295 = vmul.f32 %v1289, %v1294
        %v1296 = vmul.f32 %v1290, %v1294
        %v1297 = vadd.f32 %v1287, %v1295
        %v1298 = vadd.f32 %v1288, %v1296
        %v1299 = vld [vmem:[#allocation8 + $0x2] sm:$0xff]
        %v1300 = vld [vmem:[#allocation8 + $0x12] sm:$0xff]
        %v1301 = vlaneseq
        %v1302 = vshrl.u32 %v1301, 7
        %v1303 = vsub.s32 2, %v1302
        %v1304 = vrot.slane %v1266, %v1303
        %v1305 = vmul.f32 %v1299, %v1304
        %v1306 = vmul.f32 %v1300, %v1304
        %v1307 = vadd.f32 %v1297, %v1305
        %v1308 = vadd.f32 %v1298, %v1306
        %v1309 = vld [vmem:[#allocation19] sm:$0x1]
        %v1311 = vlaneseq
        %v1312 = vshrl.u32 %v1311, 7
        %v1313 = vsub.s32 0, %v1312
        %v1314 = vrot.slane %v1309, %v1313
        %v1316 = vadd.f32 %v1307, %v1314
        %v1317 = vadd.f32 %v1308, %v1314
        %v1318 = vsub.f32 0.0, %v1316
        %v1319 = vsub.f32 0.0, %v1317
        %v1320 = vmul.f32 %v1318, 1.442695
        %v1321 = vpow.pop %v1320
        %v1322 = vmul.f32 %v1319, 1.442695
        %v1323 = vpow.pop %v1322
        %v1324 = vadd.f32 %v1321, 1.0
        %v1325 = vadd.f32 %v1323, 1.0
        %v1326 = vrcp.pop %v1324
        %v1327 = vmul.f32 1.0, %v1326
        %v1328 = vrcp.pop %v1325
        %v1329 = vmul.f32 1.0, %v1328
        %v1330 = vmul.f32 %v1316, %v1327
        %v1331 = vmul.f32 %v1317, %v1329
        %1332 = vst.msk [vmem:[#allocation2] sm:$0xff] %vm1270, %v1330
        %1333 = vst.msk [vmem:[#allocation2 + $0x8] sm:$0xff] %vm1270, %v1331
        %v1334 = vld [vmem:[%s11] sm:$0xff]
        %v1335 = vld [vmem:[%s11 + $0x8] sm:$0xff]
        %v1336 = vld [vmem:[%s11 + $0x10] sm:$0xff]
        %v1337 = vld [vmem:[%s11 + $0x18] sm:$0xff]
        %v1339 = vsel %vm1270, %v1330, 0
        %v1342 = vsel %vm1270, %v1331, 0
        %1344 = vmatprep.subr.mxu0 0.0
        %1345 = vmatpush1.msra.mxu0 %v1334
        %1346 = vmatprep.subr.mxu0 0.0
        %1347 = vmatpush1.msra.mxu0 %v1335
        %1348 = vmatprep.subr.mxu0 0.0
        %1349 = vmatpush1.msra.mxu0 %v1336
        %1350 = vmatprep.subr.mxu0 0.0
        %1351 = vmatpush1.msra.mxu0 %v1337
        %1352 = vmatprep.subr.mxu0 0.0
        %1353 = vmatpush1.msra.mxu0 0.0
        %1354 = vmatprep.subr.mxu0 0.0
        %1355 = vmatpush1.msra.mxu0 0.0
        %1356 = vmatprep.subr.mxu0 0.0
        %1357 = vmatpush1.msra.mxu0 0.0
        %1358 = vmatprep.subr.mxu0 0.0
        %1359 = vmatpush1.msra.mxu0 0.0
        %1360 = vmatprep.subr.mxu0 0.0
        %1361 = vmatpush1.msra.mxu0 0.0
        %1362 = vmatprep.subr.mxu0 0.0
        %1363 = vmatpush1.msra.mxu0 0.0
        %1364 = vmatprep.subr.mxu0 0.0
        %1365 = vmatpush1.msra.mxu0 0.0
        %1366 = vmatprep.subr.mxu0 0.0
        %1367 = vmatpush1.msra.mxu0 0.0
        %1368 = vmatprep.subr.mxu0 0.0
        %1369 = vmatpush1.msra.mxu0 0.0
        %1370 = vmatprep.subr.mxu0 0.0
        %1371 = vmatpush1.msra.mxu0 0.0
        %1372 = vmatprep.subr.mxu0 0.0
        %1373 = vmatpush1.msra.mxu0 0.0
        %1374 = vmatprep.subr.mxu0 0.0
        %1375 = vmatpush1.msra.mxu0 0.0
        %1376 = vmatprep.subr.mxu0 0.0
        %1377 = vmatpush1.msra.mxu0 0.0
        %1378 = vmatprep.subr.mxu0 0.0
        %1379 = vmatpush1.msra.mxu0 0.0
        %1380 = vmatprep.subr.mxu0 0.0
        %1381 = vmatpush1.msra.mxu0 0.0
        %1382 = vmatprep.subr.mxu0 0.0
        %1383 = vmatpush1.msra.mxu0 0.0
        %1384 = vmatprep.subr.mxu0 0.0
        %1385 = vmatpush1.msra.mxu0 0.0
        %1386 = vmatprep.subr.mxu0 0.0
        %1387 = vmatpush1.msra.mxu0 0.0
        %1388 = vmatprep.subr.mxu0 0.0
        %1389 = vmatpush1.msra.mxu0 0.0
        %1390 = vmatprep.subr.mxu0 0.0
        %1391 = vmatpush1.msra.mxu0 0.0
        %1392 = vmatprep.subr.mxu0 0.0
        %1393 = vmatpush1.msra.mxu0 0.0
        %1394 = vmatprep.subr.mxu0 0.0
        %1395 = vmatpush1.msra.mxu0 0.0
        %1396 = vmatprep.subr.mxu0 0.0
        %1397 = vmatpush1.msra.mxu0 0.0
        %1398 = vmatprep.subr.mxu0 0.0
        %1399 = vmatpush1.msra.mxu0 0.0
        %1400 = vmatprep.subr.mxu0 0.0
        %1401 = vmatpush1.msra.mxu0 0.0
        %1402 = vmatprep.subr.mxu0 0.0
        %1403 = vmatpush1.msra.mxu0 0.0
        %1404 = vmatprep.subr.mxu0 0.0
        %1405 = vmatpush1.msra.mxu0 0.0
        %1406 = vmatprep.subr.mxu0 0.0
        %1407 = vmatpush1.msra.mxu0 0.0
        %1408 = vmatprep.mubr.f32.mxu0 0.0
        %1409 = vmatmul.mubr.f32.gmra.mrb[0].mxu0 %v1339
        %v1410 = vpop.f32.mrb[0].mxu0
        %v1411 = vadd.f32 0.0, %v1410
        %v1412 = vpop.f32.mrb[0].mxu0
        %1413 = vmatprep.mubr.f32.mxu0 0.0
        %1414 = vmatmul.mubr.f32.gmra.mrb[0].mxu0 %v1342
        %v1415 = vpop.f32.mrb[0].mxu0
        %v1416 = vadd.f32 0.0, %v1415
        %v1417 = vpop.f32.mrb[0].mxu0
        %1418 = vdwg.mxu0
        %v1419 = vld [vmem:[#allocation21] sm:$0x1]
        %v1421 = vlaneseq
        %v1422 = vshrl.u32 %v1421, 7
        %v1423 = vsub.s32 0, %v1422
        %v1424 = vrot.slane %v1419, %v1423
        %v1426 = vadd.f32 %v1411, %v1424
        %v1427 = vadd.f32 %v1416, %v1424
        %v1428 = vmax.f32 %v1426, 0.0
        %v1429 = vmax.f32 %v1427, 0.0
        %v1430 = vand.u32 2147483647, %v1426
        %v1431 = vand.u32 2147483647, %v1427
        %v1432 = vsub.f32 0.0, %v1430
        %v1433 = vsub.f32 0.0, %v1431
        %v1434 = vmul.f32 %v1432, 1.442695
        %v1435 = vpow.pop %v1434
        %v1436 = vmul.f32 %v1433, 1.442695
        %v1437 = vpow.pop %v1436
        %v1438 = vadd.f32 %v1435, 1.0
        %v1439 = vlog2.pop %v1438
        %v1440 = vmul.f32 %v1439, 0.6931472
        %v1441 = vmul.f32 -0.5, %v1435
        %v1442 = vadd.f32 %v1441, 1.0
        %v1443 = vmul.f32 %v1442, %v1435
        %v1444 = vand.u32 2147483647, %v1435
        %vm1445 = vcmp.lt.f32.partialorder %v1444, 0.0004427343
        %v1446 = vsel %vm1445, %v1443, %v1440
        %v1447 = vadd.f32 %v1437, 1.0
        %v1448 = vlog2.pop %v1447
        %v1449 = vmul.f32 %v1448, 0.6931472
        %v1450 = vmul.f32 -0.5, %v1437
        %v1451 = vadd.f32 %v1450, 1.0
        %v1452 = vmul.f32 %v1451, %v1437
        %v1453 = vand.u32 2147483647, %v1437
        %vm1454 = vcmp.lt.f32.partialorder %v1453, 0.0004427343
        %v1455 = vsel %vm1454, %v1452, %v1449
        %v1456 = vadd.f32 %v1428, %v1446
        %v1457 = vadd.f32 %v1429, %v1455
        %1458 = vst.msk [vmem:[#allocation3] sm:$0xff] %vm1270, %v1456
        %1459 = vst.msk [vmem:[#allocation3 + $0x8] sm:$0xff] %vm1270, %v1457
        %v1460 = vld [vmem:[%s13] sm:$0xff]
        %v1461 = vld [vmem:[%s13 + $0x8] sm:$0xff]
        %v1462 = vld [vmem:[%s13 + $0x10] sm:$0xff]
        %v1463 = vld [vmem:[%s13 + $0x18] sm:$0xff]
        %1464 = vmatprep.subr.mxu0 0.0
        %1465 = vmatpush1.msra.mxu0 %v1460
        %1466 = vmatprep.subr.mxu0 0.0
        %1467 = vmatpush1.msra.mxu0 %v1461
        %1468 = vmatprep.subr.mxu0 0.0
        %1469 = vmatpush1.msra.mxu0 %v1462
        %1470 = vmatprep.subr.mxu0 0.0
        %1471 = vmatpush1.msra.mxu0 %v1463
        %1472 = vmatprep.subr.mxu0 0.0
        %1473 = vmatpush1.msra.mxu0 0.0
        %1474 = vmatprep.subr.mxu0 0.0
        %1475 = vmatpush1.msra.mxu0 0.0
        %1476 = vmatprep.subr.mxu0 0.0
        %1477 = vmatpush1.msra.mxu0 0.0
        %1478 = vmatprep.subr.mxu0 0.0
        %1479 = vmatpush1.msra.mxu0 0.0
        %1480 = vmatprep.subr.mxu0 0.0
        %1481 = vmatpush1.msra.mxu0 0.0
        %1482 = vmatprep.subr.mxu0 0.0
        %1483 = vmatpush1.msra.mxu0 0.0
        %1484 = vmatprep.subr.mxu0 0.0
        %1485 = vmatpush1.msra.mxu0 0.0
        %1486 = vmatprep.subr.mxu0 0.0
        %1487 = vmatpush1.msra.mxu0 0.0
        %1488 = vmatprep.subr.mxu0 0.0
        %1489 = vmatpush1.msra.mxu0 0.0
        %1490 = vmatprep.subr.mxu0 0.0
        %1491 = vmatpush1.msra.mxu0 0.0
        %1492 = vmatprep.subr.mxu0 0.0
        %1493 = vmatpush1.msra.mxu0 0.0
        %1494 = vmatprep.subr.mxu0 0.0
        %1495 = vmatpush1.msra.mxu0 0.0
        %1496 = vmatprep.subr.mxu0 0.0
        %1497 = vmatpush1.msra.mxu0 0.0
        %1498 = vmatprep.subr.mxu0 0.0
        %1499 = vmatpush1.msra.mxu0 0.0
        %1500 = vmatprep.subr.mxu0 0.0
        %1501 = vmatpush1.msra.mxu0 0.0
        %1502 = vmatprep.subr.mxu0 0.0
        %1503 = vmatpush1.msra.mxu0 0.0
        %1504 = vmatprep.subr.mxu0 0.0
        %1505 = vmatpush1.msra.mxu0 0.0
        %1506 = vmatprep.subr.mxu0 0.0
        %1507 = vmatpush1.msra.mxu0 0.0
        %1508 = vmatprep.subr.mxu0 0.0
        %1509 = vmatpush1.msra.mxu0 0.0
        %1510 = vmatprep.subr.mxu0 0.0
        %1511 = vmatpush1.msra.mxu0 0.0
        %1512 = vmatprep.subr.mxu0 0.0
        %1513 = vmatpush1.msra.mxu0 0.0
        %1514 = vmatprep.subr.mxu0 0.0
        %1515 = vmatpush1.msra.mxu0 0.0
        %1516 = vmatprep.subr.mxu0 0.0
        %1517 = vmatpush1.msra.mxu0 0.0
        %1518 = vmatprep.subr.mxu0 0.0
        %1519 = vmatpush1.msra.mxu0 0.0
        %1520 = vmatprep.subr.mxu0 0.0
        %1521 = vmatpush1.msra.mxu0 0.0
        %1522 = vmatprep.subr.mxu0 0.0
        %1523 = vmatpush1.msra.mxu0 0.0
        %1524 = vmatprep.subr.mxu0 0.0
        %1525 = vmatpush1.msra.mxu0 0.0
        %1526 = vmatprep.subr.mxu0 0.0
        %1527 = vmatpush1.msra.mxu0 0.0
        %1528 = vmatprep.mubr.f32.mxu0 0.0
        %1529 = vmatmul.mubr.f32.gmra.mrb[0].mxu0 %v1339
        %v1530 = vpop.f32.mrb[0].mxu0
        %v1531 = vadd.f32 0.0, %v1530
        %v1532 = vpop.f32.mrb[0].mxu0
        %1533 = vmatprep.mubr.f32.mxu0 0.0
        %1534 = vmatmul.mubr.f32.gmra.mrb[0].mxu0 %v1342
        %v1535 = vpop.f32.mrb[0].mxu0
        %v1536 = vadd.f32 0.0, %v1535
        %v1537 = vpop.f32.mrb[0].mxu0
        %1538 = vdwg.mxu0
        %vm1539 = vcmask 64512
        %1540 = vst.msk [vmem:[#allocation4] sm:$0xff] %vm1539, %v1531
        %1541 = vst.msk [vmem:[#allocation4 + $0x8] sm:$0xff] %vm1539, %v1536
        %v1542 = vld [vmem:[%s14] sm:$0xff]
        %v1543 = vld [vmem:[%s14 + $0x8] sm:$0xff]
        %v1544 = vld [vmem:[%s14 + $0x10] sm:$0xff]
        %v1545 = vld [vmem:[%s14 + $0x18] sm:$0xff]
        %1546 = vmatprep.subr.mxu0 0.0
        %1547 = vmatpush1.msra.mxu0 %v1542
        %1548 = vmatprep.subr.mxu0 0.0
        %1549 = vmatpush1.msra.mxu0 %v1543
        %1550 = vmatprep.subr.mxu0 0.0
        %1551 = vmatpush1.msra.mxu0 %v1544
        %1552 = vmatprep.subr.mxu0 0.0
        %1553 = vmatpush1.msra.mxu0 %v1545
        %1554 = vmatprep.subr.mxu0 0.0
        %1555 = vmatpush1.msra.mxu0 0.0
        %1556 = vmatprep.subr.mxu0 0.0
        %1557 = vmatpush1.msra.mxu0 0.0
        %1558 = vmatprep.subr.mxu0 0.0
        %1559 = vmatpush1.msra.mxu0 0.0
        %1560 = vmatprep.subr.mxu0 0.0
        %1561 = vmatpush1.msra.mxu0 0.0
        %1562 = vmatprep.subr.mxu0 0.0
        %1563 = vmatpush1.msra.mxu0 0.0
        %1564 = vmatprep.subr.mxu0 0.0
        %1565 = vmatpush1.msra.mxu0 0.0
        %1566 = vmatprep.subr.mxu0 0.0
        %1567 = vmatpush1.msra.mxu0 0.0
        %1568 = vmatprep.subr.mxu0 0.0
        %1569 = vmatpush1.msra.mxu0 0.0
        %1570 = vmatprep.subr.mxu0 0.0
        %1571 = vmatpush1.msra.mxu0 0.0
        %1572 = vmatprep.subr.mxu0 0.0
        %1573 = vmatpush1.msra.mxu0 0.0
        %1574 = vmatprep.subr.mxu0 0.0
        %1575 = vmatpush1.msra.mxu0 0.0
        %1576 = vmatprep.subr.mxu0 0.0
        %1577 = vmatpush1.msra.mxu0 0.0
        %1578 = vmatprep.subr.mxu0 0.0
        %1579 = vmatpush1.msra.mxu0 0.0
        %1580 = vmatprep.subr.mxu0 0.0
        %1581 = vmatpush1.msra.mxu0 0.0
        %1582 = vmatprep.subr.mxu0 0.0
        %1583 = vmatpush1.msra.mxu0 0.0
        %1584 = vmatprep.subr.mxu0 0.0
        %1585 = vmatpush1.msra.mxu0 0.0
        %1586 = vmatprep.subr.mxu0 0.0
        %1587 = vmatpush1.msra.mxu0 0.0
        %1588 = vmatprep.subr.mxu0 0.0
        %1589 = vmatpush1.msra.mxu0 0.0
        %1590 = vmatprep.subr.mxu0 0.0
        %1591 = vmatpush1.msra.mxu0 0.0
        %1592 = vmatprep.subr.mxu0 0.0
        %1593 = vmatpush1.msra.mxu0 0.0
        %1594 = vmatprep.subr.mxu0 0.0
        %1595 = vmatpush1.msra.mxu0 0.0
        %1596 = vmatprep.subr.mxu0 0.0
        %1597 = vmatpush1.msra.mxu0 0.0
        %1598 = vmatprep.subr.mxu0 0.0
        %1599 = vmatpush1.msra.mxu0 0.0
        %1600 = vmatprep.subr.mxu0 0.0
        %1601 = vmatpush1.msra.mxu0 0.0
        %1602 = vmatprep.subr.mxu0 0.0
        %1603 = vmatpush1.msra.mxu0 0.0
        %1604 = vmatprep.subr.mxu0 0.0
        %1605 = vmatpush1.msra.mxu0 0.0
        %1606 = vmatprep.subr.mxu0 0.0
        %1607 = vmatpush1.msra.mxu0 0.0
        %1608 = vmatprep.subr.mxu0 0.0
        %1609 = vmatpush1.msra.mxu0 0.0
        %1610 = vmatprep.mubr.f32.mxu0 0.0
        %1611 = vmatmul.mubr.f32.gmra.mrb[0].mxu0 %v1339
        %v1612 = vpop.f32.mrb[0].mxu0
        %v1613 = vadd.f32 0.0, %v1612
        %v1614 = vpop.f32.mrb[0].mxu0
        %1615 = vmatprep.mubr.f32.mxu0 0.0
        %1616 = vmatmul.mubr.f32.gmra.mrb[0].mxu0 %v1342
        %v1617 = vpop.f32.mrb[0].mxu0
        %v1618 = vadd.f32 0.0, %v1617
        %v1619 = vpop.f32.mrb[0].mxu0
        %1620 = vdwg.mxu0
        %1621 = vst.msk [vmem:[#allocation5] sm:$0xff] %vm1539, %v1613
        %1622 = vst.msk [vmem:[#allocation5 + $0x8] sm:$0xff] %vm1539, %v1618
        %v1623 = vld [vmem:[%s15] sm:$0xff]
        %1624 = vst.msk [vmem:[#allocation7] sm:$0xff] %vm1270, 0.0
        %1625 = vst.msk [vmem:[#allocation7 + $0x8] sm:$0xff] %vm1270, 0.0
        loop: start=0, step=1, limit=8
        $region157: #{tpu_custom_call.1} parent=127 // loop_pre_header
          _
        $region158: #{tpu_custom_call.1} parent=127 // loop_header
          %s1627 = sphi 0, %s1631
          %p1628 = scmp.ge.s32.totalorder %s1627, 8
        $region159: #{tpu_custom_call.1} parent=127 // loop_header_branch
          %1630 = sbr.rel (%p1628) target = $region163
        $region160: #{tpu_custom_call.1} parent=127 // loop_body
          %s1632 = scalar_lea.vmem [#allocation3], %s1627
          %v1633 = vld [vmem:[%s1632] sm:$0x1]
          %v1634 = vld [vmem:[%s1632 + $0x8] sm:$0x1]
          %s1635 = scalar_lea.vmem [#allocation2], %s1627
          %v1636 = vld [vmem:[%s1635] sm:$0x1]
          %v1637 = vld [vmem:[%s1635 + $0x8] sm:$0x1]
          %s1638 = scalar_lea.vmem [#allocation4], %s1627
          %v1639 = vld [vmem:[%s1638] sm:$0x1]
          %v1640 = vld [vmem:[%s1638 + $0x8] sm:$0x1]
          %v1641 = vlaneseq
          %v1642 = vshrl.u32 %v1641, 7
          %v1643 = vsub.s32 0, %v1642
          %v1644 = vrot.slane %v1639, %v1643
          %1646 = vbcast.lane.b32.xlu0 %v1644, 256
          %v1647 = vpop.permute.xlu0 %1646
          %v1648 = vlaneseq
          %v1649 = vshrl.u32 %v1648, 7
          %v1650 = vsub.s32 0, %v1649
          %v1651 = vrot.slane %v1640, %v1650
          %1653 = vbcast.lane.b32.xlu0 %v1651, 256
          %v1654 = vpop.permute.xlu0 %1653
          %s1655 = scalar_lea.vmem [#allocation5], %s1627
          %v1656 = vld [vmem:[%s1655] sm:$0x1]
          %v1657 = vld [vmem:[%s1655 + $0x8] sm:$0x1]
          %v1658 = vlaneseq
          %v1659 = vshrl.u32 %v1658, 7
          %v1660 = vsub.s32 0, %v1659
          %v1661 = vrot.slane %v1656, %v1660
          %1663 = vbcast.lane.b32.xlu0 %v1661, 256
          %v1664 = vpop.permute.xlu0 %1663
          %v1665 = vlaneseq
          %v1666 = vshrl.u32 %v1665, 7
          %v1667 = vsub.s32 0, %v1666
          %v1668 = vrot.slane %v1657, %v1667
          %1670 = vbcast.lane.b32.xlu0 %v1668, 256
          %v1671 = vpop.permute.xlu0 %1670
          %v1672 = vlaneseq
          %v1673 = vshrl.u32 %v1672, 7
          %v1674 = vsub.s32 0, %v1673
          %v1675 = vrot.slane %v1633, %v1674
          %v1676 = vlaneseq
          %v1677 = vshrl.u32 %v1676, 7
          %v1678 = vsub.s32 0, %v1677
          %v1679 = vrot.slane %v1634, %v1678
          %v1680 = vmul.f32 %v1675, %v1623
          %v1681 = vmul.f32 %v1679, %v1623
          %v1682 = vmul.f32 %v1680, 1.442695
          %v1683 = vpow.pop %v1682
          %v1684 = vmul.f32 %v1681, 1.442695
          %v1685 = vpow.pop %v1684
          %v1686 = vld [vmem:[#allocation7] sm:$0xff]
          %v1687 = vld [vmem:[#allocation7 + $0x8] sm:$0xff]
          %v1688 = vmul.f32 %v1683, %v1686
          %v1689 = vmul.f32 %v1685, %v1687
          %v1690 = vmul.f32 %v1633, %v1636
          %v1691 = vmul.f32 %v1634, %v1637
          %v1692 = vlaneseq
          %v1693 = vshrl.u32 %v1692, 7
          %v1694 = vsub.s32 0, %v1693
          %v1695 = vrot.slane %v1690, %v1694
          %v1696 = vlaneseq
          %v1697 = vshrl.u32 %v1696, 7
          %v1698 = vsub.s32 0, %v1697
          %v1699 = vrot.slane %v1691, %v1698
          %v1700 = vmul.f32 %v1695, %v1647
          %v1701 = vmul.f32 %v1699, %v1654
          %v1702 = vadd.f32 %v1688, %v1700
          %v1703 = vadd.f32 %v1689, %v1701
          %1704 = vst.msk [vmem:[#allocation7] sm:$0xff] %vm1270, %v1702
          %1705 = vst.msk [vmem:[#allocation7 + $0x8] sm:$0xff] %vm1270, %v1703
          %v1706 = vmul.f32 %v1702, %v1664
          %v1707 = vmul.f32 %v1703, %v1671
          %v1708 = vsel %vm1270, %v1706, 0.0
          %v1709 = vrot.slane %v1708, 4
          %v1710 = vadd.f32 %v1708, %v1709
          %v1711 = vrot.slane %v1710, 2
          %v1712 = vadd.f32 %v1710, %v1711
          %v1713 = vrot.slane %v1712, 1
          %v1714 = vadd.f32 %v1712, %v1713
          %v1715 = vsel %vm1270, %v1707, 0.0
          %v1716 = vrot.slane %v1715, 4
          %v1717 = vadd.f32 %v1715, %v1716
          %v1718 = vrot.slane %v1717, 2
          %v1719 = vadd.f32 %v1717, %v1718
          %v1720 = vrot.slane %v1719, 1
          %v1721 = vadd.f32 %v1719, %v1720
          %s1722 = scalar_lea.vmem [#allocation6], %s1627
          %vm1723 = vcmask 253952
          %1724 = vst.msk [vmem:[%s1722] sm:$0x1] %vm1723, %v1714
          %1725 = vst.msk [vmem:[%s1722 + $0x8] sm:$0x1] %vm1723, %v1721
        $region161: #{tpu_custom_call.1} parent=127 // loop_footer
          %s1631 = sadd.s32 1, %s1627
        $region162: #{tpu_custom_call.1} parent=127 // loop_footer_branch
          %1626 = sbr.rel target = $region158
        $region163: #{tpu_custom_call.1} parent=127 // loop_exit
          _
        %v1726 = vld [vmem:[#allocation6] sm:$0xff]
        %v1727 = vld [vmem:[#allocation6 + $0x8] sm:$0xff]
        %v1728 = vld [vmem:[#allocation2] sm:$0xff]
        %v1729 = vld [vmem:[#allocation2 + $0x8] sm:$0xff]
        %v1730 = vld [vmem:[%s16] sm:$0x1]
        %v1732 = vlaneseq
        %v1733 = vshrl.u32 %v1732, 7
        %v1734 = vsub.s32 0, %v1733
        %v1735 = vrot.slane %v1730, %v1734
        %v1737 = vmul.f32 %v1728, %v1735
        %v1738 = vmul.f32 %v1729, %v1735
        %v1739 = vadd.f32 %v1726, %v1737
        %v1740 = vadd.f32 %v1727, %v1738
        %v1741 = vsub.f32 0.0, %v1258
        %v1742 = vsub.f32 0.0, %v1263
        %v1743 = vmul.f32 %v1741, 1.442695
        %v1744 = vpow.pop %v1743
        %v1745 = vmul.f32 %v1742, 1.442695
        %v1746 = vpow.pop %v1745
        %v1747 = vadd.f32 %v1744, 1.0
        %v1748 = vadd.f32 %v1746, 1.0
        %v1749 = vrcp.pop %v1747
        %v1750 = vmul.f32 1.0, %v1749
        %v1751 = vrcp.pop %v1748
        %v1752 = vmul.f32 1.0, %v1751
        %v1753 = vmul.f32 %v1258, %v1750
        %v1754 = vmul.f32 %v1263, %v1752
        %v1755 = vmul.f32 %v1739, %v1753
        %v1756 = vmul.f32 %v1740, %v1754
        %v1757 = vld [vmem:[%s17] sm:$0xff]
        %v1758 = vld [vmem:[%s17 + $0x8] sm:$0xff]
        %v1759 = vld [vmem:[%s17 + $0x10] sm:$0xff]
        %v1760 = vld [vmem:[%s17 + $0x18] sm:$0xff]
        %v1762 = vsel %vm1270, %v1755, 0
        %v1765 = vsel %vm1270, %v1756, 0
        %1767 = vmatprep.subr.mxu0 0.0
        %1768 = vmatpush1.msra.mxu0 %v1757
        %1769 = vmatprep.subr.mxu0 0.0
        %1770 = vmatpush1.msra.mxu0 %v1758
        %1771 = vmatprep.subr.mxu0 0.0
        %1772 = vmatpush1.msra.mxu0 %v1759
        %1773 = vmatprep.subr.mxu0 0.0
        %1774 = vmatpush1.msra.mxu0 %v1760
        %1775 = vmatprep.subr.mxu0 0.0
        %1776 = vmatpush1.msra.mxu0 0.0
        %1777 = vmatprep.subr.mxu0 0.0
        %1778 = vmatpush1.msra.mxu0 0.0
        %1779 = vmatprep.subr.mxu0 0.0
        %1780 = vmatpush1.msra.mxu0 0.0
        %1781 = vmatprep.subr.mxu0 0.0
        %1782 = vmatpush1.msra.mxu0 0.0
        %1783 = vmatprep.subr.mxu0 0.0
        %1784 = vmatpush1.msra.mxu0 0.0
        %1785 = vmatprep.subr.mxu0 0.0
        %1786 = vmatpush1.msra.mxu0 0.0
        %1787 = vmatprep.subr.mxu0 0.0
        %1788 = vmatpush1.msra.mxu0 0.0
        %1789 = vmatprep.subr.mxu0 0.0
        %1790 = vmatpush1.msra.mxu0 0.0
        %1791 = vmatprep.subr.mxu0 0.0
        %1792 = vmatpush1.msra.mxu0 0.0
        %1793 = vmatprep.subr.mxu0 0.0
        %1794 = vmatpush1.msra.mxu0 0.0
        %1795 = vmatprep.subr.mxu0 0.0
        %1796 = vmatpush1.msra.mxu0 0.0
        %1797 = vmatprep.subr.mxu0 0.0
        %1798 = vmatpush1.msra.mxu0 0.0
        %1799 = vmatprep.subr.mxu0 0.0
        %1800 = vmatpush1.msra.mxu0 0.0
        %1801 = vmatprep.subr.mxu0 0.0
        %1802 = vmatpush1.msra.mxu0 0.0
        %1803 = vmatprep.subr.mxu0 0.0
        %1804 = vmatpush1.msra.mxu0 0.0
        %1805 = vmatprep.subr.mxu0 0.0
        %1806 = vmatpush1.msra.mxu0 0.0
        %1807 = vmatprep.subr.mxu0 0.0
        %1808 = vmatpush1.msra.mxu0 0.0
        %1809 = vmatprep.subr.mxu0 0.0
        %1810 = vmatpush1.msra.mxu0 0.0
        %1811 = vmatprep.subr.mxu0 0.0
        %1812 = vmatpush1.msra.mxu0 0.0
        %1813 = vmatprep.subr.mxu0 0.0
        %1814 = vmatpush1.msra.mxu0 0.0
        %1815 = vmatprep.subr.mxu0 0.0
        %1816 = vmatpush1.msra.mxu0 0.0
        %1817 = vmatprep.subr.mxu0 0.0
        %1818 = vmatpush1.msra.mxu0 0.0
        %1819 = vmatprep.subr.mxu0 0.0
        %1820 = vmatpush1.msra.mxu0 0.0
        %1821 = vmatprep.subr.mxu0 0.0
        %1822 = vmatpush1.msra.mxu0 0.0
        %1823 = vmatprep.subr.mxu0 0.0
        %1824 = vmatpush1.msra.mxu0 0.0
        %1825 = vmatprep.subr.mxu0 0.0
        %1826 = vmatpush1.msra.mxu0 0.0
        %1827 = vmatprep.subr.mxu0 0.0
        %1828 = vmatpush1.msra.mxu0 0.0
        %1829 = vmatprep.subr.mxu0 0.0
        %1830 = vmatpush1.msra.mxu0 0.0
        %1831 = vmatprep.mubr.f32.mxu0 0.0
        %1832 = vmatmul.mubr.f32.gmra.mrb[0].mxu0 %v1762
        %v1833 = vpop.f32.mrb[0].mxu0
        %v1834 = vadd.f32 0.0, %v1833
        %v1835 = vpop.f32.mrb[0].mxu0
        %1836 = vmatprep.mubr.f32.mxu0 0.0
        %1837 = vmatmul.mubr.f32.gmra.mrb[0].mxu0 %v1765
        %v1838 = vpop.f32.mrb[0].mxu0
        %v1839 = vadd.f32 0.0, %v1838
        %v1840 = vpop.f32.mrb[0].mxu0
        %1841 = vdwg.mxu0
        %s1842 = scalar_lea.vmem %s7, 16
        %v1843 = vld [vmem:[%s1842] sm:$0xff]
        %v1844 = vld [vmem:[%s1842 + $0x8] sm:$0xff]
        %v1846 = vsel %vm1024, %v1104, 0
        %v1849 = vsel %vm1024, %v1105, 0
        %1851 = vmatprep.subr.mxu0 0.0
        %1852 = vmatpush1.msra.mxu0 %v1843
        %1853 = vmatprep.subr.mxu0 0.0
        %1854 = vmatpush1.msra.mxu0 %v1844
        %1855 = vmatprep.subr.mxu0 0.0
        %1856 = vmatpush1.msra.mxu0 0.0
        %1857 = vmatprep.subr.mxu0 0.0
        %1858 = vmatpush1.msra.mxu0 0.0
        %1859 = vmatprep.subr.mxu0 0.0
        %1860 = vmatpush1.msra.mxu0 0.0
        %1861 = vmatprep.subr.mxu0 0.0
        %1862 = vmatpush1.msra.mxu0 0.0
        %1863 = vmatprep.subr.mxu0 0.0
        %1864 = vmatpush1.msra.mxu0 0.0
        %1865 = vmatprep.subr.mxu0 0.0
        %1866 = vmatpush1.msra.mxu0 0.0
        %1867 = vmatprep.subr.mxu0 0.0
        %1868 = vmatpush1.msra.mxu0 0.0
        %1869 = vmatprep.subr.mxu0 0.0
        %1870 = vmatpush1.msra.mxu0 0.0
        %1871 = vmatprep.subr.mxu0 0.0
        %1872 = vmatpush1.msra.mxu0 0.0
        %1873 = vmatprep.subr.mxu0 0.0
        %1874 = vmatpush1.msra.mxu0 0.0
        %1875 = vmatprep.subr.mxu0 0.0
        %1876 = vmatpush1.msra.mxu0 0.0
        %1877 = vmatprep.subr.mxu0 0.0
        %1878 = vmatpush1.msra.mxu0 0.0
        %1879 = vmatprep.subr.mxu0 0.0
        %1880 = vmatpush1.msra.mxu0 0.0
        %1881 = vmatprep.subr.mxu0 0.0
        %1882 = vmatpush1.msra.mxu0 0.0
        %1883 = vmatprep.subr.mxu0 0.0
        %1884 = vmatpush1.msra.mxu0 0.0
        %1885 = vmatprep.subr.mxu0 0.0
        %1886 = vmatpush1.msra.mxu0 0.0
        %1887 = vmatprep.subr.mxu0 0.0
        %1888 = vmatpush1.msra.mxu0 0.0
        %1889 = vmatprep.subr.mxu0 0.0
        %1890 = vmatpush1.msra.mxu0 0.0
        %1891 = vmatprep.subr.mxu0 0.0
        %1892 = vmatpush1.msra.mxu0 0.0
        %1893 = vmatprep.subr.mxu0 0.0
        %1894 = vmatpush1.msra.mxu0 0.0
        %1895 = vmatprep.subr.mxu0 0.0
        %1896 = vmatpush1.msra.mxu0 0.0
        %1897 = vmatprep.subr.mxu0 0.0
        %1898 = vmatpush1.msra.mxu0 0.0
        %1899 = vmatprep.subr.mxu0 0.0
        %1900 = vmatpush1.msra.mxu0 0.0
        %1901 = vmatprep.subr.mxu0 0.0
        %1902 = vmatpush1.msra.mxu0 0.0
        %1903 = vmatprep.subr.mxu0 0.0
        %1904 = vmatpush1.msra.mxu0 0.0
        %1905 = vmatprep.subr.mxu0 0.0
        %1906 = vmatpush1.msra.mxu0 0.0
        %1907 = vmatprep.subr.mxu0 0.0
        %1908 = vmatpush1.msra.mxu0 0.0
        %1909 = vmatprep.subr.mxu0 0.0
        %1910 = vmatpush1.msra.mxu0 0.0
        %1911 = vmatprep.subr.mxu0 0.0
        %1912 = vmatpush1.msra.mxu0 0.0
        %1913 = vmatprep.subr.mxu0 0.0
        %1914 = vmatpush1.msra.mxu0 0.0
        %1915 = vmatprep.mubr.f32.mxu0 0.0
        %1916 = vmatmul.mubr.f32.gmra.mrb[0].mxu0 %v1846
        %v1917 = vpop.f32.mrb[0].mxu0
        %v1918 = vadd.f32 0.0, %v1917
        %v1919 = vpop.f32.mrb[0].mxu0
        %1920 = vmatprep.mubr.f32.mxu0 0.0
        %1921 = vmatmul.mubr.f32.gmra.mrb[0].mxu0 %v1849
        %v1922 = vpop.f32.mrb[0].mxu0
        %v1923 = vadd.f32 0.0, %v1922
        %v1924 = vpop.f32.mrb[0].mxu0
        %1925 = vdwg.mxu0
        %s1926 = scalar_lea.vmem %s8, 16
        %v1927 = vld [vmem:[%s1926] sm:$0xff]
        %v1928 = vld [vmem:[%s1926 + $0x8] sm:$0xff]
        %1929 = vmatprep.subr.mxu0 0.0
        %1930 = vmatpush1.msra.mxu0 %v1927
        %1931 = vmatprep.subr.mxu0 0.0
        %1932 = vmatpush1.msra.mxu0 %v1928
        %1933 = vmatprep.subr.mxu0 0.0
        %1934 = vmatpush1.msra.mxu0 0.0
        %1935 = vmatprep.subr.mxu0 0.0
        %1936 = vmatpush1.msra.mxu0 0.0
        %1937 = vmatprep.subr.mxu0 0.0
        %1938 = vmatpush1.msra.mxu0 0.0
        %1939 = vmatprep.subr.mxu0 0.0
        %1940 = vmatpush1.msra.mxu0 0.0
        %1941 = vmatprep.subr.mxu0 0.0
        %1942 = vmatpush1.msra.mxu0 0.0
        %1943 = vmatprep.subr.mxu0 0.0
        %1944 = vmatpush1.msra.mxu0 0.0
        %1945 = vmatprep.subr.mxu0 0.0
        %1946 = vmatpush1.msra.mxu0 0.0
        %1947 = vmatprep.subr.mxu0 0.0
        %1948 = vmatpush1.msra.mxu0 0.0
        %1949 = vmatprep.subr.mxu0 0.0
        %1950 = vmatpush1.msra.mxu0 0.0
        %1951 = vmatprep.subr.mxu0 0.0
        %1952 = vmatpush1.msra.mxu0 0.0
        %1953 = vmatprep.subr.mxu0 0.0
        %1954 = vmatpush1.msra.mxu0 0.0
        %1955 = vmatprep.subr.mxu0 0.0
        %1956 = vmatpush1.msra.mxu0 0.0
        %1957 = vmatprep.subr.mxu0 0.0
        %1958 = vmatpush1.msra.mxu0 0.0
        %1959 = vmatprep.subr.mxu0 0.0
        %1960 = vmatpush1.msra.mxu0 0.0
        %1961 = vmatprep.subr.mxu0 0.0
        %1962 = vmatpush1.msra.mxu0 0.0
        %1963 = vmatprep.subr.mxu0 0.0
        %1964 = vmatpush1.msra.mxu0 0.0
        %1965 = vmatprep.subr.mxu0 0.0
        %1966 = vmatpush1.msra.mxu0 0.0
        %1967 = vmatprep.subr.mxu0 0.0
        %1968 = vmatpush1.msra.mxu0 0.0
        %1969 = vmatprep.subr.mxu0 0.0
        %1970 = vmatpush1.msra.mxu0 0.0
        %1971 = vmatprep.subr.mxu0 0.0
        %1972 = vmatpush1.msra.mxu0 0.0
        %1973 = vmatprep.subr.mxu0 0.0
        %1974 = vmatpush1.msra.mxu0 0.0
        %1975 = vmatprep.subr.mxu0 0.0
        %1976 = vmatpush1.msra.mxu0 0.0
        %1977 = vmatprep.subr.mxu0 0.0
        %1978 = vmatpush1.msra.mxu0 0.0
        %1979 = vmatprep.subr.mxu0 0.0
        %1980 = vmatpush1.msra.mxu0 0.0
        %1981 = vmatprep.subr.mxu0 0.0
        %1982 = vmatpush1.msra.mxu0 0.0
        %1983 = vmatprep.subr.mxu0 0.0
        %1984 = vmatpush1.msra.mxu0 0.0
        %1985 = vmatprep.subr.mxu0 0.0
        %1986 = vmatpush1.msra.mxu0 0.0
        %1987 = vmatprep.subr.mxu0 0.0
        %1988 = vmatpush1.msra.mxu0 0.0
        %1989 = vmatprep.subr.mxu0 0.0
        %1990 = vmatpush1.msra.mxu0 0.0
        %1991 = vmatprep.subr.mxu0 0.0
        %1992 = vmatpush1.msra.mxu0 0.0
        %1993 = vmatprep.mubr.f32.mxu0 0.0
        %1994 = vmatmul.mubr.f32.gmra.mrb[0].mxu0 %v1846
        %v1995 = vpop.f32.mrb[0].mxu0
        %v1996 = vadd.f32 0.0, %v1995
        %v1997 = vpop.f32.mrb[0].mxu0
        %1998 = vmatprep.mubr.f32.mxu0 0.0
        %1999 = vmatmul.mubr.f32.gmra.mrb[0].mxu0 %v1849
        %v2000 = vpop.f32.mrb[0].mxu0
        %v2001 = vadd.f32 0.0, %v2000
        %v2002 = vpop.f32.mrb[0].mxu0
        %2003 = vdwg.mxu0
        %s2004 = scalar_lea.vmem [#allocation18], 4
        %v2005 = vld [vmem:[%s2004] sm:$0xf]
        %2006 = vst.msk [vmem:[#allocation8] sm:$0x7] %vm1267, 0.0
        %2007 = vst.msk [vmem:[#allocation8 + $0x10] sm:$0x7] %vm1267, 0.0
        %2008 = vst.msk [vmem:[#allocation8 + $0x3] sm:$0xff] %vm1270, %v1918
        %2009 = vst.msk [vmem:[#allocation8 + $0x13] sm:$0xff] %vm1270, %v1923
        %v2010 = vlaneseq
        %v2011 = vshrl.u32 %v2010, 7
        %v2012 = vsub.s32 3, %v2011
        %v2013 = vrot.slane %v2005, %v2012
        %v2014 = vmul.f32 %v1918, %v2013
        %v2015 = vmul.f32 %v1923, %v2013
        %v2016 = vld [vmem:[#allocation8] sm:$0xff]
        %v2017 = vld [vmem:[#allocation8 + $0x10] sm:$0xff]
        %v2018 = vlaneseq
        %v2019 = vshrl.u32 %v2018, 7
        %v2020 = vsub.s32 0, %v2019
        %v2021 = vrot.slane %v2005, %v2020
        %v2022 = vmul.f32 %v2016, %v2021
        %v2023 = vmul.f32 %v2017, %v2021
        %v2024 = vadd.f32 %v2014, %v2022
        %v2025 = vadd.f32 %v2015, %v2023
        %v2026 = vld [vmem:[#allocation8 + $0x1] sm:$0xff]
        %v2027 = vld [vmem:[#allocation8 + $0x11] sm:$0xff]
        %v2028 = vlaneseq
        %v2029 = vshrl.u32 %v2028, 7
        %v2030 = vsub.s32 1, %v2029
        %v2031 = vrot.slane %v2005, %v2030
        %v2032 = vmul.f32 %v2026, %v2031
        %v2033 = vmul.f32 %v2027, %v2031
        %v2034 = vadd.f32 %v2024, %v2032
        %v2035 = vadd.f32 %v2025, %v2033
        %v2036 = vld [vmem:[#allocation8 + $0x2] sm:$0xff]
        %v2037 = vld [vmem:[#allocation8 + $0x12] sm:$0xff]
        %v2038 = vlaneseq
        %v2039 = vshrl.u32 %v2038, 7
        %v2040 = vsub.s32 2, %v2039
        %v2041 = vrot.slane %v2005, %v2040
        %v2042 = vmul.f32 %v2036, %v2041
        %v2043 = vmul.f32 %v2037, %v2041
        %v2044 = vadd.f32 %v2034, %v2042
        %v2045 = vadd.f32 %v2035, %v2043
        %s2046 = scalar_lea.vmem [#allocation19], 1
        %v2047 = vld [vmem:[%s2046] sm:$0x1]
        %v2049 = vlaneseq
        %v2050 = vshrl.u32 %v2049, 7
        %v2051 = vsub.s32 0, %v2050
        %v2052 = vrot.slane %v2047, %v2051
        %v2054 = vadd.f32 %v2044, %v2052
        %v2055 = vadd.f32 %v2045, %v2052
        %v2056 = vsub.f32 0.0, %v2054
        %v2057 = vsub.f32 0.0, %v2055
        %v2058 = vmul.f32 %v2056, 1.442695
        %v2059 = vpow.pop %v2058
        %v2060 = vmul.f32 %v2057, 1.442695
        %v2061 = vpow.pop %v2060
        %v2062 = vadd.f32 %v2059, 1.0
        %v2063 = vadd.f32 %v2061, 1.0
        %v2064 = vrcp.pop %v2062
        %v2065 = vmul.f32 1.0, %v2064
        %v2066 = vrcp.pop %v2063
        %v2067 = vmul.f32 1.0, %v2066
        %v2068 = vmul.f32 %v2054, %v2065
        %v2069 = vmul.f32 %v2055, %v2067
        %2070 = vst.msk [vmem:[#allocation2] sm:$0xff] %vm1270, %v2068
        %2071 = vst.msk [vmem:[#allocation2 + $0x8] sm:$0xff] %vm1270, %v2069
        %s2072 = scalar_lea.vmem %s11, 32
        %v2073 = vld [vmem:[%s2072] sm:$0xff]
        %v2074 = vld [vmem:[%s2072 + $0x8] sm:$0xff]
        %v2075 = vld [vmem:[%s2072 + $0x10] sm:$0xff]
        %v2076 = vld [vmem:[%s2072 + $0x18] sm:$0xff]
        %v2078 = vsel %vm1270, %v2068, 0
        %v2081 = vsel %vm1270, %v2069, 0
        %2083 = vmatprep.subr.mxu0 0.0
        %2084 = vmatpush1.msra.mxu0 %v2073
        %2085 = vmatprep.subr.mxu0 0.0
        %2086 = vmatpush1.msra.mxu0 %v2074
        %2087 = vmatprep.subr.mxu0 0.0
        %2088 = vmatpush1.msra.mxu0 %v2075
        %2089 = vmatprep.subr.mxu0 0.0
        %2090 = vmatpush1.msra.mxu0 %v2076
        %2091 = vmatprep.subr.mxu0 0.0
        %2092 = vmatpush1.msra.mxu0 0.0
        %2093 = vmatprep.subr.mxu0 0.0
        %2094 = vmatpush1.msra.mxu0 0.0
        %2095 = vmatprep.subr.mxu0 0.0
        %2096 = vmatpush1.msra.mxu0 0.0
        %2097 = vmatprep.subr.mxu0 0.0
        %2098 = vmatpush1.msra.mxu0 0.0
        %2099 = vmatprep.subr.mxu0 0.0
        %2100 = vmatpush1.msra.mxu0 0.0
        %2101 = vmatprep.subr.mxu0 0.0
        %2102 = vmatpush1.msra.mxu0 0.0
        %2103 = vmatprep.subr.mxu0 0.0
        %2104 = vmatpush1.msra.mxu0 0.0
        %2105 = vmatprep.subr.mxu0 0.0
        %2106 = vmatpush1.msra.mxu0 0.0
        %2107 = vmatprep.subr.mxu0 0.0
        %2108 = vmatpush1.msra.mxu0 0.0
        %2109 = vmatprep.subr.mxu0 0.0
        %2110 = vmatpush1.msra.mxu0 0.0
        %2111 = vmatprep.subr.mxu0 0.0
        %2112 = vmatpush1.msra.mxu0 0.0
        %2113 = vmatprep.subr.mxu0 0.0
        %2114 = vmatpush1.msra.mxu0 0.0
        %2115 = vmatprep.subr.mxu0 0.0
        %2116 = vmatpush1.msra.mxu0 0.0
        %2117 = vmatprep.subr.mxu0 0.0
        %2118 = vmatpush1.msra.mxu0 0.0
        %2119 = vmatprep.subr.mxu0 0.0
        %2120 = vmatpush1.msra.mxu0 0.0
        %2121 = vmatprep.subr.mxu0 0.0
        %2122 = vmatpush1.msra.mxu0 0.0
        %2123 = vmatprep.subr.mxu0 0.0
        %2124 = vmatpush1.msra.mxu0 0.0
        %2125 = vmatprep.subr.mxu0 0.0
        %2126 = vmatpush1.msra.mxu0 0.0
        %2127 = vmatprep.subr.mxu0 0.0
        %2128 = vmatpush1.msra.mxu0 0.0
        %2129 = vmatprep.subr.mxu0 0.0
        %2130 = vmatpush1.msra.mxu0 0.0
        %2131 = vmatprep.subr.mxu0 0.0
        %2132 = vmatpush1.msra.mxu0 0.0
        %2133 = vmatprep.subr.mxu0 0.0
        %2134 = vmatpush1.msra.mxu0 0.0
        %2135 = vmatprep.subr.mxu0 0.0
        %2136 = vmatpush1.msra.mxu0 0.0
        %2137 = vmatprep.subr.mxu0 0.0
        %2138 = vmatpush1.msra.mxu0 0.0
        %2139 = vmatprep.subr.mxu0 0.0
        %2140 = vmatpush1.msra.mxu0 0.0
        %2141 = vmatprep.subr.mxu0 0.0
        %2142 = vmatpush1.msra.mxu0 0.0
        %2143 = vmatprep.subr.mxu0 0.0
        %2144 = vmatpush1.msra.mxu0 0.0
        %2145 = vmatprep.subr.mxu0 0.0
        %2146 = vmatpush1.msra.mxu0 0.0
        %2147 = vmatprep.mubr.f32.mxu0 0.0
        %2148 = vmatmul.mubr.f32.gmra.mrb[0].mxu0 %v2078
        %v2149 = vpop.f32.mrb[0].mxu0
        %v2150 = vadd.f32 0.0, %v2149
        %v2151 = vpop.f32.mrb[0].mxu0
        %2152 = vmatprep.mubr.f32.mxu0 0.0
        %2153 = vmatmul.mubr.f32.gmra.mrb[0].mxu0 %v2081
        %v2154 = vpop.f32.mrb[0].mxu0
        %v2155 = vadd.f32 0.0, %v2154
        %v2156 = vpop.f32.mrb[0].mxu0
        %2157 = vdwg.mxu0
        %s2158 = scalar_lea.vmem [#allocation21], 1
        %v2159 = vld [vmem:[%s2158] sm:$0x1]
        %v2161 = vlaneseq
        %v2162 = vshrl.u32 %v2161, 7
        %v2163 = vsub.s32 0, %v2162
        %v2164 = vrot.slane %v2159, %v2163
        %v2166 = vadd.f32 %v2150, %v2164
        %v2167 = vadd.f32 %v2155, %v2164
        %v2168 = vmax.f32 %v2166, 0.0
        %v2169 = vmax.f32 %v2167, 0.0
        %v2170 = vand.u32 2147483647, %v2166
        %v2171 = vand.u32 2147483647, %v2167
        %v2172 = vsub.f32 0.0, %v2170
        %v2173 = vsub.f32 0.0, %v2171
        %v2174 = vmul.f32 %v2172, 1.442695
        %v2175 = vpow.pop %v2174
        %v2176 = vmul.f32 %v2173, 1.442695
        %v2177 = vpow.pop %v2176
        %v2178 = vadd.f32 %v2175, 1.0
        %v2179 = vlog2.pop %v2178
        %v2180 = vmul.f32 %v2179, 0.6931472
        %v2181 = vmul.f32 -0.5, %v2175
        %v2182 = vadd.f32 %v2181, 1.0
        %v2183 = vmul.f32 %v2182, %v2175
        %v2184 = vand.u32 2147483647, %v2175
        %vm2185 = vcmp.lt.f32.partialorder %v2184, 0.0004427343
        %v2186 = vsel %vm2185, %v2183, %v2180
        %v2187 = vadd.f32 %v2177, 1.0
        %v2188 = vlog2.pop %v2187
        %v2189 = vmul.f32 %v2188, 0.6931472
        %v2190 = vmul.f32 -0.5, %v2177
        %v2191 = vadd.f32 %v2190, 1.0
        %v2192 = vmul.f32 %v2191, %v2177
        %v2193 = vand.u32 2147483647, %v2177
        %vm2194 = vcmp.lt.f32.partialorder %v2193, 0.0004427343
        %v2195 = vsel %vm2194, %v2192, %v2189
        %v2196 = vadd.f32 %v2168, %v2186
        %v2197 = vadd.f32 %v2169, %v2195
        %2198 = vst.msk [vmem:[#allocation3] sm:$0xff] %vm1270, %v2196
        %2199 = vst.msk [vmem:[#allocation3 + $0x8] sm:$0xff] %vm1270, %v2197
        %s2200 = scalar_lea.vmem %s13, 32
        %v2201 = vld [vmem:[%s2200] sm:$0xff]
        %v2202 = vld [vmem:[%s2200 + $0x8] sm:$0xff]
        %v2203 = vld [vmem:[%s2200 + $0x10] sm:$0xff]
        %v2204 = vld [vmem:[%s2200 + $0x18] sm:$0xff]
        %2205 = vmatprep.subr.mxu0 0.0
        %2206 = vmatpush1.msra.mxu0 %v2201
        %2207 = vmatprep.subr.mxu0 0.0
        %2208 = vmatpush1.msra.mxu0 %v2202
        %2209 = vmatprep.subr.mxu0 0.0
        %2210 = vmatpush1.msra.mxu0 %v2203
        %2211 = vmatprep.subr.mxu0 0.0
        %2212 = vmatpush1.msra.mxu0 %v2204
        %2213 = vmatprep.subr.mxu0 0.0
        %2214 = vmatpush1.msra.mxu0 0.0
        %2215 = vmatprep.subr.mxu0 0.0
        %2216 = vmatpush1.msra.mxu0 0.0
        %2217 = vmatprep.subr.mxu0 0.0
        %2218 = vmatpush1.msra.mxu0 0.0
        %2219 = vmatprep.subr.mxu0 0.0
        %2220 = vmatpush1.msra.mxu0 0.0
        %2221 = vmatprep.subr.mxu0 0.0
        %2222 = vmatpush1.msra.mxu0 0.0
        %2223 = vmatprep.subr.mxu0 0.0
        %2224 = vmatpush1.msra.mxu0 0.0
        %2225 = vmatprep.subr.mxu0 0.0
        %2226 = vmatpush1.msra.mxu0 0.0
        %2227 = vmatprep.subr.mxu0 0.0
        %2228 = vmatpush1.msra.mxu0 0.0
        %2229 = vmatprep.subr.mxu0 0.0
        %2230 = vmatpush1.msra.mxu0 0.0
        %2231 = vmatprep.subr.mxu0 0.0
        %2232 = vmatpush1.msra.mxu0 0.0
        %2233 = vmatprep.subr.mxu0 0.0
        %2234 = vmatpush1.msra.mxu0 0.0
        %2235 = vmatprep.subr.mxu0 0.0
        %2236 = vmatpush1.msra.mxu0 0.0
        %2237 = vmatprep.subr.mxu0 0.0
        %2238 = vmatpush1.msra.mxu0 0.0
        %2239 = vmatprep.subr.mxu0 0.0
        %2240 = vmatpush1.msra.mxu0 0.0
        %2241 = vmatprep.subr.mxu0 0.0
        %2242 = vmatpush1.msra.mxu0 0.0
        %2243 = vmatprep.subr.mxu0 0.0
        %2244 = vmatpush1.msra.mxu0 0.0
        %2245 = vmatprep.subr.mxu0 0.0
        %2246 = vmatpush1.msra.mxu0 0.0
        %2247 = vmatprep.subr.mxu0 0.0
        %2248 = vmatpush1.msra.mxu0 0.0
        %2249 = vmatprep.subr.mxu0 0.0
        %2250 = vmatpush1.msra.mxu0 0.0
        %2251 = vmatprep.subr.mxu0 0.0
        %2252 = vmatpush1.msra.mxu0 0.0
        %2253 = vmatprep.subr.mxu0 0.0
        %2254 = vmatpush1.msra.mxu0 0.0
        %2255 = vmatprep.subr.mxu0 0.0
        %2256 = vmatpush1.msra.mxu0 0.0
        %2257 = vmatprep.subr.mxu0 0.0
        %2258 = vmatpush1.msra.mxu0 0.0
        %2259 = vmatprep.subr.mxu0 0.0
        %2260 = vmatpush1.msra.mxu0 0.0
        %2261 = vmatprep.subr.mxu0 0.0
        %2262 = vmatpush1.msra.mxu0 0.0
        %2263 = vmatprep.subr.mxu0 0.0
        %2264 = vmatpush1.msra.mxu0 0.0
        %2265 = vmatprep.subr.mxu0 0.0
        %2266 = vmatpush1.msra.mxu0 0.0
        %2267 = vmatprep.subr.mxu0 0.0
        %2268 = vmatpush1.msra.mxu0 0.0
        %2269 = vmatprep.mubr.f32.mxu0 0.0
        %2270 = vmatmul.mubr.f32.gmra.mrb[0].mxu0 %v2078
        %v2271 = vpop.f32.mrb[0].mxu0
        %v2272 = vadd.f32 0.0, %v2271
        %v2273 = vpop.f32.mrb[0].mxu0
        %2274 = vmatprep.mubr.f32.mxu0 0.0
        %2275 = vmatmul.mubr.f32.gmra.mrb[0].mxu0 %v2081
        %v2276 = vpop.f32.mrb[0].mxu0
        %v2277 = vadd.f32 0.0, %v2276
        %v2278 = vpop.f32.mrb[0].mxu0
        %2279 = vdwg.mxu0
        %2280 = vst.msk [vmem:[#allocation4] sm:$0xff] %vm1539, %v2272
        %2281 = vst.msk [vmem:[#allocation4 + $0x8] sm:$0xff] %vm1539, %v2277
        %s2282 = scalar_lea.vmem %s14, 32
        %v2283 = vld [vmem:[%s2282] sm:$0xff]
        %v2284 = vld [vmem:[%s2282 + $0x8] sm:$0xff]
        %v2285 = vld [vmem:[%s2282 + $0x10] sm:$0xff]
        %v2286 = vld [vmem:[%s2282 + $0x18] sm:$0xff]
        %2287 = vmatprep.subr.mxu0 0.0
        %2288 = vmatpush1.msra.mxu0 %v2283
        %2289 = vmatprep.subr.mxu0 0.0
        %2290 = vmatpush1.msra.mxu0 %v2284
        %2291 = vmatprep.subr.mxu0 0.0
        %2292 = vmatpush1.msra.mxu0 %v2285
        %2293 = vmatprep.subr.mxu0 0.0
        %2294 = vmatpush1.msra.mxu0 %v2286
        %2295 = vmatprep.subr.mxu0 0.0
        %2296 = vmatpush1.msra.mxu0 0.0
        %2297 = vmatprep.subr.mxu0 0.0
        %2298 = vmatpush1.msra.mxu0 0.0
        %2299 = vmatprep.subr.mxu0 0.0
        %2300 = vmatpush1.msra.mxu0 0.0
        %2301 = vmatprep.subr.mxu0 0.0
        %2302 = vmatpush1.msra.mxu0 0.0
        %2303 = vmatprep.subr.mxu0 0.0
        %2304 = vmatpush1.msra.mxu0 0.0
        %2305 = vmatprep.subr.mxu0 0.0
        %2306 = vmatpush1.msra.mxu0 0.0
        %2307 = vmatprep.subr.mxu0 0.0
        %2308 = vmatpush1.msra.mxu0 0.0
        %2309 = vmatprep.subr.mxu0 0.0
        %2310 = vmatpush1.msra.mxu0 0.0
        %2311 = vmatprep.subr.mxu0 0.0
        %2312 = vmatpush1.msra.mxu0 0.0
        %2313 = vmatprep.subr.mxu0 0.0
        %2314 = vmatpush1.msra.mxu0 0.0
        %2315 = vmatprep.subr.mxu0 0.0
        %2316 = vmatpush1.msra.mxu0 0.0
        %2317 = vmatprep.subr.mxu0 0.0
        %2318 = vmatpush1.msra.mxu0 0.0
        %2319 = vmatprep.subr.mxu0 0.0
        %2320 = vmatpush1.msra.mxu0 0.0
        %2321 = vmatprep.subr.mxu0 0.0
        %2322 = vmatpush1.msra.mxu0 0.0
        %2323 = vmatprep.subr.mxu0 0.0
        %2324 = vmatpush1.msra.mxu0 0.0
        %2325 = vmatprep.subr.mxu0 0.0
        %2326 = vmatpush1.msra.mxu0 0.0
        %2327 = vmatprep.subr.mxu0 0.0
        %2328 = vmatpush1.msra.mxu0 0.0
        %2329 = vmatprep.subr.mxu0 0.0
        %2330 = vmatpush1.msra.mxu0 0.0
        %2331 = vmatprep.subr.mxu0 0.0
        %2332 = vmatpush1.msra.mxu0 0.0
        %2333 = vmatprep.subr.mxu0 0.0
        %2334 = vmatpush1.msra.mxu0 0.0
        %2335 = vmatprep.subr.mxu0 0.0
        %2336 = vmatpush1.msra.mxu0 0.0
        %2337 = vmatprep.subr.mxu0 0.0
        %2338 = vmatpush1.msra.mxu0 0.0
        %2339 = vmatprep.subr.mxu0 0.0
        %2340 = vmatpush1.msra.mxu0 0.0
        %2341 = vmatprep.subr.mxu0 0.0
        %2342 = vmatpush1.msra.mxu0 0.0
        %2343 = vmatprep.subr.mxu0 0.0
        %2344 = vmatpush1.msra.mxu0 0.0
        %2345 = vmatprep.subr.mxu0 0.0
        %2346 = vmatpush1.msra.mxu0 0.0
        %2347 = vmatprep.subr.mxu0 0.0
        %2348 = vmatpush1.msra.mxu0 0.0
        %2349 = vmatprep.subr.mxu0 0.0
        %2350 = vmatpush1.msra.mxu0 0.0
        %2351 = vmatprep.mubr.f32.mxu0 0.0
        %2352 = vmatmul.mubr.f32.gmra.mrb[0].mxu0 %v2078
        %v2353 = vpop.f32.mrb[0].mxu0
        %v2354 = vadd.f32 0.0, %v2353
        %v2355 = vpop.f32.mrb[0].mxu0
        %2356 = vmatprep.mubr.f32.mxu0 0.0
        %2357 = vmatmul.mubr.f32.gmra.mrb[0].mxu0 %v2081
        %v2358 = vpop.f32.mrb[0].mxu0
        %v2359 = vadd.f32 0.0, %v2358
        %v2360 = vpop.f32.mrb[0].mxu0
        %2361 = vdwg.mxu0
        %2362 = vst.msk [vmem:[#allocation5] sm:$0xff] %vm1539, %v2354
        %2363 = vst.msk [vmem:[#allocation5 + $0x8] sm:$0xff] %vm1539, %v2359
        %s2364 = scalar_lea.vmem %s15, 8
        %v2365 = vld [vmem:[%s2364] sm:$0xff]
        %2366 = vst.msk [vmem:[#allocation7] sm:$0xff] %vm1270, 0.0
        %2367 = vst.msk [vmem:[#allocation7 + $0x8] sm:$0xff] %vm1270, 0.0
        loop: start=0, step=1, limit=8
        $region164: #{tpu_custom_call.1} parent=127 // loop_pre_header
          _
        $region165: #{tpu_custom_call.1} parent=127 // loop_header
          %s2369 = sphi 0, %s2373
          %p2370 = scmp.ge.s32.totalorder %s2369, 8
        $region166: #{tpu_custom_call.1} parent=127 // loop_header_branch
          %2372 = sbr.rel (%p2370) target = $region170
        $region167: #{tpu_custom_call.1} parent=127 // loop_body
          %s2374 = scalar_lea.vmem [#allocation3], %s2369
          %v2375 = vld [vmem:[%s2374] sm:$0x1]
          %v2376 = vld [vmem:[%s2374 + $0x8] sm:$0x1]
          %s2377 = scalar_lea.vmem [#allocation2], %s2369
          %v2378 = vld [vmem:[%s2377] sm:$0x1]
          %v2379 = vld [vmem:[%s2377 + $0x8] sm:$0x1]
          %s2380 = scalar_lea.vmem [#allocation4], %s2369
          %v2381 = vld [vmem:[%s2380] sm:$0x1]
          %v2382 = vld [vmem:[%s2380 + $0x8] sm:$0x1]
          %v2383 = vlaneseq
          %v2384 = vshrl.u32 %v2383, 7
          %v2385 = vsub.s32 0, %v2384
          %v2386 = vrot.slane %v2381, %v2385
          %2388 = vbcast.lane.b32.xlu0 %v2386, 256
          %v2389 = vpop.permute.xlu0 %2388
          %v2390 = vlaneseq
          %v2391 = vshrl.u32 %v2390, 7
          %v2392 = vsub.s32 0, %v2391
          %v2393 = vrot.slane %v2382, %v2392
          %2395 = vbcast.lane.b32.xlu0 %v2393, 256
          %v2396 = vpop.permute.xlu0 %2395
          %s2397 = scalar_lea.vmem [#allocation5], %s2369
          %v2398 = vld [vmem:[%s2397] sm:$0x1]
          %v2399 = vld [vmem:[%s2397 + $0x8] sm:$0x1]
          %v2400 = vlaneseq
          %v2401 = vshrl.u32 %v2400, 7
          %v2402 = vsub.s32 0, %v2401
          %v2403 = vrot.slane %v2398, %v2402
          %2405 = vbcast.lane.b32.xlu0 %v2403, 256
          %v2406 = vpop.permute.xlu0 %2405
          %v2407 = vlaneseq
          %v2408 = vshrl.u32 %v2407, 7
          %v2409 = vsub.s32 0, %v2408
          %v2410 = vrot.slane %v2399, %v2409
          %2412 = vbcast.lane.b32.xlu0 %v2410, 256
          %v2413 = vpop.permute.xlu0 %2412
          %v2414 = vlaneseq
          %v2415 = vshrl.u32 %v2414, 7
          %v2416 = vsub.s32 0, %v2415
          %v2417 = vrot.slane %v2375, %v2416
          %v2418 = vlaneseq
          %v2419 = vshrl.u32 %v2418, 7
          %v2420 = vsub.s32 0, %v2419
          %v2421 = vrot.slane %v2376, %v2420
          %v2422 = vmul.f32 %v2417, %v2365
          %v2423 = vmul.f32 %v2421, %v2365
          %v2424 = vmul.f32 %v2422, 1.442695
          %v2425 = vpow.pop %v2424
          %v2426 = vmul.f32 %v2423, 1.442695
          %v2427 = vpow.pop %v2426
          %v2428 = vld [vmem:[#allocation7] sm:$0xff]
          %v2429 = vld [vmem:[#allocation7 + $0x8] sm:$0xff]
          %v2430 = vmul.f32 %v2425, %v2428
          %v2431 = vmul.f32 %v2427, %v2429
          %v2432 = vmul.f32 %v2375, %v2378
          %v2433 = vmul.f32 %v2376, %v2379
          %v2434 = vlaneseq
          %v2435 = vshrl.u32 %v2434, 7
          %v2436 = vsub.s32 0, %v2435
          %v2437 = vrot.slane %v2432, %v2436
          %v2438 = vlaneseq
          %v2439 = vshrl.u32 %v2438, 7
          %v2440 = vsub.s32 0, %v2439
          %v2441 = vrot.slane %v2433, %v2440
          %v2442 = vmul.f32 %v2437, %v2389
          %v2443 = vmul.f32 %v2441, %v2396
          %v2444 = vadd.f32 %v2430, %v2442
          %v2445 = vadd.f32 %v2431, %v2443
          %2446 = vst.msk [vmem:[#allocation7] sm:$0xff] %vm1270, %v2444
          %2447 = vst.msk [vmem:[#allocation7 + $0x8] sm:$0xff] %vm1270, %v2445
          %v2448 = vmul.f32 %v2444, %v2406
          %v2449 = vmul.f32 %v2445, %v2413
          %v2450 = vsel %vm1270, %v2448, 0.0
          %v2451 = vrot.slane %v2450, 4
          %v2452 = vadd.f32 %v2450, %v2451
          %v2453 = vrot.slane %v2452, 2
          %v2454 = vadd.f32 %v2452, %v2453
          %v2455 = vrot.slane %v2454, 1
          %v2456 = vadd.f32 %v2454, %v2455
          %v2457 = vsel %vm1270, %v2449, 0.0
          %v2458 = vrot.slane %v2457, 4
          %v2459 = vadd.f32 %v2457, %v2458
          %v2460 = vrot.slane %v2459, 2
          %v2461 = vadd.f32 %v2459, %v2460
          %v2462 = vrot.slane %v2461, 1
          %v2463 = vadd.f32 %v2461, %v2462
          %s2464 = scalar_lea.vmem [#allocation6], %s2369
          %vm2465 = vcmask 253952
          %2466 = vst.msk [vmem:[%s2464] sm:$0x1] %vm2465, %v2456
          %2467 = vst.msk [vmem:[%s2464 + $0x8] sm:$0x1] %vm2465, %v2463
        $region168: #{tpu_custom_call.1} parent=127 // loop_footer
          %s2373 = sadd.s32 1, %s2369
        $region169: #{tpu_custom_call.1} parent=127 // loop_footer_branch
          %2368 = sbr.rel target = $region165
        $region170: #{tpu_custom_call.1} parent=127 // loop_exit
          _
        %v2468 = vld [vmem:[#allocation6] sm:$0xff]
        %v2469 = vld [vmem:[#allocation6 + $0x8] sm:$0xff]
        %v2470 = vld [vmem:[#allocation2] sm:$0xff]
        %v2471 = vld [vmem:[#allocation2 + $0x8] sm:$0xff]
        %s2472 = scalar_lea.vmem %s16, 1
        %v2473 = vld [vmem:[%s2472] sm:$0x1]
        %v2475 = vlaneseq
        %v2476 = vshrl.u32 %v2475, 7
        %v2477 = vsub.s32 0, %v2476
        %v2478 = vrot.slane %v2473, %v2477
        %v2480 = vmul.f32 %v2470, %v2478
        %v2481 = vmul.f32 %v2471, %v2478
        %v2482 = vadd.f32 %v2468, %v2480
        %v2483 = vadd.f32 %v2469, %v2481
        %v2484 = vsub.f32 0.0, %v1996
        %v2485 = vsub.f32 0.0, %v2001
        %v2486 = vmul.f32 %v2484, 1.442695
        %v2487 = vpow.pop %v2486
        %v2488 = vmul.f32 %v2485, 1.442695
        %v2489 = vpow.pop %v2488
        %v2490 = vadd.f32 %v2487, 1.0
        %v2491 = vadd.f32 %v2489, 1.0
        %v2492 = vrcp.pop %v2490
        %v2493 = vmul.f32 1.0, %v2492
        %v2494 = vrcp.pop %v2491
        %v2495 = vmul.f32 1.0, %v2494
        %v2496 = vmul.f32 %v1996, %v2493
        %v2497 = vmul.f32 %v2001, %v2495
        %v2498 = vmul.f32 %v2482, %v2496
        %v2499 = vmul.f32 %v2483, %v2497
        %s2500 = scalar_lea.vmem %s17, 32
        %v2501 = vld [vmem:[%s2500] sm:$0xff]
        %v2502 = vld [vmem:[%s2500 + $0x8] sm:$0xff]
        %v2503 = vld [vmem:[%s2500 + $0x10] sm:$0xff]
        %v2504 = vld [vmem:[%s2500 + $0x18] sm:$0xff]
        %v2506 = vsel %vm1270, %v2498, 0
        %v2509 = vsel %vm1270, %v2499, 0
        %2511 = vmatprep.subr.mxu0 0.0
        %2512 = vmatpush1.msra.mxu0 %v2501
        %2513 = vmatprep.subr.mxu0 0.0
        %2514 = vmatpush1.msra.mxu0 %v2502
        %2515 = vmatprep.subr.mxu0 0.0
        %2516 = vmatpush1.msra.mxu0 %v2503
        %2517 = vmatprep.subr.mxu0 0.0
        %2518 = vmatpush1.msra.mxu0 %v2504
        %2519 = vmatprep.subr.mxu0 0.0
        %2520 = vmatpush1.msra.mxu0 0.0
        %2521 = vmatprep.subr.mxu0 0.0
        %2522 = vmatpush1.msra.mxu0 0.0
        %2523 = vmatprep.subr.mxu0 0.0
        %2524 = vmatpush1.msra.mxu0 0.0
        %2525 = vmatprep.subr.mxu0 0.0
        %2526 = vmatpush1.msra.mxu0 0.0
        %2527 = vmatprep.subr.mxu0 0.0
        %2528 = vmatpush1.msra.mxu0 0.0
        %2529 = vmatprep.subr.mxu0 0.0
        %2530 = vmatpush1.msra.mxu0 0.0
        %2531 = vmatprep.subr.mxu0 0.0
        %2532 = vmatpush1.msra.mxu0 0.0
        %2533 = vmatprep.subr.mxu0 0.0
        %2534 = vmatpush1.msra.mxu0 0.0
        %2535 = vmatprep.subr.mxu0 0.0
        %2536 = vmatpush1.msra.mxu0 0.0
        %2537 = vmatprep.subr.mxu0 0.0
        %2538 = vmatpush1.msra.mxu0 0.0
        %2539 = vmatprep.subr.mxu0 0.0
        %2540 = vmatpush1.msra.mxu0 0.0
        %2541 = vmatprep.subr.mxu0 0.0
        %2542 = vmatpush1.msra.mxu0 0.0
        %2543 = vmatprep.subr.mxu0 0.0
        %2544 = vmatpush1.msra.mxu0 0.0
        %2545 = vmatprep.subr.mxu0 0.0
        %2546 = vmatpush1.msra.mxu0 0.0
        %2547 = vmatprep.subr.mxu0 0.0
        %2548 = vmatpush1.msra.mxu0 0.0
        %2549 = vmatprep.subr.mxu0 0.0
        %2550 = vmatpush1.msra.mxu0 0.0
        %2551 = vmatprep.subr.mxu0 0.0
        %2552 = vmatpush1.msra.mxu0 0.0
        %2553 = vmatprep.subr.mxu0 0.0
        %2554 = vmatpush1.msra.mxu0 0.0
        %2555 = vmatprep.subr.mxu0 0.0
        %2556 = vmatpush1.msra.mxu0 0.0
        %2557 = vmatprep.subr.mxu0 0.0
        %2558 = vmatpush1.msra.mxu0 0.0
        %2559 = vmatprep.subr.mxu0 0.0
        %2560 = vmatpush1.msra.mxu0 0.0
        %2561 = vmatprep.subr.mxu0 0.0
        %2562 = vmatpush1.msra.mxu0 0.0
        %2563 = vmatprep.subr.mxu0 0.0
        %2564 = vmatpush1.msra.mxu0 0.0
        %2565 = vmatprep.subr.mxu0 0.0
        %2566 = vmatpush1.msra.mxu0 0.0
        %2567 = vmatprep.subr.mxu0 0.0
        %2568 = vmatpush1.msra.mxu0 0.0
        %2569 = vmatprep.subr.mxu0 0.0
        %2570 = vmatpush1.msra.mxu0 0.0
        %2571 = vmatprep.subr.mxu0 0.0
        %2572 = vmatpush1.msra.mxu0 0.0
        %2573 = vmatprep.subr.mxu0 0.0
        %2574 = vmatpush1.msra.mxu0 0.0
        %2575 = vmatprep.mubr.f32.mxu0 0.0
        %2576 = vmatmul.mubr.f32.gmra.mrb[0].mxu0 %v2506
        %v2577 = vpop.f32.mrb[0].mxu0
        %v2578 = vadd.f32 0.0, %v2577
        %v2579 = vpop.f32.mrb[0].mxu0
        %2580 = vmatprep.mubr.f32.mxu0 0.0
        %2581 = vmatmul.mubr.f32.gmra.mrb[0].mxu0 %v2509
        %v2582 = vpop.f32.mrb[0].mxu0
        %v2583 = vadd.f32 0.0, %v2582
        %v2584 = vpop.f32.mrb[0].mxu0
        %2585 = vdwg.mxu0
        %v2586 = vsel %vm1024, %v1834, 0.0
        %2587 = vadd.xlane.f32.xlu0 %v2586
        %v2588 = vpop.xlane.xlu0 %2587
        %v2589 = vsel %vm1024, %v1839, 0.0
        %2590 = vadd.xlane.f32.xlu0 %v2589
        %v2591 = vpop.xlane.xlu0 %2590
        %v2592 = vsel %vm1024, %v2578, 0.0
        %2593 = vadd.xlane.f32.xlu0 %v2592
        %v2594 = vpop.xlane.xlu0 %2593
        %v2595 = vsel %vm1024, %v2583, 0.0
        %2596 = vadd.xlane.f32.xlu0 %v2595
        %v2597 = vpop.xlane.xlu0 %2596
        %v2598 = vadd.f32 %v2588, %v2594
        %v2599 = vadd.f32 %v2591, %v2597
        %v2600 = vrcp.pop 32.0
        %v2601 = vmul.f32 %v2598, %v2600
        %v2602 = vmul.f32 %v2599, %v2600
        %v2603 = vsub.f32 %v1834, %v2601
        %v2604 = vsub.f32 %v1839, %v2602
        %v2605 = vsub.f32 %v2578, %v2601
        %v2606 = vsub.f32 %v2583, %v2602
        %v2607 = vmul.f32 %v2603, %v2603
        %v2608 = vmul.f32 %v2604, %v2604
        %v2609 = vsel %vm1024, %v2607, 0.0
        %2610 = vadd.xlane.f32.xlu0 %v2609
        %v2611 = vpop.xlane.xlu0 %2610
        %v2612 = vsel %vm1024, %v2608, 0.0
        %2613 = vadd.xlane.f32.xlu0 %v2612
        %v2614 = vpop.xlane.xlu0 %2613
        %v2615 = vmul.f32 %v2605, %v2605
        %v2616 = vmul.f32 %v2606, %v2606
        %v2617 = vsel %vm1024, %v2615, 0.0
        %2618 = vadd.xlane.f32.xlu0 %v2617
        %v2619 = vpop.xlane.xlu0 %2618
        %v2620 = vsel %vm1024, %v2616, 0.0
        %2621 = vadd.xlane.f32.xlu0 %v2620
        %v2622 = vpop.xlane.xlu0 %2621
        %v2623 = vadd.f32 %v2611, %v2619
        %v2624 = vadd.f32 %v2614, %v2622
        %v2625 = vmul.f32 %v2623, %v2600
        %v2626 = vmul.f32 %v2624, %v2600
        %v2627 = vadd.f32 %v2625, 1e-05
        %v2628 = vadd.f32 %v2626, 1e-05
        %v2629 = vrsqrt.pop %v2627
        %v2630 = vrsqrt.pop %v2628
        %v2631 = vmul.f32 %v2603, %v2629
        %v2632 = vmul.f32 %v2604, %v2630
        %v2633 = vld [vmem:[%s18] sm:$0x1]
        %v2635 = vlaneseq
        %v2636 = vshrl.u32 %v2635, 7
        %v2637 = vsub.s32 0, %v2636
        %v2638 = vrot.slane %v2633, %v2637
        %v2640 = vmul.f32 %v2631, %v2638
        %v2641 = vmul.f32 %v2632, %v2638
        %v2642 = vld [vmem:[%s20] sm:$0x1]
        %v2644 = vlaneseq
        %v2645 = vshrl.u32 %v2644, 7
        %v2646 = vsub.s32 0, %v2645
        %v2647 = vrot.slane %v2642, %v2646
        %v2649 = vadd.f32 %v2640, %v2647
        %v2650 = vadd.f32 %v2641, %v2647
        %v2651 = vmul.f32 %v2605, %v2629
        %v2652 = vmul.f32 %v2606, %v2630
        %v2653 = vld [vmem:[%s19] sm:$0x1]
        %v2655 = vlaneseq
        %v2656 = vshrl.u32 %v2655, 7
        %v2657 = vsub.s32 0, %v2656
        %v2658 = vrot.slane %v2653, %v2657
        %v2660 = vmul.f32 %v2651, %v2658
        %v2661 = vmul.f32 %v2652, %v2658
        %v2662 = vld [vmem:[%s21] sm:$0x1]
        %v2664 = vlaneseq
        %v2665 = vshrl.u32 %v2664, 7
        %v2666 = vsub.s32 0, %v2665
        %v2667 = vrot.slane %v2662, %v2666
        %v2669 = vadd.f32 %v2660, %v2667
        %v2670 = vadd.f32 %v2661, %v2667
        %v2671 = vld [vmem:[%s22] sm:$0xff]
        %v2672 = vld [vmem:[%s22 + $0x8] sm:$0xff]
        %v2673 = vld [vmem:[%s23] sm:$0xff]
        %v2674 = vld [vmem:[%s23 + $0x8] sm:$0xff]
        %v2676 = vsel %vm1024, %v2669, 0
        %v2679 = vsel %vm1024, %v2670, 0
        %2681 = vmatprep.subr.mxu0 0.0
        %2682 = vmatpush1.msra.mxu0 %v2673
        %2683 = vmatprep.subr.mxu0 0.0
        %2684 = vmatpush1.msra.mxu0 %v2674
        %2685 = vmatprep.subr.mxu0 0.0
        %2686 = vmatpush1.msra.mxu0 0.0
        %2687 = vmatprep.subr.mxu0 0.0
        %2688 = vmatpush1.msra.mxu0 0.0
        %2689 = vmatprep.subr.mxu0 0.0
        %2690 = vmatpush1.msra.mxu0 0.0
        %2691 = vmatprep.subr.mxu0 0.0
        %2692 = vmatpush1.msra.mxu0 0.0
        %2693 = vmatprep.subr.mxu0 0.0
        %2694 = vmatpush1.msra.mxu0 0.0
        %2695 = vmatprep.subr.mxu0 0.0
        %2696 = vmatpush1.msra.mxu0 0.0
        %2697 = vmatprep.subr.mxu0 0.0
        %2698 = vmatpush1.msra.mxu0 0.0
        %2699 = vmatprep.subr.mxu0 0.0
        %2700 = vmatpush1.msra.mxu0 0.0
        %2701 = vmatprep.subr.mxu0 0.0
        %2702 = vmatpush1.msra.mxu0 0.0
        %2703 = vmatprep.subr.mxu0 0.0
        %2704 = vmatpush1.msra.mxu0 0.0
        %2705 = vmatprep.subr.mxu0 0.0
        %2706 = vmatpush1.msra.mxu0 0.0
        %2707 = vmatprep.subr.mxu0 0.0
        %2708 = vmatpush1.msra.mxu0 0.0
        %2709 = vmatprep.subr.mxu0 0.0
        %2710 = vmatpush1.msra.mxu0 0.0
        %2711 = vmatprep.subr.mxu0 0.0
        %2712 = vmatpush1.msra.mxu0 0.0
        %2713 = vmatprep.subr.mxu0 0.0
        %2714 = vmatpush1.msra.mxu0 0.0
        %2715 = vmatprep.subr.mxu0 0.0
        %2716 = vmatpush1.msra.mxu0 0.0
        %2717 = vmatprep.subr.mxu0 0.0
        %2718 = vmatpush1.msra.mxu0 0.0
        %2719 = vmatprep.subr.mxu0 0.0
        %2720 = vmatpush1.msra.mxu0 0.0
        %2721 = vmatprep.subr.mxu0 0.0
        %2722 = vmatpush1.msra.mxu0 0.0
        %2723 = vmatprep.subr.mxu0 0.0
        %2724 = vmatpush1.msra.mxu0 0.0
        %2725 = vmatprep.subr.mxu0 0.0
        %2726 = vmatpush1.msra.mxu0 0.0
        %2727 = vmatprep.subr.mxu0 0.0
        %2728 = vmatpush1.msra.mxu0 0.0
        %2729 = vmatprep.subr.mxu0 0.0
        %2730 = vmatpush1.msra.mxu0 0.0
        %2731 = vmatprep.subr.mxu0 0.0
        %2732 = vmatpush1.msra.mxu0 0.0
        %2733 = vmatprep.subr.mxu0 0.0
        %2734 = vmatpush1.msra.mxu0 0.0
        %2735 = vmatprep.subr.mxu0 0.0
        %2736 = vmatpush1.msra.mxu0 0.0
        %2737 = vmatprep.subr.mxu0 0.0
        %2738 = vmatpush1.msra.mxu0 0.0
        %2739 = vmatprep.subr.mxu0 0.0
        %2740 = vmatpush1.msra.mxu0 0.0
        %2741 = vmatprep.subr.mxu0 0.0
        %2742 = vmatpush1.msra.mxu0 0.0
        %2743 = vmatprep.subr.mxu0 0.0
        %2744 = vmatpush1.msra.mxu0 0.0
        %2745 = vmatprep.mubr.f32.mxu0 0.0
        %2746 = vmatmul.mubr.f32.gmra.mrb[0].mxu0 %v2676
        %v2747 = vpop.f32.mrb[0].mxu0
        %v2748 = vadd.f32 0.0, %v2747
        %v2749 = vpop.f32.mrb[0].mxu0
        %2750 = vmatprep.mubr.f32.mxu0 0.0
        %2751 = vmatmul.mubr.f32.gmra.mrb[0].mxu0 %v2679
        %v2752 = vpop.f32.mrb[0].mxu0
        %v2753 = vadd.f32 0.0, %v2752
        %v2754 = vpop.f32.mrb[0].mxu0
        %2755 = vdwg.mxu0
        %v2757 = vsel %vm1024, %v2649, 0
        %v2760 = vsel %vm1024, %v2650, 0
        %2762 = vmatprep.subr.mxu0 0.0
        %2763 = vmatpush1.msra.mxu0 %v2671
        %2764 = vmatprep.subr.mxu0 0.0
        %2765 = vmatpush1.msra.mxu0 %v2672
        %2766 = vmatprep.subr.mxu0 0.0
        %2767 = vmatpush1.msra.mxu0 0.0
        %2768 = vmatprep.subr.mxu0 0.0
        %2769 = vmatpush1.msra.mxu0 0.0
        %2770 = vmatprep.subr.mxu0 0.0
        %2771 = vmatpush1.msra.mxu0 0.0
        %2772 = vmatprep.subr.mxu0 0.0
        %2773 = vmatpush1.msra.mxu0 0.0
        %2774 = vmatprep.subr.mxu0 0.0
        %2775 = vmatpush1.msra.mxu0 0.0
        %2776 = vmatprep.subr.mxu0 0.0
        %2777 = vmatpush1.msra.mxu0 0.0
        %2778 = vmatprep.subr.mxu0 0.0
        %2779 = vmatpush1.msra.mxu0 0.0
        %2780 = vmatprep.subr.mxu0 0.0
        %2781 = vmatpush1.msra.mxu0 0.0
        %2782 = vmatprep.subr.mxu0 0.0
        %2783 = vmatpush1.msra.mxu0 0.0
        %2784 = vmatprep.subr.mxu0 0.0
        %2785 = vmatpush1.msra.mxu0 0.0
        %2786 = vmatprep.subr.mxu0 0.0
        %2787 = vmatpush1.msra.mxu0 0.0
        %2788 = vmatprep.subr.mxu0 0.0
        %2789 = vmatpush1.msra.mxu0 0.0
        %2790 = vmatprep.subr.mxu0 0.0
        %2791 = vmatpush1.msra.mxu0 0.0
        %2792 = vmatprep.subr.mxu0 0.0
        %2793 = vmatpush1.msra.mxu0 0.0
        %2794 = vmatprep.subr.mxu0 0.0
        %2795 = vmatpush1.msra.mxu0 0.0
        %2796 = vmatprep.subr.mxu0 0.0
        %2797 = vmatpush1.msra.mxu0 0.0
        %2798 = vmatprep.subr.mxu0 0.0
        %2799 = vmatpush1.msra.mxu0 0.0
        %2800 = vmatprep.subr.mxu0 0.0
        %2801 = vmatpush1.msra.mxu0 0.0
        %2802 = vmatprep.subr.mxu0 0.0
        %2803 = vmatpush1.msra.mxu0 0.0
        %2804 = vmatprep.subr.mxu0 0.0
        %2805 = vmatpush1.msra.mxu0 0.0
        %2806 = vmatprep.subr.mxu0 0.0
        %2807 = vmatpush1.msra.mxu0 0.0
        %2808 = vmatprep.subr.mxu0 0.0
        %2809 = vmatpush1.msra.mxu0 0.0
        %2810 = vmatprep.subr.mxu0 0.0
        %2811 = vmatpush1.msra.mxu0 0.0
        %2812 = vmatprep.subr.mxu0 0.0
        %2813 = vmatpush1.msra.mxu0 0.0
        %2814 = vmatprep.subr.mxu0 0.0
        %2815 = vmatpush1.msra.mxu0 0.0
        %2816 = vmatprep.subr.mxu0 0.0
        %2817 = vmatpush1.msra.mxu0 0.0
        %2818 = vmatprep.subr.mxu0 0.0
        %2819 = vmatpush1.msra.mxu0 0.0
        %2820 = vmatprep.subr.mxu0 0.0
        %2821 = vmatpush1.msra.mxu0 0.0
        %2822 = vmatprep.subr.mxu0 0.0
        %2823 = vmatpush1.msra.mxu0 0.0
        %2824 = vmatprep.subr.mxu0 0.0
        %2825 = vmatpush1.msra.mxu0 0.0
        %2826 = vmatprep.mubr.f32.mxu0 0.0
        %2827 = vmatmul.mubr.f32.gmra.mrb[0].mxu0 %v2757
        %v2828 = vpop.f32.mrb[0].mxu0
        %v2829 = vadd.f32 %v2748, %v2828
        %v2830 = vpop.f32.mrb[0].mxu0
        %2831 = vmatprep.mubr.f32.mxu0 0.0
        %2832 = vmatmul.mubr.f32.gmra.mrb[0].mxu0 %v2760
        %v2833 = vpop.f32.mrb[0].mxu0
        %v2834 = vadd.f32 %v2753, %v2833
        %v2835 = vpop.f32.mrb[0].mxu0
        %2836 = vdwg.mxu0
        %v2837 = vld [vmem:[%s24] sm:$0x1]
        %v2839 = vlaneseq
        %v2840 = vshrl.u32 %v2839, 7
        %v2841 = vsub.s32 0, %v2840
        %v2842 = vrot.slane %v2837, %v2841
        %v2844 = vadd.f32 %v2829, %v2842
        %v2845 = vadd.f32 %v2834, %v2842
        %v2846 = vsub.f32 0.0, %v2844
        %v2847 = vsub.f32 0.0, %v2845
        %v2848 = vmul.f32 %v2846, 1.442695
        %v2849 = vpow.pop %v2848
        %v2850 = vmul.f32 %v2847, 1.442695
        %v2851 = vpow.pop %v2850
        %v2852 = vadd.f32 %v2849, 1.0
        %v2853 = vadd.f32 %v2851, 1.0
        %v2854 = vrcp.pop %v2852
        %v2855 = vmul.f32 1.0, %v2854
        %v2856 = vrcp.pop %v2853
        %v2857 = vmul.f32 1.0, %v2856
        %v2858 = vmul.f32 %v2844, %v2855
        %v2859 = vmul.f32 %v2845, %v2857
        %v2860 = vld [vmem:[%s25] sm:$0x1]
        %v2862 = vlaneseq
        %v2863 = vshrl.u32 %v2862, 7
        %v2864 = vsub.s32 0, %v2863
        %v2865 = vrot.slane %v2860, %v2864
        %v2867 = vmul.f32 %v2858, %v2865
        %v2868 = vmul.f32 %v2859, %v2865
        %v2869 = vsel %vm1024, %v2867, 0.0
        %2870 = vadd.xlane.f32.xlu0 %v2869
        %v2871 = vpop.xlane.xlu0 %2870
        %v2872 = vsel %vm1024, %v2868, 0.0
        %2873 = vadd.xlane.f32.xlu0 %v2872
        %v2874 = vpop.xlane.xlu0 %2873
        %v2875 = vld [vmem:[#allocation9] sm:$0x1]
        %v2877 = vlaneseq
        %v2878 = vshrl.u32 %v2877, 7
        %v2879 = vsub.s32 0, %v2878
        %v2880 = vrot.slane %v2875, %v2879
        %v2882 = vadd.f32 %v2871, %v2880
        %v2883 = vadd.f32 %v2874, %v2880
        %v2884 = vsub.f32 0.0, %v2882
        %v2885 = vsub.f32 0.0, %v2883
        %v2886 = vmul.f32 %v2884, 1.442695
        %v2887 = vpow.pop %v2886
        %v2888 = vmul.f32 %v2885, 1.442695
        %v2889 = vpow.pop %v2888
        %v2890 = vadd.f32 %v2887, 1.0
        %v2891 = vadd.f32 %v2889, 1.0
        %v2892 = vrcp.pop %v2890
        %v2893 = vmul.f32 1.0, %v2892
        %v2894 = vrcp.pop %v2891
        %v2895 = vmul.f32 1.0, %v2894
        %2897 = vset.pattern.permute.xlu0 0
        %2898 = vperm.xlu0 %2897, %v2893
        %v2899 = vpop.permute.xlu0 %2898
        %2902 = vset.pattern.permute.xlu0 0
        %2903 = vperm.xlu0 %2902, %v2895
        %v2904 = vpop.permute.xlu0 %2903
        %v2906 = vmul.f32 %v2899, %v1834
        %v2907 = vmul.f32 %v2904, %v1839
        %v2908 = vsub.f32 1.0, %v2893
        %v2909 = vsub.f32 1.0, %v2895
        %2911 = vset.pattern.permute.xlu0 0
        %2912 = vperm.xlu0 %2911, %v2908
        %v2913 = vpop.permute.xlu0 %2912
        %2916 = vset.pattern.permute.xlu0 0
        %2917 = vperm.xlu0 %2916, %v2909
        %v2918 = vpop.permute.xlu0 %2917
        %v2920 = vmul.f32 %v2913, %v2578
        %v2921 = vmul.f32 %v2918, %v2583
        %v2922 = vadd.f32 %v2906, %v2920
        %v2923 = vadd.f32 %v2907, %v2921
        %v2924 = vld [vmem:[%s897] sm:$0x1]
        %v2925 = vld [vmem:[%s897 + $0x1] sm:$0x1]
        %v2928 = vlaneseq
        %v2929 = vshrl.u32 %v2928, 7
        %v2930 = vsub.s32 0, %v2929
        %v2931 = vrot.slane %v2924, %v2930
        %v2932 = vlaneseq
        %v2933 = vshrl.u32 %v2932, 7
        %v2934 = vsub.s32 0, %v2933
        %v2935 = vrot.slane %v2925, %v2934
        %v2938 = vmul.f32 %v2931, %v2922
        %v2939 = vmul.f32 %v2935, %v2923
        %v2940 = vadd.f32 %v1020, %v2938
        %v2941 = vadd.f32 %v1021, %v2939
        %2942 = vst.msk [vmem:[%s1003] sm:$0xff] %vm1024, %v2940
        %2943 = vst.msk [vmem:[%s1003 + $0x8] sm:$0xff] %vm1024, %v2941
        %s2944 = sand.u32 %s651, 1
        %s2945 = scalar_lea.sflag [#allocation12], %s2944
        %s2946 = sand.u32 %s651, 1
        %s2947 = smul.addr %s2946, 16
        %s2948 = scalar_lea.vmem [#allocation22], %s2947
        // Predicated region
        $region171: #{tpu_custom_call.1} parent=127 // pred_check
          %p2949 = pneg %p661
        $region172: #{tpu_custom_call.1} parent=127 // pred_check_branch
          %2951 = sbr.rel (%p2949) target = $region174
        $region173: #{tpu_custom_call.1} parent=127 // pred_region
          %s2952 = smul.u32 2, %s51
          %s2954 = ssub.s32 256, 256
          %2955 = vsyncadd %s2945, %s2954
          %s2956 = smul.addr %s2952, 128
          %s2957 = scalar_lea.hbm %s27, %s2956
          %s2958 = sshll.u32 %s2948, 4
          %s2959 = int_to_ptr.vmem [resolvable:$true] %s2958
          %2964 = dma.vmem_to_hbm [thread:$0]  %s2959, 256, %s2957, %s2945, 128, 128, 8
        $region174: #{tpu_custom_call.1} parent=127 // pred_fallthru
          _
      $region128: #{tpu_custom_call.1} parent=5 // pred_fallthru
        _
      %p2965 = scmp.le.s32.totalorder 2, %s46
      // Predicated region
      $region175: #{tpu_custom_call.1} parent=5 // pred_check
        %p2966 = pneg %p2965
      $region176: #{tpu_custom_call.1} parent=5 // pred_check_branch
        %2968 = sbr.rel (%p2966) target = $region178
      $region177: #{tpu_custom_call.1} parent=5 // pred_region
        %s2969 = ssub.s32 %s46, 2
        // Predicated region
        $region179: #{tpu_custom_call.1} parent=177 // pred_check
          %p2970 = pneg %p667
        $region180: #{tpu_custom_call.1} parent=177 // pred_check_branch
          %2972 = sbr.rel (%p2970) target = $region182
        $region181: #{tpu_custom_call.1} parent=177 // pred_region
          %s2973 = sand.u32 %s652, 1
          %s2974 = scalar_lea.sflag [#allocation12], %s2973
          %s2975 = sand.u32 %s652, 1
          %s2976 = smul.addr %s2975, 16
          %s2977 = scalar_lea.vmem [#allocation22], %s2976
          %2978 = dma.done %s2974, 256
        $region182: #{tpu_custom_call.1} parent=177 // pred_fallthru
          _
      $region178: #{tpu_custom_call.1} parent=5 // pred_fallthru
        _
    $region6: #{tpu_custom_call.1} parent=1 // loop_footer
      %s50 = sadd.s32 1, %s46
    $region7: #{tpu_custom_call.1} parent=1 // loop_footer_branch
      %45 = sbr.rel target = $region3
    $region8: #{tpu_custom_call.1} parent=1 // loop_exit
      _
    %2979 = vsyncpa [#allocation11], 1
    %s2980 = scalar_lea.sflag [#allocation11], 1
    %2981 = vsyncpa %s2980, 1
    %2982 = vsyncpa [#allocation14], 1
    %s2983 = scalar_lea.sflag [#allocation14], 1
    %2984 = vsyncpa %s2983, 1
    %2985 = vsyncpa [#allocation17], 1
    %2986 = vsyncpa [#allocation20], 1
    %2987 = vsyncpa [#allocation12], 1
    %s2988 = scalar_lea.sflag [#allocation12], 1
    %2989 = vsyncpa %s2988, 1

</llo_original>
